<compile_context>
chip_gen: v7x
topology: tpu7x:2x2x1
jax: 0.10.0
libtpu: 0.0.40
codegen_flags: <defaults>
</compile_context>

<pallas_src>
import functools

import jax
import jax.numpy as jnp
from jax import lax
from jax.experimental import pallas as pl
from jax.experimental.pallas import tpu as pltpu

LN_EPS = 1e-5  # torch.nn.LayerNorm default


# ----------------------------- kernel helpers ------------------------------


def _layernorm(x, g, b):
    mu = jnp.mean(x, axis=-1, keepdims=True)
    var = jnp.mean((x - mu) ** 2, axis=-1, keepdims=True)
    return (x - mu) * lax.rsqrt(var + LN_EPS) * g + b


def _uniform_mha(q, kv, bias, wq, wk, wv, wo_ref, h):
    """UniformMultiHeadAttention for one batch element.

    q      : (Lq, D)   f32  layer-normed query
    kv     : (Lkv, D)  f32  flattened (layer-major) memory bank / context
    bias   : (Lq, Lkv) f32  additive mask (-1e30 at masked positions)
    wq/wk/wv : (D, D)  bf16 projection weights
    wo_ref : (h, dh, D) bf16 head-major output projection (VMEM ref)
    """
    Lq, d = q.shape
    dh = d // h
    scale = dh ** -0.5

    qb = q.astype(jnp.bfloat16)
    kvb = kv.astype(jnp.bfloat16)
    # full-width projections keep the MXU fed (one DxD matmul each)
    qp = jnp.dot(qb, wq, preferred_element_type=jnp.float32)   # (Lq, D)
    kp = jnp.dot(kvb, wk, preferred_element_type=jnp.float32)  # (Lkv, D)
    vp = jnp.dot(kvb, wv, preferred_element_type=jnp.float32)  # (Lkv, D)

    out = jnp.zeros((Lq, d), jnp.float32)
    # TODO(synk): at production dh >= 128 this static head loop can be replaced
    # by one head-batched dot_general over an (h, Lq, dh)/(h, Lkv, dh) layout.
    for i in range(h):                              # static unroll over heads
        sl = slice(i * dh, (i + 1) * dh)
        qh = qp[:, sl].astype(jnp.bfloat16)
        kh = kp[:, sl].astype(jnp.bfloat16)
        vh = vp[:, sl].astype(jnp.bfloat16)
        s = lax.dot_general(qh, kh, (((1,), (1,)), ((), ())),
                            preferred_element_type=jnp.float32)
        s = s * scale + bias                        # masking stays in f32
        s = s - jnp.max(s, axis=-1, keepdims=True)
        p = jnp.exp(s)
        p = p * pl.reciprocal(jnp.sum(p, axis=-1, keepdims=True), approx=True)
        oh = jnp.dot(p.astype(jnp.bfloat16), vh,
                     preferred_element_type=jnp.float32)        # (Lq, dh)
        # accumulate head output directly; wo_ref[i] is a leading-dim index so
        # no cross-lane concat of heads is ever materialized.
        out = out + jnp.dot(oh.astype(jnp.bfloat16), wo_ref[i],
                            preferred_element_type=jnp.float32)
    return out


# --------------------------------- kernel -----------------------------------


def fct_decoder_kernel(h, n_mem, n_ctx, *args):
    if n_mem > 0:
        x_ref, mem_ref, mtgt_ref, ctx_ref, msrc_ref = args[:5]
        wrefs = args[5:-2]
    else:
        x_ref, mtgt_ref, ctx_ref, msrc_ref = args[:4]
        mem_ref = None
        wrefs = args[4:-2]
    out_ref, query_ref = args[-2:]
    (ln1g, ln1b, wq1, wk1, wv1, wo1,
     ln2g, ln2b, wq2, wk2, wv2, wo2,
     ln3g, ln3b, w1, b1, w2, b2) = wrefs

    x = x_ref[...]                                          # (Lq, D) f32

    # preprocess_attn: LayerNorm fused in-kernel; query is also an output so
    # the wrapper can extend the memory bank without an extra kernel launch.
    query = _layernorm(x, ln1g[...], ln1b[...])
    query_ref[...] = query

    # --- self attention over [previous memory-bank layers ++ query] ---
    parts = [mem_ref[l] for l in range(n_mem)] if n_mem > 0 else []
    kv_self = jnp.concatenate(parts + [query], axis=0)      # (n_layer*Lk, D)
    neg_t = jnp.where(mtgt_ref[...] > 0, -1e30, 0.0)        # (Lq, Lk) f32
    bias_t = jnp.concatenate([neg_t] * (n_mem + 1), axis=1)  # tile over layers
    attn1 = _uniform_mha(query, kv_self, bias_t,
                         wq1[...], wk1[...], wv1[...], wo1, h)
    x1 = x + attn1                                          # postprocess_attn

    # --- context attention ---
    q2 = _layernorm(x1, ln2g[...], ln2b[...])
    ctx_flat = jnp.concatenate([ctx_ref[l] for l in range(n_ctx)], axis=0)
    neg_s = jnp.where(msrc_ref[...] > 0, -1e30, 0.0)
    bias_s = jnp.concatenate([neg_s] * n_ctx, axis=1)
    attn2 = _uniform_mha(q2, ctx_flat, bias_s,
                         wq2[...], wk2[...], wv2[...], wo2, h)
    x2 = x1 + attn2                                         # postprocess_src_attn

    # --- feed forward: linear -> relu -> linear ---
    # TODO(synk): for production sizes tile the KV length (flash-style online
    # softmax) and d_ff so VMEM stays bounded on v7x (64 MiB).
    q3 = _layernorm(x2, ln3g[...], ln3b[...])
    hid = jnp.dot(q3.astype(jnp.bfloat16), w1[...],
                  preferred_element_type=jnp.float32) + b1[...]
    hid = jnp.maximum(hid, 0.0)
    ff = jnp.dot(hid.astype(jnp.bfloat16), w2[...],
                 preferred_element_type=jnp.float32) + b2[...]
    out_ref[...] = x2 + ff                                  # postprocess_ffn


# --------------------------------- wrapper -----------------------------------


def fct_decoder_layer(params, x, context, memory_bank, mask_tgt, mask_src, h):
    """Mirrors FCTDecoderLayer.forward (pad_mask_tgt = pad_mask_src = None)."""
    B, Lq, D = x.shape
    n_mem = 0 if memory_bank is None else memory_bank.shape[0]
    n_ctx, _, Ls, _ = context.shape
    dh = D // h

    def bf16(w):
        return w.astype(jnp.bfloat16)

    # MXU operands in bf16; LayerNorm params / biases stay f32 and are applied
    # in f32 (safe split for v5e's f32-only VPU/EUP as well).
    weights = [
        params["ln1_g"], params["ln1_b"],
        bf16(params["wq1"]), bf16(params["wk1"]), bf16(params["wv1"]),
        bf16(params["wo1"]).reshape(h, dh, D),
        params["ln2_g"], params["ln2_b"],
        bf16(params["wq2"]), bf16(params["wk2"]), bf16(params["wv2"]),
        bf16(params["wo2"]).reshape(h, dh, D),
        params["ln3_g"], params["ln3_b"],
        bf16(params["w1"]), params["b1"], bf16(params["w2"]), params["b2"],
    ]

    # base masks only (no n_layer broadcast in the wrapper); tiled in-kernel
    mask_tgt_f = mask_tgt.astype(jnp.float32)               # (B, Lq, Lk)
    mask_src_f = mask_src.astype(jnp.float32)               # (B, Lq, Ls)

    data = [x]
    data_specs = [pl.BlockSpec((None, Lq, D), lambda i: (i, 0, 0))]
    if n_mem > 0:
        Lkm = memory_bank.shape[2]
        data.append(memory_bank)
        # no wrapper-side transpose: BlockSpec addresses (layer, batch) tiles
        data_specs.append(
            pl.BlockSpec((n_mem, None, Lkm, D), lambda i: (0, i, 0, 0)))
    data.append(mask_tgt_f)
    data_specs.append(
        pl.BlockSpec((None,) + mask_tgt_f.shape[1:], lambda i: (i, 0, 0)))
    data.append(context)
    data_specs.append(
        pl.BlockSpec((n_ctx, None, Ls, D), lambda i: (0, i, 0, 0)))
    data.append(mask_src_f)
    data_specs.append(
        pl.BlockSpec((None,) + mask_src_f.shape[1:], lambda i: (i, 0, 0)))

    weight_specs = [
        pl.BlockSpec(w.shape, lambda i, n=w.ndim: (0,) * n) for w in weights
    ]

    out, query = pl.pallas_call(
        functools.partial(fct_decoder_kernel, h, n_mem, n_ctx),
        out_shape=(jax.ShapeDtypeStruct((B, Lq, D), jnp.float32),
                   jax.ShapeDtypeStruct((B, Lq, D), jnp.float32)),
        grid=(B,),
        in_specs=data_specs + weight_specs,
        out_specs=(pl.BlockSpec((None, Lq, D), lambda i: (i, 0, 0)),
                   pl.BlockSpec((None, Lq, D), lambda i: (i, 0, 0))),
        compiler_params=pltpu.CompilerParams(
            dimension_semantics=("parallel",),       # batch across TCs on v7x
            vmem_limit_bytes=48 * 1024 * 1024),
    )(*data, *weights)

    # memory-bank bookkeeping (glue, as in the PyTorch forward)
    if memory_bank is None:
        new_memory_bank = query[None]
    else:
        new_memory_bank = jnp.concatenate([memory_bank, query[None]], axis=0)

    coverage = None  # the PyTorch module always returns coverage = None
    return out, new_memory_bank, coverage


# ----------------------------- parameter init --------------------------------


def init_params(key, d_model, d_ff):
    def xavier(k, shape):
        fan_in, fan_out = shape
        lim = (6.0 / (fan_in + fan_out)) ** 0.5
        return jax.random.uniform(k, shape, jnp.float32, -lim, lim)

    names_2d = ["wq1", "wk1", "wv1", "wo1", "wq2", "wk2", "wv2", "wo2"]
    keys = jax.random.split(key, len(names_2d) + 2)
    params = {n: xavier(k, (d_model, d_model)) for n, k in zip(names_2d, keys)}
    params["w1"] = xavier(keys[-2], (d_model, d_ff))
    params["w2"] = xavier(keys[-1], (d_ff, d_model))
    params["b1"] = jnp.zeros((1, d_ff), jnp.float32)
    params["b2"] = jnp.zeros((1, d_model), jnp.float32)
    for n in ["ln1", "ln2", "ln3"]:
        params[n + "_g"] = jnp.ones((1, d_model), jnp.float32)
        params[n + "_b"] = jnp.zeros((1, d_model), jnp.float32)
    return params


# ----------------------------------- main ------------------------------------


if __name__ == "__main__":
    B, Lq, D, H, Dff = 2, 8, 32, 4, 64
    n_prev, n_ctx, Ls = 1, 2, 8

    root = jax.random.PRNGKey(0)
    kx, kmem, kctx, kparam = jax.random.split(root, 4)

    x = jax.random.normal(kx, (B, Lq, D), jnp.float32)
    memory_bank_prev = jax.random.normal(kmem, (n_prev, B, Lq, D), jnp.float32)
    context = jax.random.normal(kctx, (n_ctx, B, Ls, D), jnp.float32)

    # mask_tgt: causal, True(=1) means masked; broadcast over batch
    causal = jnp.triu(jnp.ones((Lq, Lq), jnp.bool_), k=1)
    mask_tgt = jnp.broadcast_to(causal[None], (B, Lq, Lq))
    # mask_src: mask the last two source positions
    src_pad = jnp.arange(Ls) >= (Ls - 2)
    mask_src = jnp.broadcast_to(src_pad[None, None, :], (B, Lq, Ls))

    params = init_params(kparam, D, Dff)

    out, new_memory_bank, coverage = fct_decoder_layer(
        params, x, context, memory_bank_prev, mask_tgt, mask_src, H)
    jax.block_until_ready(out)
    jax.block_until_ready(new_memory_bank)

    assert out.shape == (B, Lq, D)
    assert new_memory_bank.shape == (n_prev + 1, B, Lq, D)
    assert coverage is None
    assert bool(jnp.all(jnp.isfinite(out)))
    assert bool(jnp.all(jnp.isfinite(new_memory_bank)))
    print("KERNEL_OK")
</pallas_src>

<mosaic_0001>
module attributes {stable_mosaic.version = 11 : i64} {
  func.func @fct_decoder_kernel(%arg0: i32, %arg1: memref<1x8x32xf32, #tpu.memory_space<vmem>>, %arg2: memref<1x1x8x32xf32, #tpu.memory_space<vmem>>, %arg3: memref<1x8x8xf32, #tpu.memory_space<vmem>>, %arg4: memref<2x1x8x32xf32, #tpu.memory_space<vmem>>, %arg5: memref<1x8x8xf32, #tpu.memory_space<vmem>>, %arg6: memref<1x32xf32, #tpu.memory_space<vmem>>, %arg7: memref<1x32xf32, #tpu.memory_space<vmem>>, %arg8: memref<32x32xbf16, #tpu.memory_space<vmem>>, %arg9: memref<32x32xbf16, #tpu.memory_space<vmem>>, %arg10: memref<32x32xbf16, #tpu.memory_space<vmem>>, %arg11: memref<4x8x32xbf16, #tpu.memory_space<vmem>>, %arg12: memref<1x32xf32, #tpu.memory_space<vmem>>, %arg13: memref<1x32xf32, #tpu.memory_space<vmem>>, %arg14: memref<32x32xbf16, #tpu.memory_space<vmem>>, %arg15: memref<32x32xbf16, #tpu.memory_space<vmem>>, %arg16: memref<32x32xbf16, #tpu.memory_space<vmem>>, %arg17: memref<4x8x32xbf16, #tpu.memory_space<vmem>>, %arg18: memref<1x32xf32, #tpu.memory_space<vmem>>, %arg19: memref<1x32xf32, #tpu.memory_space<vmem>>, %arg20: memref<32x64xbf16, #tpu.memory_space<vmem>>, %arg21: memref<1x64xf32, #tpu.memory_space<vmem>>, %arg22: memref<64x32xbf16, #tpu.memory_space<vmem>>, %arg23: memref<1x32xf32, #tpu.memory_space<vmem>>, %arg24: memref<1x8x32xf32, #tpu.memory_space<vmem>>, %arg25: memref<1x8x32xf32, #tpu.memory_space<vmem>>) attributes {dimension_semantics = [#tpu.dimension_semantics<parallel>], iteration_bounds = array<i64: 2>, scalar_prefetch = 0 : i64, scratch_operands = 0 : i64, tpu.core_type = #tpu.core_type<tc>, window_params = [{transform_indices = @transform_0, window_bounds = array<i64: 1, 8, 32>}, {transform_indices = @transform_1, window_bounds = array<i64: 1, 1, 8, 32>}, {transform_indices = @transform_2, window_bounds = array<i64: 1, 8, 8>}, {transform_indices = @transform_3, window_bounds = array<i64: 2, 1, 8, 32>}, {transform_indices = @transform_4, window_bounds = array<i64: 1, 8, 8>}, {pipeline_mode = #tpu.pipeline_mode<synchronous>, transform_indices = @transform_5, window_bounds = array<i64: 1, 32>}, {pipeline_mode = #tpu.pipeline_mode<synchronous>, transform_indices = @transform_6, window_bounds = array<i64: 1, 32>}, {pipeline_mode = #tpu.pipeline_mode<synchronous>, transform_indices = @transform_7, window_bounds = array<i64: 32, 32>}, {pipeline_mode = #tpu.pipeline_mode<synchronous>, transform_indices = @transform_8, window_bounds = array<i64: 32, 32>}, {pipeline_mode = #tpu.pipeline_mode<synchronous>, transform_indices = @transform_9, window_bounds = array<i64: 32, 32>}, {pipeline_mode = #tpu.pipeline_mode<synchronous>, transform_indices = @transform_10, window_bounds = array<i64: 4, 8, 32>}, {pipeline_mode = #tpu.pipeline_mode<synchronous>, transform_indices = @transform_11, window_bounds = array<i64: 1, 32>}, {pipeline_mode = #tpu.pipeline_mode<synchronous>, transform_indices = @transform_12, window_bounds = array<i64: 1, 32>}, {pipeline_mode = #tpu.pipeline_mode<synchronous>, transform_indices = @transform_13, window_bounds = array<i64: 32, 32>}, {pipeline_mode = #tpu.pipeline_mode<synchronous>, transform_indices = @transform_14, window_bounds = array<i64: 32, 32>}, {pipeline_mode = #tpu.pipeline_mode<synchronous>, transform_indices = @transform_15, window_bounds = array<i64: 32, 32>}, {pipeline_mode = #tpu.pipeline_mode<synchronous>, transform_indices = @transform_16, window_bounds = array<i64: 4, 8, 32>}, {pipeline_mode = #tpu.pipeline_mode<synchronous>, transform_indices = @transform_17, window_bounds = array<i64: 1, 32>}, {pipeline_mode = #tpu.pipeline_mode<synchronous>, transform_indices = @transform_18, window_bounds = array<i64: 1, 32>}, {pipeline_mode = #tpu.pipeline_mode<synchronous>, transform_indices = @transform_19, window_bounds = array<i64: 32, 64>}, {pipeline_mode = #tpu.pipeline_mode<synchronous>, transform_indices = @transform_20, window_bounds = array<i64: 1, 64>}, {pipeline_mode = #tpu.pipeline_mode<synchronous>, transform_indices = @transform_21, window_bounds = array<i64: 64, 32>}, {pipeline_mode = #tpu.pipeline_mode<synchronous>, transform_indices = @transform_22, window_bounds = array<i64: 1, 32>}, {transform_indices = @transform_23, window_bounds = array<i64: 1, 8, 32>}, {transform_indices = @transform_24, window_bounds = array<i64: 1, 8, 32>}]} {
    %c0 = arith.constant 0 : index
    %c0_0 = arith.constant 0 : index
    %c0_1 = arith.constant 0 : index
    %0 = vector.load %arg1[%c0, %c0_0, %c0_1] : memref<1x8x32xf32, #tpu.memory_space<vmem>>, vector<1x8x32xf32>
    %1 = vector.shape_cast %0 : vector<1x8x32xf32> to vector<8x32xf32>
    %c0_2 = arith.constant 0 : index
    %c0_3 = arith.constant 0 : index
    %2 = vector.load %arg6[%c0_2, %c0_3] : memref<1x32xf32, #tpu.memory_space<vmem>>, vector<1x32xf32>
    %c0_4 = arith.constant 0 : index
    %c0_5 = arith.constant 0 : index
    %3 = vector.load %arg7[%c0_4, %c0_5] : memref<1x32xf32, #tpu.memory_space<vmem>>, vector<1x32xf32>
    %cst = arith.constant dense<0.000000e+00> : vector<8xf32>
    %4 = vector.multi_reduction <add>, %1, %cst [1] : vector<8x32xf32> to vector<8xf32>
    %5 = vector.shape_cast %4 : vector<8xf32> to vector<8x1xf32>
    %cst_6 = arith.constant 3.200000e+01 : f32
    %6 = vector.broadcast %cst_6 : f32 to vector<8x1xf32>
    %7 = arith.divf %5, %6 : vector<8x1xf32>
    %8 = vector.broadcast %7 : vector<8x1xf32> to vector<8x32xf32>
    %9 = arith.subf %1, %8 : vector<8x32xf32>
    %10 = arith.mulf %9, %9 : vector<8x32xf32>
    %cst_7 = arith.constant dense<0.000000e+00> : vector<8xf32>
    %11 = vector.multi_reduction <add>, %10, %cst_7 [1] : vector<8x32xf32> to vector<8xf32>
    %12 = vector.shape_cast %11 : vector<8xf32> to vector<8x1xf32>
    %cst_8 = arith.constant 3.200000e+01 : f32
    %13 = vector.broadcast %cst_8 : f32 to vector<8x1xf32>
    %14 = arith.divf %12, %13 : vector<8x1xf32>
    %15 = vector.broadcast %7 : vector<8x1xf32> to vector<8x32xf32>
    %16 = arith.subf %1, %15 : vector<8x32xf32>
    %cst_9 = arith.constant 9.99999974E-6 : f32
    %17 = vector.broadcast %cst_9 : f32 to vector<8x1xf32>
    %18 = arith.addf %14, %17 : vector<8x1xf32>
    %19 = math.rsqrt %18 : vector<8x1xf32>
    %20 = vector.broadcast %19 : vector<8x1xf32> to vector<8x32xf32>
    %21 = arith.mulf %16, %20 : vector<8x32xf32>
    %22 = vector.broadcast %2 : vector<1x32xf32> to vector<8x32xf32>
    %23 = arith.mulf %21, %22 : vector<8x32xf32>
    %24 = vector.broadcast %3 : vector<1x32xf32> to vector<8x32xf32>
    %25 = arith.addf %23, %24 : vector<8x32xf32>
    %c0_10 = arith.constant 0 : index
    %c0_11 = arith.constant 0 : index
    %c0_12 = arith.constant 0 : index
    %26 = vector.load %arg25[%c0_10, %c0_11, %c0_12] : memref<1x8x32xf32, #tpu.memory_space<vmem>>, vector<1x8x32xf32>
    %27 = vector.shape_cast %26 : vector<1x8x32xf32> to vector<8x32xf32>
    %28 = vector.shape_cast %25 : vector<8x32xf32> to vector<1x8x32xf32>
    tpu.vector_store %arg25[%c0_10, %c0_11, %c0_12], %28 {strides = array<i32>} : memref<1x8x32xf32, #tpu.memory_space<vmem>>, vector<1x8x32xf32>,
    %c0_13 = arith.constant 0 : index
    %c0_14 = arith.constant 0 : index
    %c0_15 = arith.constant 0 : index
    %c0_16 = arith.constant 0 : index
    %29 = vector.load %arg2[%c0_13, %c0_14, %c0_15, %c0_16] : memref<1x1x8x32xf32, #tpu.memory_space<vmem>>, vector<1x1x8x32xf32>
    %30 = vector.shape_cast %29 : vector<1x1x8x32xf32> to vector<8x32xf32>
    %31 = tpu.concatenate %30, %25 in 0 : vector<8x32xf32>, vector<8x32xf32> -> vector<16x32xf32>
    %c0_17 = arith.constant 0 : index
    %c0_18 = arith.constant 0 : index
    %c0_19 = arith.constant 0 : index
    %32 = vector.load %arg3[%c0_17, %c0_18, %c0_19] : memref<1x8x8xf32, #tpu.memory_space<vmem>>, vector<1x8x8xf32>
    %33 = vector.shape_cast %32 : vector<1x8x8xf32> to vector<8x8xf32>
    %cst_20 = arith.constant 0.000000e+00 : f32
    %34 = vector.broadcast %cst_20 : f32 to vector<8x8xf32>
    %35 = arith.cmpf ogt, %33, %34 : vector<8x8xf32>
    %cst_21 = arith.constant -1.000000e+30 : f32
    %cst_22 = arith.constant 0.000000e+00 : f32
    %36 = vector.broadcast %cst_21 : f32 to vector<8x8xf32>
    %37 = vector.broadcast %cst_22 : f32 to vector<8x8xf32>
    %38 = arith.select %35, %36, %37 : vector<8x8xi1>, vector<8x8xf32>
    %39 = tpu.concatenate %38, %38 in 1 : vector<8x8xf32>, vector<8x8xf32> -> vector<8x16xf32>
    %c0_23 = arith.constant 0 : index
    %c0_24 = arith.constant 0 : index
    %40 = vector.load %arg8[%c0_23, %c0_24] : memref<32x32xbf16, #tpu.memory_space<vmem>>, vector<32x32xbf16>
    %c0_25 = arith.constant 0 : index
    %c0_26 = arith.constant 0 : index
    %41 = vector.load %arg9[%c0_25, %c0_26] : memref<32x32xbf16, #tpu.memory_space<vmem>>, vector<32x32xbf16>
    %c0_27 = arith.constant 0 : index
    %c0_28 = arith.constant 0 : index
    %42 = vector.load %arg10[%c0_27, %c0_28] : memref<32x32xbf16, #tpu.memory_space<vmem>>, vector<32x32xbf16>
    %43 = arith.truncf %25 : vector<8x32xf32> to vector<8x32xbf16>
    %44 = arith.truncf %31 : vector<16x32xf32> to vector<16x32xbf16>
    %cst_29 = arith.constant dense<0.000000e+00> : vector<8x32xf32>
    %45 = tpu.matmul %43, %40, %cst_29 {dimension_numbers = #tpu.dot_dimension_numbers<[1], [0], [0], [1], [0, 0, 1, 1], [], []>} : vector<8x32xbf16>, vector<32x32xbf16>, vector<8x32xf32> -> vector<8x32xf32>
    %cst_30 = arith.constant dense<0.000000e+00> : vector<16x32xf32>
    %46 = tpu.matmul %44, %41, %cst_30 {dimension_numbers = #tpu.dot_dimension_numbers<[1], [0], [0], [1], [0, 0, 1, 1], [], []>} : vector<16x32xbf16>, vector<32x32xbf16>, vector<16x32xf32> -> vector<16x32xf32>
    %cst_31 = arith.constant dense<0.000000e+00> : vector<16x32xf32>
    %47 = tpu.matmul %44, %42, %cst_31 {dimension_numbers = #tpu.dot_dimension_numbers<[1], [0], [0], [1], [0, 0, 1, 1], [], []>} : vector<16x32xbf16>, vector<32x32xbf16>, vector<16x32xf32> -> vector<16x32xf32>
    %cst_32 = arith.constant 0.000000e+00 : f32
    %48 = vector.broadcast %cst_32 : f32 to vector<8x32xf32>
    %49 = vector.extract_strided_slice %45 {offsets = [0, 0], sizes = [8, 8], strides = [1, 1]} : vector<8x32xf32> to vector<8x8xf32>
    %50 = arith.truncf %49 : vector<8x8xf32> to vector<8x8xbf16>
    %51 = vector.extract_strided_slice %46 {offsets = [0, 0], sizes = [16, 8], strides = [1, 1]} : vector<16x32xf32> to vector<16x8xf32>
    %52 = arith.truncf %51 : vector<16x8xf32> to vector<16x8xbf16>
    %53 = vector.extract_strided_slice %47 {offsets = [0, 0], sizes = [16, 8], strides = [1, 1]} : vector<16x32xf32> to vector<16x8xf32>
    %54 = arith.truncf %53 : vector<16x8xf32> to vector<16x8xbf16>
    %cst_33 = arith.constant dense<0.000000e+00> : vector<8x16xf32>
    %55 = tpu.matmul %50, %52, %cst_33 {dimension_numbers = #tpu.dot_dimension_numbers<[1], [1], [0], [0], [0, 0, 1, 0], [], []>} : vector<8x8xbf16>, vector<16x8xbf16>, vector<8x16xf32> -> vector<8x16xf32>
    %cst_34 = arith.constant 0.353553385 : f32
    %56 = vector.broadcast %cst_34 : f32 to vector<8x16xf32>
    %57 = arith.mulf %55, %56 : vector<8x16xf32>
    %58 = arith.addf %57, %39 : vector<8x16xf32>
    %cst_35 = arith.constant dense<0xFF800000> : vector<8xf32>
    %59 = vector.multi_reduction <maximumf>, %58, %cst_35 [1] : vector<8x16xf32> to vector<8xf32>
    %60 = vector.shape_cast %59 : vector<8xf32> to vector<8x1xf32>
    %61 = vector.broadcast %60 : vector<8x1xf32> to vector<8x16xf32>
    %62 = arith.subf %58, %61 : vector<8x16xf32>
    %63 = math.exp %62 : vector<8x16xf32>
    %cst_36 = arith.constant dense<0.000000e+00> : vector<8xf32>
    %64 = vector.multi_reduction <add>, %63, %cst_36 [1] : vector<8x16xf32> to vector<8xf32>
    %65 = vector.shape_cast %64 : vector<8xf32> to vector<8x1xf32>
    %66 = tpu.reciprocal %65 {approx = true} : vector<8x1xf32> -> vector<8x1xf32>
    %67 = vector.broadcast %66 : vector<8x1xf32> to vector<8x16xf32>
    %68 = arith.mulf %63, %67 : vector<8x16xf32>
    %69 = arith.truncf %68 : vector<8x16xf32> to vector<8x16xbf16>
    %cst_37 = arith.constant dense<0.000000e+00> : vector<8x8xf32>
    %70 = tpu.matmul %69, %54, %cst_37 {dimension_numbers = #tpu.dot_dimension_numbers<[1], [0], [0], [1], [0, 0, 1, 1], [], []>} : vector<8x16xbf16>, vector<16x8xbf16>, vector<8x8xf32> -> vector<8x8xf32>
    %71 = arith.truncf %70 : vector<8x8xf32> to vector<8x8xbf16>
    %c0_38 = arith.constant 0 : index
    %c0_39 = arith.constant 0 : index
    %c0_40 = arith.constant 0 : index
    %72 = vector.load %arg11[%c0_38, %c0_39, %c0_40] : memref<4x8x32xbf16, #tpu.memory_space<vmem>>, vector<1x8x32xbf16>
    %73 = vector.shape_cast %72 : vector<1x8x32xbf16> to vector<8x32xbf16>
    %cst_41 = arith.constant dense<0.000000e+00> : vector<8x32xf32>
    %74 = tpu.matmul %71, %73, %cst_41 {dimension_numbers = #tpu.dot_dimension_numbers<[1], [0], [0], [1], [0, 0, 1, 1], [], []>} : vector<8x8xbf16>, vector<8x32xbf16>, vector<8x32xf32> -> vector<8x32xf32>
    %75 = arith.addf %48, %74 : vector<8x32xf32>
    %76 = vector.extract_strided_slice %45 {offsets = [0, 8], sizes = [8, 8], strides = [1, 1]} : vector<8x32xf32> to vector<8x8xf32>
    %77 = arith.truncf %76 : vector<8x8xf32> to vector<8x8xbf16>
    %78 = vector.extract_strided_slice %46 {offsets = [0, 8], sizes = [16, 8], strides = [1, 1]} : vector<16x32xf32> to vector<16x8xf32>
    %79 = arith.truncf %78 : vector<16x8xf32> to vector<16x8xbf16>
    %80 = vector.extract_strided_slice %47 {offsets = [0, 8], sizes = [16, 8], strides = [1, 1]} : vector<16x32xf32> to vector<16x8xf32>
    %81 = arith.truncf %80 : vector<16x8xf32> to vector<16x8xbf16>
    %cst_42 = arith.constant dense<0.000000e+00> : vector<8x16xf32>
    %82 = tpu.matmul %77, %79, %cst_42 {dimension_numbers = #tpu.dot_dimension_numbers<[1], [1], [0], [0], [0, 0, 1, 0], [], []>} : vector<8x8xbf16>, vector<16x8xbf16>, vector<8x16xf32> -> vector<8x16xf32>
    %cst_43 = arith.constant 0.353553385 : f32
    %83 = vector.broadcast %cst_43 : f32 to vector<8x16xf32>
    %84 = arith.mulf %82, %83 : vector<8x16xf32>
    %85 = arith.addf %84, %39 : vector<8x16xf32>
    %cst_44 = arith.constant dense<0xFF800000> : vector<8xf32>
    %86 = vector.multi_reduction <maximumf>, %85, %cst_44 [1] : vector<8x16xf32> to vector<8xf32>
    %87 = vector.shape_cast %86 : vector<8xf32> to vector<8x1xf32>
    %88 = vector.broadcast %87 : vector<8x1xf32> to vector<8x16xf32>
    %89 = arith.subf %85, %88 : vector<8x16xf32>
    %90 = math.exp %89 : vector<8x16xf32>
    %cst_45 = arith.constant dense<0.000000e+00> : vector<8xf32>
    %91 = vector.multi_reduction <add>, %90, %cst_45 [1] : vector<8x16xf32> to vector<8xf32>
    %92 = vector.shape_cast %91 : vector<8xf32> to vector<8x1xf32>
    %93 = tpu.reciprocal %92 {approx = true} : vector<8x1xf32> -> vector<8x1xf32>
    %94 = vector.broadcast %93 : vector<8x1xf32> to vector<8x16xf32>
    %95 = arith.mulf %90, %94 : vector<8x16xf32>
    %96 = arith.truncf %95 : vector<8x16xf32> to vector<8x16xbf16>
    %cst_46 = arith.constant dense<0.000000e+00> : vector<8x8xf32>
    %97 = tpu.matmul %96, %81, %cst_46 {dimension_numbers = #tpu.dot_dimension_numbers<[1], [0], [0], [1], [0, 0, 1, 1], [], []>} : vector<8x16xbf16>, vector<16x8xbf16>, vector<8x8xf32> -> vector<8x8xf32>
    %98 = arith.truncf %97 : vector<8x8xf32> to vector<8x8xbf16>
    %c1 = arith.constant 1 : index
    %c0_47 = arith.constant 0 : index
    %c0_48 = arith.constant 0 : index
    %99 = vector.load %arg11[%c1, %c0_47, %c0_48] : memref<4x8x32xbf16, #tpu.memory_space<vmem>>, vector<1x8x32xbf16>
    %100 = vector.shape_cast %99 : vector<1x8x32xbf16> to vector<8x32xbf16>
    %cst_49 = arith.constant dense<0.000000e+00> : vector<8x32xf32>
    %101 = tpu.matmul %98, %100, %cst_49 {dimension_numbers = #tpu.dot_dimension_numbers<[1], [0], [0], [1], [0, 0, 1, 1], [], []>} : vector<8x8xbf16>, vector<8x32xbf16>, vector<8x32xf32> -> vector<8x32xf32>
    %102 = arith.addf %75, %101 : vector<8x32xf32>
    %103 = vector.extract_strided_slice %45 {offsets = [0, 16], sizes = [8, 8], strides = [1, 1]} : vector<8x32xf32> to vector<8x8xf32>
    %104 = arith.truncf %103 : vector<8x8xf32> to vector<8x8xbf16>
    %105 = vector.extract_strided_slice %46 {offsets = [0, 16], sizes = [16, 8], strides = [1, 1]} : vector<16x32xf32> to vector<16x8xf32>
    %106 = arith.truncf %105 : vector<16x8xf32> to vector<16x8xbf16>
    %107 = vector.extract_strided_slice %47 {offsets = [0, 16], sizes = [16, 8], strides = [1, 1]} : vector<16x32xf32> to vector<16x8xf32>
    %108 = arith.truncf %107 : vector<16x8xf32> to vector<16x8xbf16>
    %cst_50 = arith.constant dense<0.000000e+00> : vector<8x16xf32>
    %109 = tpu.matmul %104, %106, %cst_50 {dimension_numbers = #tpu.dot_dimension_numbers<[1], [1], [0], [0], [0, 0, 1, 0], [], []>} : vector<8x8xbf16>, vector<16x8xbf16>, vector<8x16xf32> -> vector<8x16xf32>
    %cst_51 = arith.constant 0.353553385 : f32
    %110 = vector.broadcast %cst_51 : f32 to vector<8x16xf32>
    %111 = arith.mulf %109, %110 : vector<8x16xf32>
    %112 = arith.addf %111, %39 : vector<8x16xf32>
    %cst_52 = arith.constant dense<0xFF800000> : vector<8xf32>
    %113 = vector.multi_reduction <maximumf>, %112, %cst_52 [1] : vector<8x16xf32> to vector<8xf32>
    %114 = vector.shape_cast %113 : vector<8xf32> to vector<8x1xf32>
    %115 = vector.broadcast %114 : vector<8x1xf32> to vector<8x16xf32>
    %116 = arith.subf %112, %115 : vector<8x16xf32>
    %117 = math.exp %116 : vector<8x16xf32>
    %cst_53 = arith.constant dense<0.000000e+00> : vector<8xf32>
    %118 = vector.multi_reduction <add>, %117, %cst_53 [1] : vector<8x16xf32> to vector<8xf32>
    %119 = vector.shape_cast %118 : vector<8xf32> to vector<8x1xf32>
    %120 = tpu.reciprocal %119 {approx = true} : vector<8x1xf32> -> vector<8x1xf32>
    %121 = vector.broadcast %120 : vector<8x1xf32> to vector<8x16xf32>
    %122 = arith.mulf %117, %121 : vector<8x16xf32>
    %123 = arith.truncf %122 : vector<8x16xf32> to vector<8x16xbf16>
    %cst_54 = arith.constant dense<0.000000e+00> : vector<8x8xf32>
    %124 = tpu.matmul %123, %108, %cst_54 {dimension_numbers = #tpu.dot_dimension_numbers<[1], [0], [0], [1], [0, 0, 1, 1], [], []>} : vector<8x16xbf16>, vector<16x8xbf16>, vector<8x8xf32> -> vector<8x8xf32>
    %125 = arith.truncf %124 : vector<8x8xf32> to vector<8x8xbf16>
    %c2 = arith.constant 2 : index
    %c0_55 = arith.constant 0 : index
    %c0_56 = arith.constant 0 : index
    %126 = vector.load %arg11[%c2, %c0_55, %c0_56] : memref<4x8x32xbf16, #tpu.memory_space<vmem>>, vector<1x8x32xbf16>
    %127 = vector.shape_cast %126 : vector<1x8x32xbf16> to vector<8x32xbf16>
    %cst_57 = arith.constant dense<0.000000e+00> : vector<8x32xf32>
    %128 = tpu.matmul %125, %127, %cst_57 {dimension_numbers = #tpu.dot_dimension_numbers<[1], [0], [0], [1], [0, 0, 1, 1], [], []>} : vector<8x8xbf16>, vector<8x32xbf16>, vector<8x32xf32> -> vector<8x32xf32>
    %129 = arith.addf %102, %128 : vector<8x32xf32>
    %130 = vector.extract_strided_slice %45 {offsets = [0, 24], sizes = [8, 8], strides = [1, 1]} : vector<8x32xf32> to vector<8x8xf32>
    %131 = arith.truncf %130 : vector<8x8xf32> to vector<8x8xbf16>
    %132 = vector.extract_strided_slice %46 {offsets = [0, 24], sizes = [16, 8], strides = [1, 1]} : vector<16x32xf32> to vector<16x8xf32>
    %133 = arith.truncf %132 : vector<16x8xf32> to vector<16x8xbf16>
    %134 = vector.extract_strided_slice %47 {offsets = [0, 24], sizes = [16, 8], strides = [1, 1]} : vector<16x32xf32> to vector<16x8xf32>
    %135 = arith.truncf %134 : vector<16x8xf32> to vector<16x8xbf16>
    %cst_58 = arith.constant dense<0.000000e+00> : vector<8x16xf32>
    %136 = tpu.matmul %131, %133, %cst_58 {dimension_numbers = #tpu.dot_dimension_numbers<[1], [1], [0], [0], [0, 0, 1, 0], [], []>} : vector<8x8xbf16>, vector<16x8xbf16>, vector<8x16xf32> -> vector<8x16xf32>
    %cst_59 = arith.constant 0.353553385 : f32
    %137 = vector.broadcast %cst_59 : f32 to vector<8x16xf32>
    %138 = arith.mulf %136, %137 : vector<8x16xf32>
    %139 = arith.addf %138, %39 : vector<8x16xf32>
    %cst_60 = arith.constant dense<0xFF800000> : vector<8xf32>
    %140 = vector.multi_reduction <maximumf>, %139, %cst_60 [1] : vector<8x16xf32> to vector<8xf32>
    %141 = vector.shape_cast %140 : vector<8xf32> to vector<8x1xf32>
    %142 = vector.broadcast %141 : vector<8x1xf32> to vector<8x16xf32>
    %143 = arith.subf %139, %142 : vector<8x16xf32>
    %144 = math.exp %143 : vector<8x16xf32>
    %cst_61 = arith.constant dense<0.000000e+00> : vector<8xf32>
    %145 = vector.multi_reduction <add>, %144, %cst_61 [1] : vector<8x16xf32> to vector<8xf32>
    %146 = vector.shape_cast %145 : vector<8xf32> to vector<8x1xf32>
    %147 = tpu.reciprocal %146 {approx = true} : vector<8x1xf32> -> vector<8x1xf32>
    %148 = vector.broadcast %147 : vector<8x1xf32> to vector<8x16xf32>
    %149 = arith.mulf %144, %148 : vector<8x16xf32>
    %150 = arith.truncf %149 : vector<8x16xf32> to vector<8x16xbf16>
    %cst_62 = arith.constant dense<0.000000e+00> : vector<8x8xf32>
    %151 = tpu.matmul %150, %135, %cst_62 {dimension_numbers = #tpu.dot_dimension_numbers<[1], [0], [0], [1], [0, 0, 1, 1], [], []>} : vector<8x16xbf16>, vector<16x8xbf16>, vector<8x8xf32> -> vector<8x8xf32>
    %152 = arith.truncf %151 : vector<8x8xf32> to vector<8x8xbf16>
    %c3 = arith.constant 3 : index
    %c0_63 = arith.constant 0 : index
    %c0_64 = arith.constant 0 : index
    %153 = vector.load %arg11[%c3, %c0_63, %c0_64] : memref<4x8x32xbf16, #tpu.memory_space<vmem>>, vector<1x8x32xbf16>
    %154 = vector.shape_cast %153 : vector<1x8x32xbf16> to vector<8x32xbf16>
    %cst_65 = arith.constant dense<0.000000e+00> : vector<8x32xf32>
    %155 = tpu.matmul %152, %154, %cst_65 {dimension_numbers = #tpu.dot_dimension_numbers<[1], [0], [0], [1], [0, 0, 1, 1], [], []>} : vector<8x8xbf16>, vector<8x32xbf16>, vector<8x32xf32> -> vector<8x32xf32>
    %156 = arith.addf %129, %155 : vector<8x32xf32>
    %157 = arith.addf %1, %156 : vector<8x32xf32>
    %c0_66 = arith.constant 0 : index
    %c0_67 = arith.constant 0 : index
    %158 = vector.load %arg12[%c0_66, %c0_67] : memref<1x32xf32, #tpu.memory_space<vmem>>, vector<1x32xf32>
    %c0_68 = arith.constant 0 : index
    %c0_69 = arith.constant 0 : index
    %159 = vector.load %arg13[%c0_68, %c0_69] : memref<1x32xf32, #tpu.memory_space<vmem>>, vector<1x32xf32>
    %cst_70 = arith.constant dense<0.000000e+00> : vector<8xf32>
    %160 = vector.multi_reduction <add>, %157, %cst_70 [1] : vector<8x32xf32> to vector<8xf32>
    %161 = vector.shape_cast %160 : vector<8xf32> to vector<8x1xf32>
    %cst_71 = arith.constant 3.200000e+01 : f32
    %162 = vector.broadcast %cst_71 : f32 to vector<8x1xf32>
    %163 = arith.divf %161, %162 : vector<8x1xf32>
    %164 = vector.broadcast %163 : vector<8x1xf32> to vector<8x32xf32>
    %165 = arith.subf %157, %164 : vector<8x32xf32>
    %166 = arith.mulf %165, %165 : vector<8x32xf32>
    %cst_72 = arith.constant dense<0.000000e+00> : vector<8xf32>
    %167 = vector.multi_reduction <add>, %166, %cst_72 [1] : vector<8x32xf32> to vector<8xf32>
    %168 = vector.shape_cast %167 : vector<8xf32> to vector<8x1xf32>
    %cst_73 = arith.constant 3.200000e+01 : f32
    %169 = vector.broadcast %cst_73 : f32 to vector<8x1xf32>
    %170 = arith.divf %168, %169 : vector<8x1xf32>
    %171 = vector.broadcast %163 : vector<8x1xf32> to vector<8x32xf32>
    %172 = arith.subf %157, %171 : vector<8x32xf32>
    %cst_74 = arith.constant 9.99999974E-6 : f32
    %173 = vector.broadcast %cst_74 : f32 to vector<8x1xf32>
    %174 = arith.addf %170, %173 : vector<8x1xf32>
    %175 = math.rsqrt %174 : vector<8x1xf32>
    %176 = vector.broadcast %175 : vector<8x1xf32> to vector<8x32xf32>
    %177 = arith.mulf %172, %176 : vector<8x32xf32>
    %178 = vector.broadcast %158 : vector<1x32xf32> to vector<8x32xf32>
    %179 = arith.mulf %177, %178 : vector<8x32xf32>
    %180 = vector.broadcast %159 : vector<1x32xf32> to vector<8x32xf32>
    %181 = arith.addf %179, %180 : vector<8x32xf32>
    %c0_75 = arith.constant 0 : index
    %c0_76 = arith.constant 0 : index
    %c0_77 = arith.constant 0 : index
    %c0_78 = arith.constant 0 : index
    %182 = vector.load %arg4[%c0_75, %c0_76, %c0_77, %c0_78] : memref<2x1x8x32xf32, #tpu.memory_space<vmem>>, vector<1x1x8x32xf32>
    %183 = vector.shape_cast %182 : vector<1x1x8x32xf32> to vector<8x32xf32>
    %c1_79 = arith.constant 1 : index
    %c0_80 = arith.constant 0 : index
    %c0_81 = arith.constant 0 : index
    %c0_82 = arith.constant 0 : index
    %184 = vector.load %arg4[%c1_79, %c0_80, %c0_81, %c0_82] : memref<2x1x8x32xf32, #tpu.memory_space<vmem>>, vector<1x1x8x32xf32>
    %185 = vector.shape_cast %184 : vector<1x1x8x32xf32> to vector<8x32xf32>
    %186 = tpu.concatenate %183, %185 in 0 : vector<8x32xf32>, vector<8x32xf32> -> vector<16x32xf32>
    %c0_83 = arith.constant 0 : index
    %c0_84 = arith.constant 0 : index
    %c0_85 = arith.constant 0 : index
    %187 = vector.load %arg5[%c0_83, %c0_84, %c0_85] : memref<1x8x8xf32, #tpu.memory_space<vmem>>, vector<1x8x8xf32>
    %188 = vector.shape_cast %187 : vector<1x8x8xf32> to vector<8x8xf32>
    %cst_86 = arith.constant 0.000000e+00 : f32
    %189 = vector.broadcast %cst_86 : f32 to vector<8x8xf32>
    %190 = arith.cmpf ogt, %188, %189 : vector<8x8xf32>
    %cst_87 = arith.constant -1.000000e+30 : f32
    %cst_88 = arith.constant 0.000000e+00 : f32
    %191 = vector.broadcast %cst_87 : f32 to vector<8x8xf32>
    %192 = vector.broadcast %cst_88 : f32 to vector<8x8xf32>
    %193 = arith.select %190, %191, %192 : vector<8x8xi1>, vector<8x8xf32>
    %194 = tpu.concatenate %193, %193 in 1 : vector<8x8xf32>, vector<8x8xf32> -> vector<8x16xf32>
    %c0_89 = arith.constant 0 : index
    %c0_90 = arith.constant 0 : index
    %195 = vector.load %arg14[%c0_89, %c0_90] : memref<32x32xbf16, #tpu.memory_space<vmem>>, vector<32x32xbf16>
    %c0_91 = arith.constant 0 : index
    %c0_92 = arith.constant 0 : index
    %196 = vector.load %arg15[%c0_91, %c0_92] : memref<32x32xbf16, #tpu.memory_space<vmem>>, vector<32x32xbf16>
    %c0_93 = arith.constant 0 : index
    %c0_94 = arith.constant 0 : index
    %197 = vector.load %arg16[%c0_93, %c0_94] : memref<32x32xbf16, #tpu.memory_space<vmem>>, vector<32x32xbf16>
    %198 = arith.truncf %181 : vector<8x32xf32> to vector<8x32xbf16>
    %199 = arith.truncf %186 : vector<16x32xf32> to vector<16x32xbf16>
    %cst_95 = arith.constant dense<0.000000e+00> : vector<8x32xf32>
    %200 = tpu.matmul %198, %195, %cst_95 {dimension_numbers = #tpu.dot_dimension_numbers<[1], [0], [0], [1], [0, 0, 1, 1], [], []>} : vector<8x32xbf16>, vector<32x32xbf16>, vector<8x32xf32> -> vector<8x32xf32>
    %cst_96 = arith.constant dense<0.000000e+00> : vector<16x32xf32>
    %201 = tpu.matmul %199, %196, %cst_96 {dimension_numbers = #tpu.dot_dimension_numbers<[1], [0], [0], [1], [0, 0, 1, 1], [], []>} : vector<16x32xbf16>, vector<32x32xbf16>, vector<16x32xf32> -> vector<16x32xf32>
    %cst_97 = arith.constant dense<0.000000e+00> : vector<16x32xf32>
    %202 = tpu.matmul %199, %197, %cst_97 {dimension_numbers = #tpu.dot_dimension_numbers<[1], [0], [0], [1], [0, 0, 1, 1], [], []>} : vector<16x32xbf16>, vector<32x32xbf16>, vector<16x32xf32> -> vector<16x32xf32>
    %cst_98 = arith.constant 0.000000e+00 : f32
    %203 = vector.broadcast %cst_98 : f32 to vector<8x32xf32>
    %204 = vector.extract_strided_slice %200 {offsets = [0, 0], sizes = [8, 8], strides = [1, 1]} : vector<8x32xf32> to vector<8x8xf32>
    %205 = arith.truncf %204 : vector<8x8xf32> to vector<8x8xbf16>
    %206 = vector.extract_strided_slice %201 {offsets = [0, 0], sizes = [16, 8], strides = [1, 1]} : vector<16x32xf32> to vector<16x8xf32>
    %207 = arith.truncf %206 : vector<16x8xf32> to vector<16x8xbf16>
    %208 = vector.extract_strided_slice %202 {offsets = [0, 0], sizes = [16, 8], strides = [1, 1]} : vector<16x32xf32> to vector<16x8xf32>
    %209 = arith.truncf %208 : vector<16x8xf32> to vector<16x8xbf16>
    %cst_99 = arith.constant dense<0.000000e+00> : vector<8x16xf32>
    %210 = tpu.matmul %205, %207, %cst_99 {dimension_numbers = #tpu.dot_dimension_numbers<[1], [1], [0], [0], [0, 0, 1, 0], [], []>} : vector<8x8xbf16>, vector<16x8xbf16>, vector<8x16xf32> -> vector<8x16xf32>
    %cst_100 = arith.constant 0.353553385 : f32
    %211 = vector.broadcast %cst_100 : f32 to vector<8x16xf32>
    %212 = arith.mulf %210, %211 : vector<8x16xf32>
    %213 = arith.addf %212, %194 : vector<8x16xf32>
    %cst_101 = arith.constant dense<0xFF800000> : vector<8xf32>
    %214 = vector.multi_reduction <maximumf>, %213, %cst_101 [1] : vector<8x16xf32> to vector<8xf32>
    %215 = vector.shape_cast %214 : vector<8xf32> to vector<8x1xf32>
    %216 = vector.broadcast %215 : vector<8x1xf32> to vector<8x16xf32>
    %217 = arith.subf %213, %216 : vector<8x16xf32>
    %218 = math.exp %217 : vector<8x16xf32>
    %cst_102 = arith.constant dense<0.000000e+00> : vector<8xf32>
    %219 = vector.multi_reduction <add>, %218, %cst_102 [1] : vector<8x16xf32> to vector<8xf32>
    %220 = vector.shape_cast %219 : vector<8xf32> to vector<8x1xf32>
    %221 = tpu.reciprocal %220 {approx = true} : vector<8x1xf32> -> vector<8x1xf32>
    %222 = vector.broadcast %221 : vector<8x1xf32> to vector<8x16xf32>
    %223 = arith.mulf %218, %222 : vector<8x16xf32>
    %224 = arith.truncf %223 : vector<8x16xf32> to vector<8x16xbf16>
    %cst_103 = arith.constant dense<0.000000e+00> : vector<8x8xf32>
    %225 = tpu.matmul %224, %209, %cst_103 {dimension_numbers = #tpu.dot_dimension_numbers<[1], [0], [0], [1], [0, 0, 1, 1], [], []>} : vector<8x16xbf16>, vector<16x8xbf16>, vector<8x8xf32> -> vector<8x8xf32>
    %226 = arith.truncf %225 : vector<8x8xf32> to vector<8x8xbf16>
    %c0_104 = arith.constant 0 : index
    %c0_105 = arith.constant 0 : index
    %c0_106 = arith.constant 0 : index
    %227 = vector.load %arg17[%c0_104, %c0_105, %c0_106] : memref<4x8x32xbf16, #tpu.memory_space<vmem>>, vector<1x8x32xbf16>
    %228 = vector.shape_cast %227 : vector<1x8x32xbf16> to vector<8x32xbf16>
    %cst_107 = arith.constant dense<0.000000e+00> : vector<8x32xf32>
    %229 = tpu.matmul %226, %228, %cst_107 {dimension_numbers = #tpu.dot_dimension_numbers<[1], [0], [0], [1], [0, 0, 1, 1], [], []>} : vector<8x8xbf16>, vector<8x32xbf16>, vector<8x32xf32> -> vector<8x32xf32>
    %230 = arith.addf %203, %229 : vector<8x32xf32>
    %231 = vector.extract_strided_slice %200 {offsets = [0, 8], sizes = [8, 8], strides = [1, 1]} : vector<8x32xf32> to vector<8x8xf32>
    %232 = arith.truncf %231 : vector<8x8xf32> to vector<8x8xbf16>
    %233 = vector.extract_strided_slice %201 {offsets = [0, 8], sizes = [16, 8], strides = [1, 1]} : vector<16x32xf32> to vector<16x8xf32>
    %234 = arith.truncf %233 : vector<16x8xf32> to vector<16x8xbf16>
    %235 = vector.extract_strided_slice %202 {offsets = [0, 8], sizes = [16, 8], strides = [1, 1]} : vector<16x32xf32> to vector<16x8xf32>
    %236 = arith.truncf %235 : vector<16x8xf32> to vector<16x8xbf16>
    %cst_108 = arith.constant dense<0.000000e+00> : vector<8x16xf32>
    %237 = tpu.matmul %232, %234, %cst_108 {dimension_numbers = #tpu.dot_dimension_numbers<[1], [1], [0], [0], [0, 0, 1, 0], [], []>} : vector<8x8xbf16>, vector<16x8xbf16>, vector<8x16xf32> -> vector<8x16xf32>
    %cst_109 = arith.constant 0.353553385 : f32
    %238 = vector.broadcast %cst_109 : f32 to vector<8x16xf32>
    %239 = arith.mulf %237, %238 : vector<8x16xf32>
    %240 = arith.addf %239, %194 : vector<8x16xf32>
    %cst_110 = arith.constant dense<0xFF800000> : vector<8xf32>
    %241 = vector.multi_reduction <maximumf>, %240, %cst_110 [1] : vector<8x16xf32> to vector<8xf32>
    %242 = vector.shape_cast %241 : vector<8xf32> to vector<8x1xf32>
    %243 = vector.broadcast %242 : vector<8x1xf32> to vector<8x16xf32>
    %244 = arith.subf %240, %243 : vector<8x16xf32>
    %245 = math.exp %244 : vector<8x16xf32>
    %cst_111 = arith.constant dense<0.000000e+00> : vector<8xf32>
    %246 = vector.multi_reduction <add>, %245, %cst_111 [1] : vector<8x16xf32> to vector<8xf32>
    %247 = vector.shape_cast %246 : vector<8xf32> to vector<8x1xf32>
    %248 = tpu.reciprocal %247 {approx = true} : vector<8x1xf32> -> vector<8x1xf32>
    %249 = vector.broadcast %248 : vector<8x1xf32> to vector<8x16xf32>
    %250 = arith.mulf %245, %249 : vector<8x16xf32>
    %251 = arith.truncf %250 : vector<8x16xf32> to vector<8x16xbf16>
    %cst_112 = arith.constant dense<0.000000e+00> : vector<8x8xf32>
    %252 = tpu.matmul %251, %236, %cst_112 {dimension_numbers = #tpu.dot_dimension_numbers<[1], [0], [0], [1], [0, 0, 1, 1], [], []>} : vector<8x16xbf16>, vector<16x8xbf16>, vector<8x8xf32> -> vector<8x8xf32>
    %253 = arith.truncf %252 : vector<8x8xf32> to vector<8x8xbf16>
    %c1_113 = arith.constant 1 : index
    %c0_114 = arith.constant 0 : index
    %c0_115 = arith.constant 0 : index
    %254 = vector.load %arg17[%c1_113, %c0_114, %c0_115] : memref<4x8x32xbf16, #tpu.memory_space<vmem>>, vector<1x8x32xbf16>
    %255 = vector.shape_cast %254 : vector<1x8x32xbf16> to vector<8x32xbf16>
    %cst_116 = arith.constant dense<0.000000e+00> : vector<8x32xf32>
    %256 = tpu.matmul %253, %255, %cst_116 {dimension_numbers = #tpu.dot_dimension_numbers<[1], [0], [0], [1], [0, 0, 1, 1], [], []>} : vector<8x8xbf16>, vector<8x32xbf16>, vector<8x32xf32> -> vector<8x32xf32>
    %257 = arith.addf %230, %256 : vector<8x32xf32>
    %258 = vector.extract_strided_slice %200 {offsets = [0, 16], sizes = [8, 8], strides = [1, 1]} : vector<8x32xf32> to vector<8x8xf32>
    %259 = arith.truncf %258 : vector<8x8xf32> to vector<8x8xbf16>
    %260 = vector.extract_strided_slice %201 {offsets = [0, 16], sizes = [16, 8], strides = [1, 1]} : vector<16x32xf32> to vector<16x8xf32>
    %261 = arith.truncf %260 : vector<16x8xf32> to vector<16x8xbf16>
    %262 = vector.extract_strided_slice %202 {offsets = [0, 16], sizes = [16, 8], strides = [1, 1]} : vector<16x32xf32> to vector<16x8xf32>
    %263 = arith.truncf %262 : vector<16x8xf32> to vector<16x8xbf16>
    %cst_117 = arith.constant dense<0.000000e+00> : vector<8x16xf32>
    %264 = tpu.matmul %259, %261, %cst_117 {dimension_numbers = #tpu.dot_dimension_numbers<[1], [1], [0], [0], [0, 0, 1, 0], [], []>} : vector<8x8xbf16>, vector<16x8xbf16>, vector<8x16xf32> -> vector<8x16xf32>
    %cst_118 = arith.constant 0.353553385 : f32
    %265 = vector.broadcast %cst_118 : f32 to vector<8x16xf32>
    %266 = arith.mulf %264, %265 : vector<8x16xf32>
    %267 = arith.addf %266, %194 : vector<8x16xf32>
    %cst_119 = arith.constant dense<0xFF800000> : vector<8xf32>
    %268 = vector.multi_reduction <maximumf>, %267, %cst_119 [1] : vector<8x16xf32> to vector<8xf32>
    %269 = vector.shape_cast %268 : vector<8xf32> to vector<8x1xf32>
    %270 = vector.broadcast %269 : vector<8x1xf32> to vector<8x16xf32>
    %271 = arith.subf %267, %270 : vector<8x16xf32>
    %272 = math.exp %271 : vector<8x16xf32>
    %cst_120 = arith.constant dense<0.000000e+00> : vector<8xf32>
    %273 = vector.multi_reduction <add>, %272, %cst_120 [1] : vector<8x16xf32> to vector<8xf32>
    %274 = vector.shape_cast %273 : vector<8xf32> to vector<8x1xf32>
    %275 = tpu.reciprocal %274 {approx = true} : vector<8x1xf32> -> vector<8x1xf32>
    %276 = vector.broadcast %275 : vector<8x1xf32> to vector<8x16xf32>
    %277 = arith.mulf %272, %276 : vector<8x16xf32>
    %278 = arith.truncf %277 : vector<8x16xf32> to vector<8x16xbf16>
    %cst_121 = arith.constant dense<0.000000e+00> : vector<8x8xf32>
    %279 = tpu.matmul %278, %263, %cst_121 {dimension_numbers = #tpu.dot_dimension_numbers<[1], [0], [0], [1], [0, 0, 1, 1], [], []>} : vector<8x16xbf16>, vector<16x8xbf16>, vector<8x8xf32> -> vector<8x8xf32>
    %280 = arith.truncf %279 : vector<8x8xf32> to vector<8x8xbf16>
    %c2_122 = arith.constant 2 : index
    %c0_123 = arith.constant 0 : index
    %c0_124 = arith.constant 0 : index
    %281 = vector.load %arg17[%c2_122, %c0_123, %c0_124] : memref<4x8x32xbf16, #tpu.memory_space<vmem>>, vector<1x8x32xbf16>
    %282 = vector.shape_cast %281 : vector<1x8x32xbf16> to vector<8x32xbf16>
    %cst_125 = arith.constant dense<0.000000e+00> : vector<8x32xf32>
    %283 = tpu.matmul %280, %282, %cst_125 {dimension_numbers = #tpu.dot_dimension_numbers<[1], [0], [0], [1], [0, 0, 1, 1], [], []>} : vector<8x8xbf16>, vector<8x32xbf16>, vector<8x32xf32> -> vector<8x32xf32>
    %284 = arith.addf %257, %283 : vector<8x32xf32>
    %285 = vector.extract_strided_slice %200 {offsets = [0, 24], sizes = [8, 8], strides = [1, 1]} : vector<8x32xf32> to vector<8x8xf32>
    %286 = arith.truncf %285 : vector<8x8xf32> to vector<8x8xbf16>
    %287 = vector.extract_strided_slice %201 {offsets = [0, 24], sizes = [16, 8], strides = [1, 1]} : vector<16x32xf32> to vector<16x8xf32>
    %288 = arith.truncf %287 : vector<16x8xf32> to vector<16x8xbf16>
    %289 = vector.extract_strided_slice %202 {offsets = [0, 24], sizes = [16, 8], strides = [1, 1]} : vector<16x32xf32> to vector<16x8xf32>
    %290 = arith.truncf %289 : vector<16x8xf32> to vector<16x8xbf16>
    %cst_126 = arith.constant dense<0.000000e+00> : vector<8x16xf32>
    %291 = tpu.matmul %286, %288, %cst_126 {dimension_numbers = #tpu.dot_dimension_numbers<[1], [1], [0], [0], [0, 0, 1, 0], [], []>} : vector<8x8xbf16>, vector<16x8xbf16>, vector<8x16xf32> -> vector<8x16xf32>
    %cst_127 = arith.constant 0.353553385 : f32
    %292 = vector.broadcast %cst_127 : f32 to vector<8x16xf32>
    %293 = arith.mulf %291, %292 : vector<8x16xf32>
    %294 = arith.addf %293, %194 : vector<8x16xf32>
    %cst_128 = arith.constant dense<0xFF800000> : vector<8xf32>
    %295 = vector.multi_reduction <maximumf>, %294, %cst_128 [1] : vector<8x16xf32> to vector<8xf32>
    %296 = vector.shape_cast %295 : vector<8xf32> to vector<8x1xf32>
    %297 = vector.broadcast %296 : vector<8x1xf32> to vector<8x16xf32>
    %298 = arith.subf %294, %297 : vector<8x16xf32>
    %299 = math.exp %298 : vector<8x16xf32>
    %cst_129 = arith.constant dense<0.000000e+00> : vector<8xf32>
    %300 = vector.multi_reduction <add>, %299, %cst_129 [1] : vector<8x16xf32> to vector<8xf32>
    %301 = vector.shape_cast %300 : vector<8xf32> to vector<8x1xf32>
    %302 = tpu.reciprocal %301 {approx = true} : vector<8x1xf32> -> vector<8x1xf32>
    %303 = vector.broadcast %302 : vector<8x1xf32> to vector<8x16xf32>
    %304 = arith.mulf %299, %303 : vector<8x16xf32>
    %305 = arith.truncf %304 : vector<8x16xf32> to vector<8x16xbf16>
    %cst_130 = arith.constant dense<0.000000e+00> : vector<8x8xf32>
    %306 = tpu.matmul %305, %290, %cst_130 {dimension_numbers = #tpu.dot_dimension_numbers<[1], [0], [0], [1], [0, 0, 1, 1], [], []>} : vector<8x16xbf16>, vector<16x8xbf16>, vector<8x8xf32> -> vector<8x8xf32>
    %307 = arith.truncf %306 : vector<8x8xf32> to vector<8x8xbf16>
    %c3_131 = arith.constant 3 : index
    %c0_132 = arith.constant 0 : index
    %c0_133 = arith.constant 0 : index
    %308 = vector.load %arg17[%c3_131, %c0_132, %c0_133] : memref<4x8x32xbf16, #tpu.memory_space<vmem>>, vector<1x8x32xbf16>
    %309 = vector.shape_cast %308 : vector<1x8x32xbf16> to vector<8x32xbf16>
    %cst_134 = arith.constant dense<0.000000e+00> : vector<8x32xf32>
    %310 = tpu.matmul %307, %309, %cst_134 {dimension_numbers = #tpu.dot_dimension_numbers<[1], [0], [0], [1], [0, 0, 1, 1], [], []>} : vector<8x8xbf16>, vector<8x32xbf16>, vector<8x32xf32> -> vector<8x32xf32>
    %311 = arith.addf %284, %310 : vector<8x32xf32>
    %312 = arith.addf %157, %311 : vector<8x32xf32>
    %c0_135 = arith.constant 0 : index
    %c0_136 = arith.constant 0 : index
    %313 = vector.load %arg18[%c0_135, %c0_136] : memref<1x32xf32, #tpu.memory_space<vmem>>, vector<1x32xf32>
    %c0_137 = arith.constant 0 : index
    %c0_138 = arith.constant 0 : index
    %314 = vector.load %arg19[%c0_137, %c0_138] : memref<1x32xf32, #tpu.memory_space<vmem>>, vector<1x32xf32>
    %cst_139 = arith.constant dense<0.000000e+00> : vector<8xf32>
    %315 = vector.multi_reduction <add>, %312, %cst_139 [1] : vector<8x32xf32> to vector<8xf32>
    %316 = vector.shape_cast %315 : vector<8xf32> to vector<8x1xf32>
    %cst_140 = arith.constant 3.200000e+01 : f32
    %317 = vector.broadcast %cst_140 : f32 to vector<8x1xf32>
    %318 = arith.divf %316, %317 : vector<8x1xf32>
    %319 = vector.broadcast %318 : vector<8x1xf32> to vector<8x32xf32>
    %320 = arith.subf %312, %319 : vector<8x32xf32>
    %321 = arith.mulf %320, %320 : vector<8x32xf32>
    %cst_141 = arith.constant dense<0.000000e+00> : vector<8xf32>
    %322 = vector.multi_reduction <add>, %321, %cst_141 [1] : vector<8x32xf32> to vector<8xf32>
    %323 = vector.shape_cast %322 : vector<8xf32> to vector<8x1xf32>
    %cst_142 = arith.constant 3.200000e+01 : f32
    %324 = vector.broadcast %cst_142 : f32 to vector<8x1xf32>
    %325 = arith.divf %323, %324 : vector<8x1xf32>
    %326 = vector.broadcast %318 : vector<8x1xf32> to vector<8x32xf32>
    %327 = arith.subf %312, %326 : vector<8x32xf32>
    %cst_143 = arith.constant 9.99999974E-6 : f32
    %328 = vector.broadcast %cst_143 : f32 to vector<8x1xf32>
    %329 = arith.addf %325, %328 : vector<8x1xf32>
    %330 = math.rsqrt %329 : vector<8x1xf32>
    %331 = vector.broadcast %330 : vector<8x1xf32> to vector<8x32xf32>
    %332 = arith.mulf %327, %331 : vector<8x32xf32>
    %333 = vector.broadcast %313 : vector<1x32xf32> to vector<8x32xf32>
    %334 = arith.mulf %332, %333 : vector<8x32xf32>
    %335 = vector.broadcast %314 : vector<1x32xf32> to vector<8x32xf32>
    %336 = arith.addf %334, %335 : vector<8x32xf32>
    %337 = arith.truncf %336 : vector<8x32xf32> to vector<8x32xbf16>
    %c0_144 = arith.constant 0 : index
    %c0_145 = arith.constant 0 : index
    %338 = vector.load %arg20[%c0_144, %c0_145] : memref<32x64xbf16, #tpu.memory_space<vmem>>, vector<32x64xbf16>
    %cst_146 = arith.constant dense<0.000000e+00> : vector<8x64xf32>
    %339 = tpu.matmul %337, %338, %cst_146 {dimension_numbers = #tpu.dot_dimension_numbers<[1], [0], [0], [1], [0, 0, 1, 1], [], []>} : vector<8x32xbf16>, vector<32x64xbf16>, vector<8x64xf32> -> vector<8x64xf32>
    %c0_147 = arith.constant 0 : index
    %c0_148 = arith.constant 0 : index
    %340 = vector.load %arg21[%c0_147, %c0_148] : memref<1x64xf32, #tpu.memory_space<vmem>>, vector<1x64xf32>
    %341 = vector.broadcast %340 : vector<1x64xf32> to vector<8x64xf32>
    %342 = arith.addf %339, %341 : vector<8x64xf32>
    %cst_149 = arith.constant 0.000000e+00 : f32
    %343 = vector.broadcast %cst_149 : f32 to vector<8x64xf32>
    %344 = arith.maximumf %342, %343 : vector<8x64xf32>
    %345 = arith.truncf %344 : vector<8x64xf32> to vector<8x64xbf16>
    %c0_150 = arith.constant 0 : index
    %c0_151 = arith.constant 0 : index
    %346 = vector.load %arg22[%c0_150, %c0_151] : memref<64x32xbf16, #tpu.memory_space<vmem>>, vector<64x32xbf16>
    %cst_152 = arith.constant dense<0.000000e+00> : vector<8x32xf32>
    %347 = tpu.matmul %345, %346, %cst_152 {dimension_numbers = #tpu.dot_dimension_numbers<[1], [0], [0], [1], [0, 0, 1, 1], [], []>} : vector<8x64xbf16>, vector<64x32xbf16>, vector<8x32xf32> -> vector<8x32xf32>
    %c0_153 = arith.constant 0 : index
    %c0_154 = arith.constant 0 : index
    %348 = vector.load %arg23[%c0_153, %c0_154] : memref<1x32xf32, #tpu.memory_space<vmem>>, vector<1x32xf32>
    %349 = vector.broadcast %348 : vector<1x32xf32> to vector<8x32xf32>
    %350 = arith.addf %347, %349 : vector<8x32xf32>
    %351 = arith.addf %312, %350 : vector<8x32xf32>
    %c0_155 = arith.constant 0 : index
    %c0_156 = arith.constant 0 : index
    %c0_157 = arith.constant 0 : index
    %352 = vector.load %arg24[%c0_155, %c0_156, %c0_157] : memref<1x8x32xf32, #tpu.memory_space<vmem>>, vector<1x8x32xf32>
    %353 = vector.shape_cast %352 : vector<1x8x32xf32> to vector<8x32xf32>
    %354 = vector.shape_cast %351 : vector<8x32xf32> to vector<1x8x32xf32>
    tpu.vector_store %arg24[%c0_155, %c0_156, %c0_157], %354 {strides = array<i32>} : memref<1x8x32xf32, #tpu.memory_space<vmem>>, vector<1x8x32xf32>,
    return
  }
  func.func @transform_0(%arg0: i32) -> (i32, i32, i32) {
    %c0_i32 = arith.constant 0 : i32
    %c0_i32_0 = arith.constant 0 : i32
    %c0_i32_1 = arith.constant 0 : i32
    return %arg0, %c0_i32, %c0_i32_0 : i32, i32, i32
  }
  func.func @transform_1(%arg0: i32) -> (i32, i32, i32, i32) {
    %c0_i32 = arith.constant 0 : i32
    %c0_i32_0 = arith.constant 0 : i32
    %c0_i32_1 = arith.constant 0 : i32
    %c0_i32_2 = arith.constant 0 : i32
    return %c0_i32, %arg0, %c0_i32_0, %c0_i32_1 : i32, i32, i32, i32
  }
  func.func @transform_2(%arg0: i32) -> (i32, i32, i32) {
    %c0_i32 = arith.constant 0 : i32
    %c0_i32_0 = arith.constant 0 : i32
    %c0_i32_1 = arith.constant 0 : i32
    return %arg0, %c0_i32, %c0_i32_0 : i32, i32, i32
  }
  func.func @transform_3(%arg0: i32) -> (i32, i32, i32, i32) {
    %c0_i32 = arith.constant 0 : i32
    %c0_i32_0 = arith.constant 0 : i32
    %c0_i32_1 = arith.constant 0 : i32
    %c0_i32_2 = arith.constant 0 : i32
    return %c0_i32, %arg0, %c0_i32_0, %c0_i32_1 : i32, i32, i32, i32
  }
  func.func @transform_4(%arg0: i32) -> (i32, i32, i32) {
    %c0_i32 = arith.constant 0 : i32
    %c0_i32_0 = arith.constant 0 : i32
    %c0_i32_1 = arith.constant 0 : i32
    return %arg0, %c0_i32, %c0_i32_0 : i32, i32, i32
  }
  func.func @transform_5(%arg0: i32) -> (i32, i32) {
    %c0_i32 = arith.constant 0 : i32
    %c0_i32_0 = arith.constant 0 : i32
    %c0_i32_1 = arith.constant 0 : i32
    return %c0_i32, %c0_i32_0 : i32, i32
  }
  func.func @transform_6(%arg0: i32) -> (i32, i32) {
    %c0_i32 = arith.constant 0 : i32
    %c0_i32_0 = arith.constant 0 : i32
    %c0_i32_1 = arith.constant 0 : i32
    return %c0_i32, %c0_i32_0 : i32, i32
  }
  func.func @transform_7(%arg0: i32) -> (i32, i32) {
    %c0_i32 = arith.constant 0 : i32
    %c0_i32_0 = arith.constant 0 : i32
    %c0_i32_1 = arith.constant 0 : i32
    return %c0_i32, %c0_i32_0 : i32, i32
  }
  func.func @transform_8(%arg0: i32) -> (i32, i32) {
    %c0_i32 = arith.constant 0 : i32
    %c0_i32_0 = arith.constant 0 : i32
    %c0_i32_1 = arith.constant 0 : i32
    return %c0_i32, %c0_i32_0 : i32, i32
  }
  func.func @transform_9(%arg0: i32) -> (i32, i32) {
    %c0_i32 = arith.constant 0 : i32
    %c0_i32_0 = arith.constant 0 : i32
    %c0_i32_1 = arith.constant 0 : i32
    return %c0_i32, %c0_i32_0 : i32, i32
  }
  func.func @transform_10(%arg0: i32) -> (i32, i32, i32) {
    %c0_i32 = arith.constant 0 : i32
    %c0_i32_0 = arith.constant 0 : i32
    %c0_i32_1 = arith.constant 0 : i32
    %c0_i32_2 = arith.constant 0 : i32
    return %c0_i32, %c0_i32_0, %c0_i32_1 : i32, i32, i32
  }
  func.func @transform_11(%arg0: i32) -> (i32, i32) {
    %c0_i32 = arith.constant 0 : i32
    %c0_i32_0 = arith.constant 0 : i32
    %c0_i32_1 = arith.constant 0 : i32
    return %c0_i32, %c0_i32_0 : i32, i32
  }
  func.func @transform_12(%arg0: i32) -> (i32, i32) {
    %c0_i32 = arith.constant 0 : i32
    %c0_i32_0 = arith.constant 0 : i32
    %c0_i32_1 = arith.constant 0 : i32
    return %c0_i32, %c0_i32_0 : i32, i32
  }
  func.func @transform_13(%arg0: i32) -> (i32, i32) {
    %c0_i32 = arith.constant 0 : i32
    %c0_i32_0 = arith.constant 0 : i32
    %c0_i32_1 = arith.constant 0 : i32
    return %c0_i32, %c0_i32_0 : i32, i32
  }
  func.func @transform_14(%arg0: i32) -> (i32, i32) {
    %c0_i32 = arith.constant 0 : i32
    %c0_i32_0 = arith.constant 0 : i32
    %c0_i32_1 = arith.constant 0 : i32
    return %c0_i32, %c0_i32_0 : i32, i32
  }
  func.func @transform_15(%arg0: i32) -> (i32, i32) {
    %c0_i32 = arith.constant 0 : i32
    %c0_i32_0 = arith.constant 0 : i32
    %c0_i32_1 = arith.constant 0 : i32
    return %c0_i32, %c0_i32_0 : i32, i32
  }
  func.func @transform_16(%arg0: i32) -> (i32, i32, i32) {
    %c0_i32 = arith.constant 0 : i32
    %c0_i32_0 = arith.constant 0 : i32
    %c0_i32_1 = arith.constant 0 : i32
    %c0_i32_2 = arith.constant 0 : i32
    return %c0_i32, %c0_i32_0, %c0_i32_1 : i32, i32, i32
  }
  func.func @transform_17(%arg0: i32) -> (i32, i32) {
    %c0_i32 = arith.constant 0 : i32
    %c0_i32_0 = arith.constant 0 : i32
    %c0_i32_1 = arith.constant 0 : i32
    return %c0_i32, %c0_i32_0 : i32, i32
  }
  func.func @transform_18(%arg0: i32) -> (i32, i32) {
    %c0_i32 = arith.constant 0 : i32
    %c0_i32_0 = arith.constant 0 : i32
    %c0_i32_1 = arith.constant 0 : i32
    return %c0_i32, %c0_i32_0 : i32, i32
  }
  func.func @transform_19(%arg0: i32) -> (i32, i32) {
    %c0_i32 = arith.constant 0 : i32
    %c0_i32_0 = arith.constant 0 : i32
    %c0_i32_1 = arith.constant 0 : i32
    return %c0_i32, %c0_i32_0 : i32, i32
  }
  func.func @transform_20(%arg0: i32) -> (i32, i32) {
    %c0_i32 = arith.constant 0 : i32
    %c0_i32_0 = arith.constant 0 : i32
    %c0_i32_1 = arith.constant 0 : i32
    return %c0_i32, %c0_i32_0 : i32, i32
  }
  func.func @transform_21(%arg0: i32) -> (i32, i32) {
    %c0_i32 = arith.constant 0 : i32
    %c0_i32_0 = arith.constant 0 : i32
    %c0_i32_1 = arith.constant 0 : i32
    return %c0_i32, %c0_i32_0 : i32, i32
  }
  func.func @transform_22(%arg0: i32) -> (i32, i32) {
    %c0_i32 = arith.constant 0 : i32
    %c0_i32_0 = arith.constant 0 : i32
    %c0_i32_1 = arith.constant 0 : i32
    return %c0_i32, %c0_i32_0 : i32, i32
  }
  func.func @transform_23(%arg0: i32) -> (i32, i32, i32) {
    %c0_i32 = arith.constant 0 : i32
    %c0_i32_0 = arith.constant 0 : i32
    %c0_i32_1 = arith.constant 0 : i32
    return %arg0, %c0_i32, %c0_i32_0 : i32, i32, i32
  }
  func.func @transform_24(%arg0: i32) -> (i32, i32, i32) {
    %c0_i32 = arith.constant 0 : i32
    %c0_i32_0 = arith.constant 0 : i32
    %c0_i32_1 = arith.constant 0 : i32
    return %arg0, %c0_i32, %c0_i32_0 : i32, i32, i32
  }
}

</mosaic_0001>

<llo_original>
// kernel: tpu_custom_call.1
$region0: #{tpu_custom_call.1}
  #allocation0 [shape = 'u32[]', space=smem, size = 0x4, offset = 0x4, fixed_abs, tag = 'smem constant byte address 0x4 - core index']
  #allocation1 [shape = 'u32[144,128]{1,0:T(1,128)}', space=vmem, size = 0x12000, scoped, tag = 'internal scratch']
  %s0 = inlined_call_operand.vmem [shape: f32[2,8,32], index: 0, kind: input, shape index: {}]
  %s1 = inlined_call_operand.hbm [shape: f32[1,2,8,32], index: 1, kind: input, shape index: {}]
  %s2 = inlined_call_operand.hbm [shape: f32[2,8,8], index: 2, kind: input, shape index: {}]
  %s3 = inlined_call_operand.vmem [shape: f32[2,2,8,32], index: 3, kind: input, shape index: {}]
  %s4 = inlined_call_operand.hbm [shape: f32[2,8,8], index: 4, kind: input, shape index: {}]
  %s5 = inlined_call_operand.hbm [shape: f32[1,32], index: 5, kind: input, shape index: {}]
  %s6 = inlined_call_operand.hbm [shape: f32[1,32], index: 6, kind: input, shape index: {}]
  %s7 = inlined_call_operand.hbm [shape: bf16[32,32], index: 7, kind: input, shape index: {}]
  %s8 = inlined_call_operand.hbm [shape: bf16[32,32], index: 8, kind: input, shape index: {}]
  %s9 = inlined_call_operand.vmem [shape: bf16[32,32], index: 9, kind: input, shape index: {}]
  %s10 = inlined_call_operand.hbm [shape: bf16[4,8,32], index: 10, kind: input, shape index: {}]
  %s11 = inlined_call_operand.hbm [shape: f32[1,32], index: 11, kind: input, shape index: {}]
  %s12 = inlined_call_operand.hbm [shape: f32[1,32], index: 12, kind: input, shape index: {}]
  %s13 = inlined_call_operand.vmem [shape: bf16[32,32], index: 13, kind: input, shape index: {}]
  %s14 = inlined_call_operand.hbm [shape: bf16[32,32], index: 14, kind: input, shape index: {}]
  %s15 = inlined_call_operand.hbm [shape: bf16[32,32], index: 15, kind: input, shape index: {}]
  %s16 = inlined_call_operand.hbm [shape: bf16[4,8,32], index: 16, kind: input, shape index: {}]
  %s17 = inlined_call_operand.hbm [shape: f32[1,32], index: 17, kind: input, shape index: {}]
  %s18 = inlined_call_operand.vmem [shape: f32[1,32], index: 18, kind: input, shape index: {}]
  %s19 = inlined_call_operand.vmem [shape: bf16[32,64], index: 19, kind: input, shape index: {}]
  %s20 = inlined_call_operand.vmem [shape: f32[1,64], index: 20, kind: input, shape index: {}]
  %s21 = inlined_call_operand.vmem [shape: bf16[64,32], index: 21, kind: input, shape index: {}]
  %s22 = inlined_call_operand.vmem [shape: f32[1,32], index: 22, kind: input, shape index: {}]
  %s23 = inlined_call_operand.hbm [shape: f32[2,8,32], index: 23, kind: output, shape index: {0}]
  %s24 = inlined_call_operand.hbm [shape: f32[2,8,32], index: 24, kind: output, shape index: {1}]
  %25 = xla_tuple %s23, %s24
  %s26 = sld [smem:[#allocation0]]
  $region227: #{tpu_custom_call.1} parent=0
    _
  %s28 = ssub.s32 1, %s26
  %s29 = scalar_select 0, %s28, %s26
  $region1: #{tpu_custom_call.1} parent=0
    #allocation2 [shape = 'u8[8192]{0}', space=vmem, size = 0x2000, scoped, tag = 'input window, operand 1']
    #allocation3 [shape = 's32[2]{0}', space=sflag, size = 0x8, scoped, tag = 'scoped memory for tpu_custom_call.1']
    #allocation4 [shape = 's32[2]{0}', space=sflag, size = 0x8, scoped, tag = 'scoped memory for tpu_custom_call.1']
    #allocation5 [shape = 'u8[8192]{0}', space=vmem, size = 0x2000, scoped, tag = 'input window, operand 2']
    #allocation6 [shape = 's32[2]{0}', space=sflag, size = 0x8, scoped, tag = 'scoped memory for tpu_custom_call.1']
    #allocation7 [shape = 'u8[16384]{0}', space=vmem, size = 0x4000, scoped, tag = 'input window, operand 3']
    #allocation8 [shape = 'u8[8192]{0}', space=vmem, size = 0x2000, scoped, tag = 'input window, operand 4']
    #allocation9 [shape = 'u8[512]{0}', space=vmem, size = 0x400, scoped, tag = 'input window, operand 5, single buffered']
    #allocation10 [shape = 's32[1]{0}', space=sflag, size = 0x4, scoped, tag = 'scoped memory for tpu_custom_call.1']
    #allocation11 [shape = 'u8[512]{0}', space=vmem, size = 0x400, scoped, tag = 'input window, operand 6, single buffered']
    #allocation12 [shape = 'u8[8192]{0}', space=vmem, size = 0x2000, scoped, tag = 'input window, operand 7, single buffered']
    #allocation13 [shape = 's32[1]{0}', space=sflag, size = 0x4, scoped, tag = 'scoped memory for tpu_custom_call.1']
    #allocation14 [shape = 'u8[8192]{0}', space=vmem, size = 0x2000, scoped, tag = 'input window, operand 8, single buffered']
    #allocation15 [shape = 'u8[8192]{0}', space=vmem, size = 0x2000, scoped, tag = 'input window, operand 10, single buffered']
    #allocation16 [shape = 's32[1]{0}', space=sflag, size = 0x4, scoped, tag = 'scoped memory for tpu_custom_call.1']
    #allocation17 [shape = 'u8[512]{0}', space=vmem, size = 0x400, scoped, tag = 'input window, operand 11, single buffered']
    #allocation18 [shape = 'u8[512]{0}', space=vmem, size = 0x400, scoped, tag = 'input window, operand 12, single buffered']
    #allocation19 [shape = 's32[1]{0}', space=sflag, size = 0x4, scoped, tag = 'scoped memory for tpu_custom_call.1']
    #allocation20 [shape = 'u8[8192]{0}', space=vmem, size = 0x2000, scoped, tag = 'input window, operand 14, single buffered']
    #allocation21 [shape = 'u8[8192]{0}', space=vmem, size = 0x2000, scoped, tag = 'input window, operand 15, single buffered']
    #allocation22 [shape = 's32[1]{0}', space=sflag, size = 0x4, scoped, tag = 'scoped memory for tpu_custom_call.1']
    #allocation23 [shape = 'u8[8192]{0}', space=vmem, size = 0x2000, scoped, tag = 'input window, operand 16, single buffered']
    #allocation24 [shape = 'u8[512]{0}', space=vmem, size = 0x400, scoped, tag = 'input window, operand 17, single buffered']
    #allocation25 [shape = 's32[1]{0}', space=sflag, size = 0x4, scoped, tag = 'scoped memory for tpu_custom_call.1']
    #allocation26 [shape = 'u8[8192]{0}', space=vmem, size = 0x2000, scoped, tag = 'output window, operand 0']
    #allocation27 [shape = 'u8[8192]{0}', space=vmem, size = 0x2000, scoped, tag = 'output window, operand 1']
    #allocation28 [shape = 's32[2]{0}', space=sflag, size = 0x8, scoped, tag = 'scoped memory for tpu_custom_call.1']
    %30 = vsyncpa [#allocation3], 0
    %s31 = scalar_lea.sflag [#allocation3], 1
    %32 = vsyncpa %s31, 0
    %33 = vsyncpa [#allocation6], 0
    %s34 = scalar_lea.sflag [#allocation6], 1
    %35 = vsyncpa %s34, 0
    %36 = vsyncpa [#allocation10], 0
    %37 = vsyncpa [#allocation13], 0
    %38 = vsyncpa [#allocation16], 0
    %39 = vsyncpa [#allocation19], 0
    %40 = vsyncpa [#allocation22], 0
    %41 = vsyncpa [#allocation25], 0
    %42 = vsyncpa [#allocation4], 0
    %s43 = scalar_lea.sflag [#allocation4], 1
    %44 = vsyncpa %s43, 0
    %45 = vsyncpa [#allocation28], 0
    %s46 = scalar_lea.sflag [#allocation28], 1
    %47 = vsyncpa %s46, 0
    loop: start=0, step=1, limit=4
    $region2: #{tpu_custom_call.1} parent=1 // loop_pre_header
      _
    $region3: #{tpu_custom_call.1} parent=1 // loop_header
      %s49 = sphi 0, %s53
      %p50 = scmp.ge.s32.totalorder %s49, 4
      %s59 = sphi 0, %s61
      %s62 = sphi 0, %s59
      %s63 = sphi 0, %s62
      %s79 = sphi 0, %s63
      %s85 = sphi 0, %s87
      %s88 = sphi 0, %s85
      %s89 = sphi 0, %s88
      %s105 = sphi 0, %s89
      %s111 = sphi 0, %s113
      %s114 = sphi 0, %s111
      %s115 = sphi 0, %s114
      %s131 = sphi 0, %s115
      %s137 = sphi 0, %s139
      %s140 = sphi 0, %s137
      %s141 = sphi 0, %s140
      %s157 = sphi 0, %s141
      %s163 = sphi 0, %s165
      %s166 = sphi 0, %s163
      %s167 = sphi 0, %s166
      %s183 = sphi 0, %s167
      %s187 = sphi 0, %s187
      %s189 = sphi 0, %s187
      %s190 = sphi 0, %s189
      %s204 = sphi 0, %s190
      %s208 = sphi 0, %s208
      %s210 = sphi 0, %s208
      %s211 = sphi 0, %s210
      %s225 = sphi 0, %s211
      %s229 = sphi 0, %s229
      %s231 = sphi 0, %s229
      %s232 = sphi 0, %s231
      %s246 = sphi 0, %s232
      %s250 = sphi 0, %s250
      %s252 = sphi 0, %s250
      %s253 = sphi 0, %s252
      %s267 = sphi 0, %s253
      %s271 = sphi 0, %s271
      %s273 = sphi 0, %s271
      %s274 = sphi 0, %s273
      %s288 = sphi 0, %s274
      %s292 = sphi 0, %s292
      %s294 = sphi 0, %s292
      %s295 = sphi 0, %s294
      %s309 = sphi 0, %s295
      %s313 = sphi 0, %s313
      %s315 = sphi 0, %s313
      %s316 = sphi 0, %s315
      %s330 = sphi 0, %s316
      %s334 = sphi 0, %s334
      %s336 = sphi 0, %s334
      %s337 = sphi 0, %s336
      %s351 = sphi 0, %s337
      %s355 = sphi 0, %s355
      %s357 = sphi 0, %s355
      %s358 = sphi 0, %s357
      %s372 = sphi 0, %s358
      %s376 = sphi 0, %s376
      %s378 = sphi 0, %s376
      %s379 = sphi 0, %s378
      %s393 = sphi 0, %s379
      %s397 = sphi 0, %s397
      %s399 = sphi 0, %s397
      %s400 = sphi 0, %s399
      %s414 = sphi 0, %s400
      %s418 = sphi 0, %s418
      %s420 = sphi 0, %s418
      %s421 = sphi 0, %s420
      %s435 = sphi 0, %s421
      %s439 = sphi 0, %s439
      %s441 = sphi 0, %s439
      %s442 = sphi 0, %s441
      %s456 = sphi 0, %s442
      %s460 = sphi 0, %s460
      %s462 = sphi 0, %s460
      %s463 = sphi 0, %s462
      %s477 = sphi 0, %s463
      %s481 = sphi 0, %s481
      %s483 = sphi 0, %s481
      %s484 = sphi 0, %s483
      %s498 = sphi 0, %s484
      %s502 = sphi 0, %s502
      %s504 = sphi 0, %s502
      %s505 = sphi 0, %s504
      %s519 = sphi 0, %s505
      %s523 = sphi 0, %s523
      %s525 = sphi 0, %s523
      %s526 = sphi 0, %s525
      %s540 = sphi 0, %s526
      %s544 = sphi 0, %s544
      %s546 = sphi 0, %s544
      %s547 = sphi 0, %s546
      %s561 = sphi 0, %s547
      %s567 = sphi 0, %s569
      %s570 = sphi 0, %s567
      %s571 = sphi 0, %s570
      %s587 = sphi 0, %s571
      %s593 = sphi 0, %s595
      %s596 = sphi 0, %s593
      %s597 = sphi 0, %s596
      %s613 = sphi 0, %s597
    $region4: #{tpu_custom_call.1} parent=1 // loop_header_branch
      %52 = sbr.rel (%p50) target = $region8
    $region5: #{tpu_custom_call.1} parent=1 // loop_body
      %s54 = ssub.s32 %s49, 1
      %s55 = ssub.s32 %s49, 2
      %s56 = sadd.s32 %s49, 1
      %s57 = ssub.s32 %s49, %s56
      %p58 = scmp.eq.s32.totalorder %s57, 0
      %s60 = sadd.s32 %s59, 1
      %s61 = scalar_select %p58, %s59, %s60
      %p64 = pneg %p58
      %p65 = scmp.eq.s32.totalorder %s49, 1
      %p66 = por %p64, %p65
      %p67 = scmp.ne.s32.totalorder %s59, %s62
      %p68 = scmp.eq.s32.totalorder %s49, 0
      %p69 = por %p67, %p68
      %p70 = scmp.ne.s32.totalorder %s59, %s62
      %p71 = scmp.eq.s32.totalorder %s54, 1
      %p72 = por %p70, %p71
      %p73 = scmp.ne.s32.totalorder %s62, %s63
      %p74 = scmp.eq.s32.totalorder %s54, 0
      %p75 = por %p73, %p74
      %p76 = scmp.ne.s32.totalorder %s62, %s63
      %p77 = scmp.eq.s32.totalorder %s55, 1
      %p78 = por %p76, %p77
      %p80 = scmp.ne.s32.totalorder %s63, %s79
      %p81 = scmp.eq.s32.totalorder %s55, 0
      %p82 = por %p80, %p81
      %s83 = ssub.s32 %s49, %s56
      %p84 = scmp.eq.s32.totalorder %s83, 0
      %s86 = sadd.s32 %s85, 1
      %s87 = scalar_select %p84, %s85, %s86
      %p90 = pneg %p84
      %p91 = scmp.eq.s32.totalorder %s49, 1
      %p92 = por %p90, %p91
      %p93 = scmp.ne.s32.totalorder %s85, %s88
      %p94 = scmp.eq.s32.totalorder %s49, 0
      %p95 = por %p93, %p94
      %p96 = scmp.ne.s32.totalorder %s85, %s88
      %p97 = scmp.eq.s32.totalorder %s54, 1
      %p98 = por %p96, %p97
      %p99 = scmp.ne.s32.totalorder %s88, %s89
      %p100 = scmp.eq.s32.totalorder %s54, 0
      %p101 = por %p99, %p100
      %p102 = scmp.ne.s32.totalorder %s88, %s89
      %p103 = scmp.eq.s32.totalorder %s55, 1
      %p104 = por %p102, %p103
      %p106 = scmp.ne.s32.totalorder %s89, %s105
      %p107 = scmp.eq.s32.totalorder %s55, 0
      %p108 = por %p106, %p107
      %s109 = ssub.s32 %s49, %s56
      %p110 = scmp.eq.s32.totalorder %s109, 0
      %s112 = sadd.s32 %s111, 1
      %s113 = scalar_select %p110, %s111, %s112
      %p116 = pneg %p110
      %p117 = scmp.eq.s32.totalorder %s49, 1
      %p118 = por %p116, %p117
      %p119 = scmp.ne.s32.totalorder %s111, %s114
      %p120 = scmp.eq.s32.totalorder %s49, 0
      %p121 = por %p119, %p120
      %p122 = scmp.ne.s32.totalorder %s111, %s114
      %p123 = scmp.eq.s32.totalorder %s54, 1
      %p124 = por %p122, %p123
      %p125 = scmp.ne.s32.totalorder %s114, %s115
      %p126 = scmp.eq.s32.totalorder %s54, 0
      %p127 = por %p125, %p126
      %p128 = scmp.ne.s32.totalorder %s114, %s115
      %p129 = scmp.eq.s32.totalorder %s55, 1
      %p130 = por %p128, %p129
      %p132 = scmp.ne.s32.totalorder %s115, %s131
      %p133 = scmp.eq.s32.totalorder %s55, 0
      %p134 = por %p132, %p133
      %s135 = ssub.s32 %s49, %s56
      %p136 = scmp.eq.s32.totalorder %s135, 0
      %s138 = sadd.s32 %s137, 1
      %s139 = scalar_select %p136, %s137, %s138
      %p142 = pneg %p136
      %p143 = scmp.eq.s32.totalorder %s49, 1
      %p144 = por %p142, %p143
      %p145 = scmp.ne.s32.totalorder %s137, %s140
      %p146 = scmp.eq.s32.totalorder %s49, 0
      %p147 = por %p145, %p146
      %p148 = scmp.ne.s32.totalorder %s137, %s140
      %p149 = scmp.eq.s32.totalorder %s54, 1
      %p150 = por %p148, %p149
      %p151 = scmp.ne.s32.totalorder %s140, %s141
      %p152 = scmp.eq.s32.totalorder %s54, 0
      %p153 = por %p151, %p152
      %p154 = scmp.ne.s32.totalorder %s140, %s141
      %p155 = scmp.eq.s32.totalorder %s55, 1
      %p156 = por %p154, %p155
      %p158 = scmp.ne.s32.totalorder %s141, %s157
      %p159 = scmp.eq.s32.totalorder %s55, 0
      %p160 = por %p158, %p159
      %s161 = ssub.s32 %s49, %s56
      %p162 = scmp.eq.s32.totalorder %s161, 0
      %s164 = sadd.s32 %s163, 1
      %s165 = scalar_select %p162, %s163, %s164
      %p168 = pneg %p162
      %p169 = scmp.eq.s32.totalorder %s49, 1
      %p170 = por %p168, %p169
      %p171 = scmp.ne.s32.totalorder %s163, %s166
      %p172 = scmp.eq.s32.totalorder %s49, 0
      %p173 = por %p171, %p172
      %p174 = scmp.ne.s32.totalorder %s163, %s166
      %p175 = scmp.eq.s32.totalorder %s54, 1
      %p176 = por %p174, %p175
      %p177 = scmp.ne.s32.totalorder %s166, %s167
      %p178 = scmp.eq.s32.totalorder %s54, 0
      %p179 = por %p177, %p178
      %p180 = scmp.ne.s32.totalorder %s166, %s167
      %p181 = scmp.eq.s32.totalorder %s55, 1
      %p182 = por %p180, %p181
      %p184 = scmp.ne.s32.totalorder %s167, %s183
      %p185 = scmp.eq.s32.totalorder %s55, 0
      %p186 = por %p184, %p185
      %s188 = sadd.s32 %s187, 1
      %p191 = scmp.eq.s32.totalorder %s49, 1
      %p192 = scmp.ne.s32.totalorder %s187, %s189
      %p193 = scmp.eq.s32.totalorder %s49, 0
      %p194 = por %p192, %p193
      %p195 = scmp.ne.s32.totalorder %s187, %s189
      %p196 = scmp.eq.s32.totalorder %s54, 1
      %p197 = por %p195, %p196
      %p198 = scmp.ne.s32.totalorder %s189, %s190
      %p199 = scmp.eq.s32.totalorder %s54, 0
      %p200 = por %p198, %p199
      %p201 = scmp.ne.s32.totalorder %s189, %s190
      %p202 = scmp.eq.s32.totalorder %s55, 1
      %p203 = por %p201, %p202
      %p205 = scmp.ne.s32.totalorder %s190, %s204
      %p206 = scmp.eq.s32.totalorder %s55, 0
      %p207 = por %p205, %p206
      %s209 = sadd.s32 %s208, 1
      %p212 = scmp.eq.s32.totalorder %s49, 1
      %p213 = scmp.ne.s32.totalorder %s208, %s210
      %p214 = scmp.eq.s32.totalorder %s49, 0
      %p215 = por %p213, %p214
      %p216 = scmp.ne.s32.totalorder %s208, %s210
      %p217 = scmp.eq.s32.totalorder %s54, 1
      %p218 = por %p216, %p217
      %p219 = scmp.ne.s32.totalorder %s210, %s211
      %p220 = scmp.eq.s32.totalorder %s54, 0
      %p221 = por %p219, %p220
      %p222 = scmp.ne.s32.totalorder %s210, %s211
      %p223 = scmp.eq.s32.totalorder %s55, 1
      %p224 = por %p222, %p223
      %p226 = scmp.ne.s32.totalorder %s211, %s225
      %p227 = scmp.eq.s32.totalorder %s55, 0
      %p228 = por %p226, %p227
      %s230 = sadd.s32 %s229, 1
      %p233 = scmp.eq.s32.totalorder %s49, 1
      %p234 = scmp.ne.s32.totalorder %s229, %s231
      %p235 = scmp.eq.s32.totalorder %s49, 0
      %p236 = por %p234, %p235
      %p237 = scmp.ne.s32.totalorder %s229, %s231
      %p238 = scmp.eq.s32.totalorder %s54, 1
      %p239 = por %p237, %p238
      %p240 = scmp.ne.s32.totalorder %s231, %s232
      %p241 = scmp.eq.s32.totalorder %s54, 0
      %p242 = por %p240, %p241
      %p243 = scmp.ne.s32.totalorder %s231, %s232
      %p244 = scmp.eq.s32.totalorder %s55, 1
      %p245 = por %p243, %p244
      %p247 = scmp.ne.s32.totalorder %s232, %s246
      %p248 = scmp.eq.s32.totalorder %s55, 0
      %p249 = por %p247, %p248
      %s251 = sadd.s32 %s250, 1
      %p254 = scmp.eq.s32.totalorder %s49, 1
      %p255 = scmp.ne.s32.totalorder %s250, %s252
      %p256 = scmp.eq.s32.totalorder %s49, 0
      %p257 = por %p255, %p256
      %p258 = scmp.ne.s32.totalorder %s250, %s252
      %p259 = scmp.eq.s32.totalorder %s54, 1
      %p260 = por %p258, %p259
      %p261 = scmp.ne.s32.totalorder %s252, %s253
      %p262 = scmp.eq.s32.totalorder %s54, 0
      %p263 = por %p261, %p262
      %p264 = scmp.ne.s32.totalorder %s252, %s253
      %p265 = scmp.eq.s32.totalorder %s55, 1
      %p266 = por %p264, %p265
      %p268 = scmp.ne.s32.totalorder %s253, %s267
      %p269 = scmp.eq.s32.totalorder %s55, 0
      %p270 = por %p268, %p269
      %s272 = sadd.s32 %s271, 1
      %p275 = scmp.eq.s32.totalorder %s49, 1
      %p276 = scmp.ne.s32.totalorder %s271, %s273
      %p277 = scmp.eq.s32.totalorder %s49, 0
      %p278 = por %p276, %p277
      %p279 = scmp.ne.s32.totalorder %s271, %s273
      %p280 = scmp.eq.s32.totalorder %s54, 1
      %p281 = por %p279, %p280
      %p282 = scmp.ne.s32.totalorder %s273, %s274
      %p283 = scmp.eq.s32.totalorder %s54, 0
      %p284 = por %p282, %p283
      %p285 = scmp.ne.s32.totalorder %s273, %s274
      %p286 = scmp.eq.s32.totalorder %s55, 1
      %p287 = por %p285, %p286
      %p289 = scmp.ne.s32.totalorder %s274, %s288
      %p290 = scmp.eq.s32.totalorder %s55, 0
      %p291 = por %p289, %p290
      %s293 = sadd.s32 %s292, 1
      %p296 = scmp.eq.s32.totalorder %s49, 1
      %p297 = scmp.ne.s32.totalorder %s292, %s294
      %p298 = scmp.eq.s32.totalorder %s49, 0
      %p299 = por %p297, %p298
      %p300 = scmp.ne.s32.totalorder %s292, %s294
      %p301 = scmp.eq.s32.totalorder %s54, 1
      %p302 = por %p300, %p301
      %p303 = scmp.ne.s32.totalorder %s294, %s295
      %p304 = scmp.eq.s32.totalorder %s54, 0
      %p305 = por %p303, %p304
      %p306 = scmp.ne.s32.totalorder %s294, %s295
      %p307 = scmp.eq.s32.totalorder %s55, 1
      %p308 = por %p306, %p307
      %p310 = scmp.ne.s32.totalorder %s295, %s309
      %p311 = scmp.eq.s32.totalorder %s55, 0
      %p312 = por %p310, %p311
      %s314 = sadd.s32 %s313, 1
      %p317 = scmp.eq.s32.totalorder %s49, 1
      %p318 = scmp.ne.s32.totalorder %s313, %s315
      %p319 = scmp.eq.s32.totalorder %s49, 0
      %p320 = por %p318, %p319
      %p321 = scmp.ne.s32.totalorder %s313, %s315
      %p322 = scmp.eq.s32.totalorder %s54, 1
      %p323 = por %p321, %p322
      %p324 = scmp.ne.s32.totalorder %s315, %s316
      %p325 = scmp.eq.s32.totalorder %s54, 0
      %p326 = por %p324, %p325
      %p327 = scmp.ne.s32.totalorder %s315, %s316
      %p328 = scmp.eq.s32.totalorder %s55, 1
      %p329 = por %p327, %p328
      %p331 = scmp.ne.s32.totalorder %s316, %s330
      %p332 = scmp.eq.s32.totalorder %s55, 0
      %p333 = por %p331, %p332
      %s335 = sadd.s32 %s334, 1
      %p338 = scmp.eq.s32.totalorder %s49, 1
      %p339 = scmp.ne.s32.totalorder %s334, %s336
      %p340 = scmp.eq.s32.totalorder %s49, 0
      %p341 = por %p339, %p340
      %p342 = scmp.ne.s32.totalorder %s334, %s336
      %p343 = scmp.eq.s32.totalorder %s54, 1
      %p344 = por %p342, %p343
      %p345 = scmp.ne.s32.totalorder %s336, %s337
      %p346 = scmp.eq.s32.totalorder %s54, 0
      %p347 = por %p345, %p346
      %p348 = scmp.ne.s32.totalorder %s336, %s337
      %p349 = scmp.eq.s32.totalorder %s55, 1
      %p350 = por %p348, %p349
      %p352 = scmp.ne.s32.totalorder %s337, %s351
      %p353 = scmp.eq.s32.totalorder %s55, 0
      %p354 = por %p352, %p353
      %s356 = sadd.s32 %s355, 1
      %p359 = scmp.eq.s32.totalorder %s49, 1
      %p360 = scmp.ne.s32.totalorder %s355, %s357
      %p361 = scmp.eq.s32.totalorder %s49, 0
      %p362 = por %p360, %p361
      %p363 = scmp.ne.s32.totalorder %s355, %s357
      %p364 = scmp.eq.s32.totalorder %s54, 1
      %p365 = por %p363, %p364
      %p366 = scmp.ne.s32.totalorder %s357, %s358
      %p367 = scmp.eq.s32.totalorder %s54, 0
      %p368 = por %p366, %p367
      %p369 = scmp.ne.s32.totalorder %s357, %s358
      %p370 = scmp.eq.s32.totalorder %s55, 1
      %p371 = por %p369, %p370
      %p373 = scmp.ne.s32.totalorder %s358, %s372
      %p374 = scmp.eq.s32.totalorder %s55, 0
      %p375 = por %p373, %p374
      %s377 = sadd.s32 %s376, 1
      %p380 = scmp.eq.s32.totalorder %s49, 1
      %p381 = scmp.ne.s32.totalorder %s376, %s378
      %p382 = scmp.eq.s32.totalorder %s49, 0
      %p383 = por %p381, %p382
      %p384 = scmp.ne.s32.totalorder %s376, %s378
      %p385 = scmp.eq.s32.totalorder %s54, 1
      %p386 = por %p384, %p385
      %p387 = scmp.ne.s32.totalorder %s378, %s379
      %p388 = scmp.eq.s32.totalorder %s54, 0
      %p389 = por %p387, %p388
      %p390 = scmp.ne.s32.totalorder %s378, %s379
      %p391 = scmp.eq.s32.totalorder %s55, 1
      %p392 = por %p390, %p391
      %p394 = scmp.ne.s32.totalorder %s379, %s393
      %p395 = scmp.eq.s32.totalorder %s55, 0
      %p396 = por %p394, %p395
      %s398 = sadd.s32 %s397, 1
      %p401 = scmp.eq.s32.totalorder %s49, 1
      %p402 = scmp.ne.s32.totalorder %s397, %s399
      %p403 = scmp.eq.s32.totalorder %s49, 0
      %p404 = por %p402, %p403
      %p405 = scmp.ne.s32.totalorder %s397, %s399
      %p406 = scmp.eq.s32.totalorder %s54, 1
      %p407 = por %p405, %p406
      %p408 = scmp.ne.s32.totalorder %s399, %s400
      %p409 = scmp.eq.s32.totalorder %s54, 0
      %p410 = por %p408, %p409
      %p411 = scmp.ne.s32.totalorder %s399, %s400
      %p412 = scmp.eq.s32.totalorder %s55, 1
      %p413 = por %p411, %p412
      %p415 = scmp.ne.s32.totalorder %s400, %s414
      %p416 = scmp.eq.s32.totalorder %s55, 0
      %p417 = por %p415, %p416
      %s419 = sadd.s32 %s418, 1
      %p422 = scmp.eq.s32.totalorder %s49, 1
      %p423 = scmp.ne.s32.totalorder %s418, %s420
      %p424 = scmp.eq.s32.totalorder %s49, 0
      %p425 = por %p423, %p424
      %p426 = scmp.ne.s32.totalorder %s418, %s420
      %p427 = scmp.eq.s32.totalorder %s54, 1
      %p428 = por %p426, %p427
      %p429 = scmp.ne.s32.totalorder %s420, %s421
      %p430 = scmp.eq.s32.totalorder %s54, 0
      %p431 = por %p429, %p430
      %p432 = scmp.ne.s32.totalorder %s420, %s421
      %p433 = scmp.eq.s32.totalorder %s55, 1
      %p434 = por %p432, %p433
      %p436 = scmp.ne.s32.totalorder %s421, %s435
      %p437 = scmp.eq.s32.totalorder %s55, 0
      %p438 = por %p436, %p437
      %s440 = sadd.s32 %s439, 1
      %p443 = scmp.eq.s32.totalorder %s49, 1
      %p444 = scmp.ne.s32.totalorder %s439, %s441
      %p445 = scmp.eq.s32.totalorder %s49, 0
      %p446 = por %p444, %p445
      %p447 = scmp.ne.s32.totalorder %s439, %s441
      %p448 = scmp.eq.s32.totalorder %s54, 1
      %p449 = por %p447, %p448
      %p450 = scmp.ne.s32.totalorder %s441, %s442
      %p451 = scmp.eq.s32.totalorder %s54, 0
      %p452 = por %p450, %p451
      %p453 = scmp.ne.s32.totalorder %s441, %s442
      %p454 = scmp.eq.s32.totalorder %s55, 1
      %p455 = por %p453, %p454
      %p457 = scmp.ne.s32.totalorder %s442, %s456
      %p458 = scmp.eq.s32.totalorder %s55, 0
      %p459 = por %p457, %p458
      %s461 = sadd.s32 %s460, 1
      %p464 = scmp.eq.s32.totalorder %s49, 1
      %p465 = scmp.ne.s32.totalorder %s460, %s462
      %p466 = scmp.eq.s32.totalorder %s49, 0
      %p467 = por %p465, %p466
      %p468 = scmp.ne.s32.totalorder %s460, %s462
      %p469 = scmp.eq.s32.totalorder %s54, 1
      %p470 = por %p468, %p469
      %p471 = scmp.ne.s32.totalorder %s462, %s463
      %p472 = scmp.eq.s32.totalorder %s54, 0
      %p473 = por %p471, %p472
      %p474 = scmp.ne.s32.totalorder %s462, %s463
      %p475 = scmp.eq.s32.totalorder %s55, 1
      %p476 = por %p474, %p475
      %p478 = scmp.ne.s32.totalorder %s463, %s477
      %p479 = scmp.eq.s32.totalorder %s55, 0
      %p480 = por %p478, %p479
      %s482 = sadd.s32 %s481, 1
      %p485 = scmp.eq.s32.totalorder %s49, 1
      %p486 = scmp.ne.s32.totalorder %s481, %s483
      %p487 = scmp.eq.s32.totalorder %s49, 0
      %p488 = por %p486, %p487
      %p489 = scmp.ne.s32.totalorder %s481, %s483
      %p490 = scmp.eq.s32.totalorder %s54, 1
      %p491 = por %p489, %p490
      %p492 = scmp.ne.s32.totalorder %s483, %s484
      %p493 = scmp.eq.s32.totalorder %s54, 0
      %p494 = por %p492, %p493
      %p495 = scmp.ne.s32.totalorder %s483, %s484
      %p496 = scmp.eq.s32.totalorder %s55, 1
      %p497 = por %p495, %p496
      %p499 = scmp.ne.s32.totalorder %s484, %s498
      %p500 = scmp.eq.s32.totalorder %s55, 0
      %p501 = por %p499, %p500
      %s503 = sadd.s32 %s502, 1
      %p506 = scmp.eq.s32.totalorder %s49, 1
      %p507 = scmp.ne.s32.totalorder %s502, %s504
      %p508 = scmp.eq.s32.totalorder %s49, 0
      %p509 = por %p507, %p508
      %p510 = scmp.ne.s32.totalorder %s502, %s504
      %p511 = scmp.eq.s32.totalorder %s54, 1
      %p512 = por %p510, %p511
      %p513 = scmp.ne.s32.totalorder %s504, %s505
      %p514 = scmp.eq.s32.totalorder %s54, 0
      %p515 = por %p513, %p514
      %p516 = scmp.ne.s32.totalorder %s504, %s505
      %p517 = scmp.eq.s32.totalorder %s55, 1
      %p518 = por %p516, %p517
      %p520 = scmp.ne.s32.totalorder %s505, %s519
      %p521 = scmp.eq.s32.totalorder %s55, 0
      %p522 = por %p520, %p521
      %s524 = sadd.s32 %s523, 1
      %p527 = scmp.eq.s32.totalorder %s49, 1
      %p528 = scmp.ne.s32.totalorder %s523, %s525
      %p529 = scmp.eq.s32.totalorder %s49, 0
      %p530 = por %p528, %p529
      %p531 = scmp.ne.s32.totalorder %s523, %s525
      %p532 = scmp.eq.s32.totalorder %s54, 1
      %p533 = por %p531, %p532
      %p534 = scmp.ne.s32.totalorder %s525, %s526
      %p535 = scmp.eq.s32.totalorder %s54, 0
      %p536 = por %p534, %p535
      %p537 = scmp.ne.s32.totalorder %s525, %s526
      %p538 = scmp.eq.s32.totalorder %s55, 1
      %p539 = por %p537, %p538
      %p541 = scmp.ne.s32.totalorder %s526, %s540
      %p542 = scmp.eq.s32.totalorder %s55, 0
      %p543 = por %p541, %p542
      %s545 = sadd.s32 %s544, 1
      %p548 = scmp.eq.s32.totalorder %s49, 1
      %p549 = scmp.ne.s32.totalorder %s544, %s546
      %p550 = scmp.eq.s32.totalorder %s49, 0
      %p551 = por %p549, %p550
      %p552 = scmp.ne.s32.totalorder %s544, %s546
      %p553 = scmp.eq.s32.totalorder %s54, 1
      %p554 = por %p552, %p553
      %p555 = scmp.ne.s32.totalorder %s546, %s547
      %p556 = scmp.eq.s32.totalorder %s54, 0
      %p557 = por %p555, %p556
      %p558 = scmp.ne.s32.totalorder %s546, %s547
      %p559 = scmp.eq.s32.totalorder %s55, 1
      %p560 = por %p558, %p559
      %p562 = scmp.ne.s32.totalorder %s547, %s561
      %p563 = scmp.eq.s32.totalorder %s55, 0
      %p564 = por %p562, %p563
      %s565 = ssub.s32 %s49, %s56
      %p566 = scmp.eq.s32.totalorder %s565, 0
      %s568 = sadd.s32 %s567, 1
      %s569 = scalar_select %p566, %s567, %s568
      %p572 = pneg %p566
      %p573 = scmp.eq.s32.totalorder %s49, 1
      %p574 = por %p572, %p573
      %p575 = scmp.ne.s32.totalorder %s567, %s570
      %p576 = scmp.eq.s32.totalorder %s49, 0
      %p577 = por %p575, %p576
      %p578 = scmp.ne.s32.totalorder %s567, %s570
      %p579 = scmp.eq.s32.totalorder %s54, 1
      %p580 = por %p578, %p579
      %p581 = scmp.ne.s32.totalorder %s570, %s571
      %p582 = scmp.eq.s32.totalorder %s54, 0
      %p583 = por %p581, %p582
      %p584 = scmp.ne.s32.totalorder %s570, %s571
      %p585 = scmp.eq.s32.totalorder %s55, 1
      %p586 = por %p584, %p585
      %p588 = scmp.ne.s32.totalorder %s571, %s587
      %p589 = scmp.eq.s32.totalorder %s55, 0
      %p590 = por %p588, %p589
      %s591 = ssub.s32 %s49, %s56
      %p592 = scmp.eq.s32.totalorder %s591, 0
      %s594 = sadd.s32 %s593, 1
      %s595 = scalar_select %p592, %s593, %s594
      %p598 = pneg %p592
      %p599 = scmp.eq.s32.totalorder %s49, 1
      %p600 = por %p598, %p599
      %p601 = scmp.ne.s32.totalorder %s593, %s596
      %p602 = scmp.eq.s32.totalorder %s49, 0
      %p603 = por %p601, %p602
      %p604 = scmp.ne.s32.totalorder %s593, %s596
      %p605 = scmp.eq.s32.totalorder %s54, 1
      %p606 = por %p604, %p605
      %p607 = scmp.ne.s32.totalorder %s596, %s597
      %p608 = scmp.eq.s32.totalorder %s54, 0
      %p609 = por %p607, %p608
      %p610 = scmp.ne.s32.totalorder %s596, %s597
      %p611 = scmp.eq.s32.totalorder %s55, 1
      %p612 = por %p610, %p611
      %p614 = scmp.ne.s32.totalorder %s597, %s613
      %p615 = scmp.eq.s32.totalorder %s55, 0
      %p616 = por %p614, %p615
      %p617 = scmp.le.s32.totalorder 1, %s49
      %p618 = scmp.lt.s32.totalorder %s49, 3
      %p619 = pnand %p617, %p618
      %p620 = pneg %p619
      // Predicated region
      $region9: #{tpu_custom_call.1} parent=5 // pred_check
        _
      $region10: #{tpu_custom_call.1} parent=5 // pred_check_branch
        %622 = sbr.rel (%p619) target = $region12
      $region11: #{tpu_custom_call.1} parent=5 // pred_region
        %s623 = ssub.s32 %s49, 1
        // Predicated region
        $region13: #{tpu_custom_call.1} parent=11 // pred_check
          %p624 = pneg %p200
        $region14: #{tpu_custom_call.1} parent=11 // pred_check_branch
          %626 = sbr.rel (%p624) target = $region16
        $region15: #{tpu_custom_call.1} parent=11 // pred_region
          %s628 = ssub.s32 16, 16
          %629 = vsyncadd [#allocation10], %s628
          %s631 = sshll.u32 [#allocation9], 4
          %s632 = int_to_ptr.vmem [resolvable:$true] %s631
          %634 = dma.hbm_to_vmem [thread:$0]  %s5, 16, %s632, [#allocation10]
        $region16: #{tpu_custom_call.1} parent=11 // pred_fallthru
          _
        // Predicated region
        $region17: #{tpu_custom_call.1} parent=11 // pred_check
          %p635 = pneg %p221
        $region18: #{tpu_custom_call.1} parent=11 // pred_check_branch
          %637 = sbr.rel (%p635) target = $region20
        $region19: #{tpu_custom_call.1} parent=11 // pred_region
          %s639 = ssub.s32 16, 16
          %640 = vsyncadd [#allocation10], %s639
          %s642 = sshll.u32 [#allocation11], 4
          %s643 = int_to_ptr.vmem [resolvable:$true] %s642
          %645 = dma.hbm_to_vmem [thread:$0]  %s6, 16, %s643, [#allocation10]
        $region20: #{tpu_custom_call.1} parent=11 // pred_fallthru
          _
        // Predicated region
        $region21: #{tpu_custom_call.1} parent=11 // pred_check
          %p646 = pneg %p242
        $region22: #{tpu_custom_call.1} parent=11 // pred_check_branch
          %648 = sbr.rel (%p646) target = $region24
        $region23: #{tpu_custom_call.1} parent=11 // pred_region
          %s650 = ssub.s32 256, 256
          %651 = vsyncadd [#allocation13], %s650
          %s652 = sshll.u32 [#allocation12], 4
          %s653 = int_to_ptr.vmem [resolvable:$true] %s652
          %658 = dma.hbm_to_vmem [thread:$0]  %s7, 256, %s653, [#allocation13], 64, 64, 4
        $region24: #{tpu_custom_call.1} parent=11 // pred_fallthru
          _
        // Predicated region
        $region25: #{tpu_custom_call.1} parent=11 // pred_check
          %p659 = pneg %p263
        $region26: #{tpu_custom_call.1} parent=11 // pred_check_branch
          %661 = sbr.rel (%p659) target = $region28
        $region27: #{tpu_custom_call.1} parent=11 // pred_region
          %s663 = ssub.s32 256, 256
          %664 = vsyncadd [#allocation13], %s663
          %s665 = sshll.u32 [#allocation14], 4
          %s666 = int_to_ptr.vmem [resolvable:$true] %s665
          %671 = dma.hbm_to_vmem [thread:$0]  %s8, 256, %s666, [#allocation13], 64, 64, 4
        $region28: #{tpu_custom_call.1} parent=11 // pred_fallthru
          _
        // Predicated region
        $region29: #{tpu_custom_call.1} parent=11 // pred_check
          %p672 = pneg %p284
        $region30: #{tpu_custom_call.1} parent=11 // pred_check_branch
          %674 = sbr.rel (%p672) target = $region32
        $region31: #{tpu_custom_call.1} parent=11 // pred_region
          _
        $region32: #{tpu_custom_call.1} parent=11 // pred_fallthru
          _
        // Predicated region
        $region33: #{tpu_custom_call.1} parent=11 // pred_check
          %p675 = pneg %p305
        $region34: #{tpu_custom_call.1} parent=11 // pred_check_branch
          %677 = sbr.rel (%p675) target = $region36
        $region35: #{tpu_custom_call.1} parent=11 // pred_region
          %s679 = ssub.s32 256, 256
          %680 = vsyncadd [#allocation16], %s679
          %s681 = sshll.u32 [#allocation15], 4
          %s682 = int_to_ptr.vmem [resolvable:$true] %s681
          %687 = dma.hbm_to_vmem [thread:$0]  %s10, 256, %s682, [#allocation16], 64, 64, 4
        $region36: #{tpu_custom_call.1} parent=11 // pred_fallthru
          _
        // Predicated region
        $region37: #{tpu_custom_call.1} parent=11 // pred_check
          %p688 = pneg %p326
        $region38: #{tpu_custom_call.1} parent=11 // pred_check_branch
          %690 = sbr.rel (%p688) target = $region40
        $region39: #{tpu_custom_call.1} parent=11 // pred_region
          %s692 = ssub.s32 16, 16
          %693 = vsyncadd [#allocation16], %s692
          %s695 = sshll.u32 [#allocation17], 4
          %s696 = int_to_ptr.vmem [resolvable:$true] %s695
          %698 = dma.hbm_to_vmem [thread:$0]  %s11, 16, %s696, [#allocation16]
        $region40: #{tpu_custom_call.1} parent=11 // pred_fallthru
          _
        // Predicated region
        $region41: #{tpu_custom_call.1} parent=11 // pred_check
          %p699 = pneg %p347
        $region42: #{tpu_custom_call.1} parent=11 // pred_check_branch
          %701 = sbr.rel (%p699) target = $region44
        $region43: #{tpu_custom_call.1} parent=11 // pred_region
          %s703 = ssub.s32 16, 16
          %704 = vsyncadd [#allocation19], %s703
          %s706 = sshll.u32 [#allocation18], 4
          %s707 = int_to_ptr.vmem [resolvable:$true] %s706
          %709 = dma.hbm_to_vmem [thread:$0]  %s12, 16, %s707, [#allocation19]
        $region44: #{tpu_custom_call.1} parent=11 // pred_fallthru
          _
        // Predicated region
        $region45: #{tpu_custom_call.1} parent=11 // pred_check
          %p710 = pneg %p368
        $region46: #{tpu_custom_call.1} parent=11 // pred_check_branch
          %712 = sbr.rel (%p710) target = $region48
        $region47: #{tpu_custom_call.1} parent=11 // pred_region
          _
        $region48: #{tpu_custom_call.1} parent=11 // pred_fallthru
          _
        // Predicated region
        $region49: #{tpu_custom_call.1} parent=11 // pred_check
          %p713 = pneg %p389
        $region50: #{tpu_custom_call.1} parent=11 // pred_check_branch
          %715 = sbr.rel (%p713) target = $region52
        $region51: #{tpu_custom_call.1} parent=11 // pred_region
          %s717 = ssub.s32 256, 256
          %718 = vsyncadd [#allocation19], %s717
          %s719 = sshll.u32 [#allocation20], 4
          %s720 = int_to_ptr.vmem [resolvable:$true] %s719
          %725 = dma.hbm_to_vmem [thread:$0]  %s14, 256, %s720, [#allocation19], 64, 64, 4
        $region52: #{tpu_custom_call.1} parent=11 // pred_fallthru
          _
        // Predicated region
        $region53: #{tpu_custom_call.1} parent=11 // pred_check
          %p726 = pneg %p410
        $region54: #{tpu_custom_call.1} parent=11 // pred_check_branch
          %728 = sbr.rel (%p726) target = $region56
        $region55: #{tpu_custom_call.1} parent=11 // pred_region
          %s730 = ssub.s32 256, 256
          %731 = vsyncadd [#allocation22], %s730
          %s732 = sshll.u32 [#allocation21], 4
          %s733 = int_to_ptr.vmem [resolvable:$true] %s732
          %738 = dma.hbm_to_vmem [thread:$0]  %s15, 256, %s733, [#allocation22], 64, 64, 4
        $region56: #{tpu_custom_call.1} parent=11 // pred_fallthru
          _
        // Predicated region
        $region57: #{tpu_custom_call.1} parent=11 // pred_check
          %p739 = pneg %p431
        $region58: #{tpu_custom_call.1} parent=11 // pred_check_branch
          %741 = sbr.rel (%p739) target = $region60
        $region59: #{tpu_custom_call.1} parent=11 // pred_region
          %s743 = ssub.s32 256, 256
          %744 = vsyncadd [#allocation22], %s743
          %s745 = sshll.u32 [#allocation23], 4
          %s746 = int_to_ptr.vmem [resolvable:$true] %s745
          %751 = dma.hbm_to_vmem [thread:$0]  %s16, 256, %s746, [#allocation22], 64, 64, 4
        $region60: #{tpu_custom_call.1} parent=11 // pred_fallthru
          _
        // Predicated region
        $region61: #{tpu_custom_call.1} parent=11 // pred_check
          %p752 = pneg %p452
        $region62: #{tpu_custom_call.1} parent=11 // pred_check_branch
          %754 = sbr.rel (%p752) target = $region64
        $region63: #{tpu_custom_call.1} parent=11 // pred_region
          %s756 = ssub.s32 16, 16
          %757 = vsyncadd [#allocation25], %s756
          %s759 = sshll.u32 [#allocation24], 4
          %s760 = int_to_ptr.vmem [resolvable:$true] %s759
          %762 = dma.hbm_to_vmem [thread:$0]  %s17, 16, %s760, [#allocation25]
        $region64: #{tpu_custom_call.1} parent=11 // pred_fallthru
          _
        // Predicated region
        $region65: #{tpu_custom_call.1} parent=11 // pred_check
          %p763 = pneg %p473
        $region66: #{tpu_custom_call.1} parent=11 // pred_check_branch
          %765 = sbr.rel (%p763) target = $region68
        $region67: #{tpu_custom_call.1} parent=11 // pred_region
          _
        $region68: #{tpu_custom_call.1} parent=11 // pred_fallthru
          _
        // Predicated region
        $region69: #{tpu_custom_call.1} parent=11 // pred_check
          %p766 = pneg %p494
        $region70: #{tpu_custom_call.1} parent=11 // pred_check_branch
          %768 = sbr.rel (%p766) target = $region72
        $region71: #{tpu_custom_call.1} parent=11 // pred_region
          _
        $region72: #{tpu_custom_call.1} parent=11 // pred_fallthru
          _
        // Predicated region
        $region73: #{tpu_custom_call.1} parent=11 // pred_check
          %p769 = pneg %p515
        $region74: #{tpu_custom_call.1} parent=11 // pred_check_branch
          %771 = sbr.rel (%p769) target = $region76
        $region75: #{tpu_custom_call.1} parent=11 // pred_region
          _
        $region76: #{tpu_custom_call.1} parent=11 // pred_fallthru
          _
        // Predicated region
        $region77: #{tpu_custom_call.1} parent=11 // pred_check
          %p772 = pneg %p536
        $region78: #{tpu_custom_call.1} parent=11 // pred_check_branch
          %774 = sbr.rel (%p772) target = $region80
        $region79: #{tpu_custom_call.1} parent=11 // pred_region
          _
        $region80: #{tpu_custom_call.1} parent=11 // pred_fallthru
          _
        // Predicated region
        $region81: #{tpu_custom_call.1} parent=11 // pred_check
          %p775 = pneg %p557
        $region82: #{tpu_custom_call.1} parent=11 // pred_check_branch
          %777 = sbr.rel (%p775) target = $region84
        $region83: #{tpu_custom_call.1} parent=11 // pred_region
          _
        $region84: #{tpu_custom_call.1} parent=11 // pred_fallthru
          _
      $region12: #{tpu_custom_call.1} parent=5 // pred_fallthru
        _
      %p778 = scmp.lt.s32.totalorder %s49, 2
      // Predicated region
      $region85: #{tpu_custom_call.1} parent=5 // pred_check
        %p779 = pneg %p778
      $region86: #{tpu_custom_call.1} parent=5 // pred_check_branch
        %781 = sbr.rel (%p779) target = $region88
      $region87: #{tpu_custom_call.1} parent=5 // pred_region
        // Predicated region
        $region89: #{tpu_custom_call.1} parent=87 // pred_check
          %p782 = pneg %p69
        $region90: #{tpu_custom_call.1} parent=87 // pred_check_branch
          %784 = sbr.rel (%p782) target = $region92
        $region91: #{tpu_custom_call.1} parent=87 // pred_region
          %p785 = scmp.lt.s32.totalorder %s49, 1
          %s786 = scalar_select %p785, %s49, 1
          %s787 = smul.addr %s786, 8
          %s788 = scalar_lea.vmem %s0, %s787
        $region92: #{tpu_custom_call.1} parent=87 // pred_fallthru
          _
        // Predicated region
        $region93: #{tpu_custom_call.1} parent=87 // pred_check
          %p789 = pneg %p95
        $region94: #{tpu_custom_call.1} parent=87 // pred_check_branch
          %791 = sbr.rel (%p789) target = $region96
        $region95: #{tpu_custom_call.1} parent=87 // pred_region
          %s792 = sand.u32 %s85, 1
          %s793 = scalar_lea.sflag [#allocation3], %s792
          %s794 = sand.u32 %s85, 1
          %s795 = smul.addr %s794, 8
          %s796 = scalar_lea.vmem [#allocation2], %s795
          %s798 = ssub.s32 128, 128
          %799 = vsyncadd %s793, %s798
          %s800 = smul.addr %s49, 128
          %s801 = scalar_lea.hbm %s1, %s800
          %s803 = sshll.u32 %s796, 4
          %s804 = int_to_ptr.vmem [resolvable:$true] %s803
          %806 = dma.hbm_to_vmem [thread:$0]  %s801, 128, %s804, %s793
        $region96: #{tpu_custom_call.1} parent=87 // pred_fallthru
          _
        // Predicated region
        $region97: #{tpu_custom_call.1} parent=87 // pred_check
          %p807 = pneg %p121
        $region98: #{tpu_custom_call.1} parent=87 // pred_check_branch
          %809 = sbr.rel (%p807) target = $region100
        $region99: #{tpu_custom_call.1} parent=87 // pred_region
          %s810 = sand.u32 %s49, 1
          %s811 = scalar_lea.sflag [#allocation6], %s810
          %s812 = sand.u32 %s111, 1
          %s813 = smul.addr %s812, 8
          %s814 = scalar_lea.vmem [#allocation5], %s813
          %s816 = ssub.s32 128, 128
          %817 = vsyncadd %s811, %s816
          %s818 = smul.addr %s49, 128
          %s819 = scalar_lea.hbm %s2, %s818
          %s821 = sshll.u32 %s814, 4
          %s822 = int_to_ptr.vmem [resolvable:$true] %s821
          %824 = dma.hbm_to_vmem [thread:$0]  %s819, 128, %s822, %s811
        $region100: #{tpu_custom_call.1} parent=87 // pred_fallthru
          _
        // Predicated region
        $region101: #{tpu_custom_call.1} parent=87 // pred_check
          %p825 = pneg %p147
        $region102: #{tpu_custom_call.1} parent=87 // pred_check_branch
          %827 = sbr.rel (%p825) target = $region104
        $region103: #{tpu_custom_call.1} parent=87 // pred_region
          %s828 = sand.u32 %s137, 1
          %s829 = sand.u32 %s137, 1
          %s830 = smul.addr %s829, 16
          %s831 = scalar_lea.vmem [#allocation7], %s830
          %s832 = smul.addr %s49, 8
          %s833 = scalar_lea.vmem %s3, %s832
          // Predicated region
          $region105: #{tpu_custom_call.1} parent=103 // pred_check
            _
          $region106: #{tpu_custom_call.1} parent=103 // pred_check_branch
            %835 = sbr.rel (0) target = $region108
          $region107: #{tpu_custom_call.1} parent=103 // pred_region
            // Predicated region
            $region109: #{tpu_custom_call.1} parent=107 // pred_check
              _
            $region110: #{tpu_custom_call.1} parent=107 // pred_check_branch
              %837 = sbr.rel (0) target = $region112
            $region111: #{tpu_custom_call.1} parent=107 // pred_region
              // Predicated region
              $region124: #{tpu_custom_call.1} parent=111 // pred_check
                _
              $region125: #{tpu_custom_call.1} parent=111 // pred_check_branch
                %854 = sbr.rel (0) target = $region127
              $region126: #{tpu_custom_call.1} parent=111 // pred_region
                loop: start=0, step=1, limit=1
                $region128: #{tpu_custom_call.1} parent=126 // loop_pre_header
                  _
                $region129: #{tpu_custom_call.1} parent=126 // loop_header
                  %s856 = sphi 0, %s860
                  %p857 = scmp.ge.s32.totalorder %s856, 1
                  %s861 = sphi %s833, %s833
                  %s862 = sphi %s831, %s831
                $region130: #{tpu_custom_call.1} parent=126 // loop_header_branch
                  %859 = sbr.rel (%p857) target = $region134
                $region131: #{tpu_custom_call.1} parent=126 // loop_body
                  %v863 = vld [vmem:[%s861] sm:$0xff]
                  %864 = vst [vmem:[%s862] sm:$0xff] %v863
                  %v865 = vld [vmem:[%s861 + $0x10] sm:$0xff]
                  %866 = vst [vmem:[%s862 + $0x8] sm:$0xff] %v865
                $region132: #{tpu_custom_call.1} parent=126 // loop_footer
                  %s860 = sadd.s32 1, %s856
                $region133: #{tpu_custom_call.1} parent=126 // loop_footer_branch
                  %855 = sbr.rel target = $region129
                $region134: #{tpu_custom_call.1} parent=126 // loop_exit
                  _
              $region127: #{tpu_custom_call.1} parent=111 // pred_fallthru
                _
              // Predicated region
              $region135: #{tpu_custom_call.1} parent=111 // pred_check
                _
              $region136: #{tpu_custom_call.1} parent=111 // pred_check_branch
                %868 = sbr.rel target = $region138
              $region137: #{tpu_custom_call.1} parent=111 // pred_region
                _
              $region138: #{tpu_custom_call.1} parent=111 // pred_fallthru
                _
            $region112: #{tpu_custom_call.1} parent=107 // pred_fallthru
              _
            // Predicated region
            $region113: #{tpu_custom_call.1} parent=107 // pred_check
              _
            $region114: #{tpu_custom_call.1} parent=107 // pred_check_branch
              %839 = sbr.rel target = $region116
            $region115: #{tpu_custom_call.1} parent=107 // pred_region
              loop: start=0, step=1, limit=1
              $region117: #{tpu_custom_call.1} parent=115 // loop_pre_header
                _
              $region118: #{tpu_custom_call.1} parent=115 // loop_header
                %s842 = sphi 0, %s846
                %p843 = scmp.ge.s32.totalorder %s842, 1
                %s847 = sphi %s833, %s833
                %s848 = sphi %s831, %s831
              $region119: #{tpu_custom_call.1} parent=115 // loop_header_branch
                %845 = sbr.rel (%p843) target = $region123
              $region120: #{tpu_custom_call.1} parent=115 // loop_body
                %v849 = vld [vmem:[%s847] sm:$0xff]
                %850 = vst [vmem:[%s848] sm:$0xff] %v849
                %v851 = vld [vmem:[%s847 + $0x10] sm:$0xff]
                %852 = vst [vmem:[%s848 + $0x8] sm:$0xff] %v851
              $region121: #{tpu_custom_call.1} parent=115 // loop_footer
                %s846 = sadd.s32 1, %s842
              $region122: #{tpu_custom_call.1} parent=115 // loop_footer_branch
                %841 = sbr.rel target = $region118
              $region123: #{tpu_custom_call.1} parent=115 // loop_exit
                _
            $region116: #{tpu_custom_call.1} parent=107 // pred_fallthru
              _
          $region108: #{tpu_custom_call.1} parent=103 // pred_fallthru
            _
          %869 = vnop
        $region104: #{tpu_custom_call.1} parent=87 // pred_fallthru
          _
        // Predicated region
        $region139: #{tpu_custom_call.1} parent=87 // pred_check
          %p870 = pneg %p173
        $region140: #{tpu_custom_call.1} parent=87 // pred_check_branch
          %872 = sbr.rel (%p870) target = $region142
        $region141: #{tpu_custom_call.1} parent=87 // pred_region
          %s873 = sand.u32 %s49, 1
          %s874 = scalar_lea.sflag [#allocation6], %s873
          %s875 = sand.u32 %s163, 1
          %s876 = smul.addr %s875, 8
          %s877 = scalar_lea.vmem [#allocation8], %s876
          %s879 = ssub.s32 128, 128
          %880 = vsyncadd %s874, %s879
          %s881 = smul.addr %s49, 128
          %s882 = scalar_lea.hbm %s4, %s881
          %s884 = sshll.u32 %s877, 4
          %s885 = int_to_ptr.vmem [resolvable:$true] %s884
          %887 = dma.hbm_to_vmem [thread:$0]  %s882, 128, %s885, %s874
        $region142: #{tpu_custom_call.1} parent=87 // pred_fallthru
          _
      $region88: #{tpu_custom_call.1} parent=5 // pred_fallthru
        _
      %p888 = scmp.le.s32.totalorder 1, %s49
      %p889 = scmp.lt.s32.totalorder %s49, 3
      %p890 = pnand %p888, %p889
      %p891 = pneg %p890
      // Predicated region
      $region143: #{tpu_custom_call.1} parent=5 // pred_check
        _
      $region144: #{tpu_custom_call.1} parent=5 // pred_check_branch
        %893 = sbr.rel (%p890) target = $region146
      $region145: #{tpu_custom_call.1} parent=5 // pred_region
        %s894 = ssub.s32 %s49, 1
        %s895 = sand.u32 %s88, 1
        %s896 = scalar_lea.sflag [#allocation3], %s895
        %s897 = sand.u32 %s88, 1
        %s898 = smul.addr %s897, 8
        %s899 = scalar_lea.vmem [#allocation2], %s898
        // Predicated region
        $region147: #{tpu_custom_call.1} parent=145 // pred_check
          %p900 = pneg %p101
        $region148: #{tpu_custom_call.1} parent=145 // pred_check_branch
          %902 = sbr.rel (%p900) target = $region150
        $region149: #{tpu_custom_call.1} parent=145 // pred_region
          %903 = dma.done %s896, 128
        $region150: #{tpu_custom_call.1} parent=145 // pred_fallthru
          _
        %s904 = sand.u32 %s54, 1
        %s905 = scalar_lea.sflag [#allocation6], %s904
        %s906 = sand.u32 %s114, 1
        %s907 = smul.addr %s906, 8
        %s908 = scalar_lea.vmem [#allocation5], %s907
        // Predicated region
        $region151: #{tpu_custom_call.1} parent=145 // pred_check
          %p909 = pneg %p127
        $region152: #{tpu_custom_call.1} parent=145 // pred_check_branch
          %911 = sbr.rel (%p909) target = $region154
        $region153: #{tpu_custom_call.1} parent=145 // pred_region
          %912 = dma.done %s905, 128
        $region154: #{tpu_custom_call.1} parent=145 // pred_fallthru
          _
        %s913 = sand.u32 %s140, 1
        %s914 = sand.u32 %s140, 1
        %s915 = smul.addr %s914, 16
        %s916 = scalar_lea.vmem [#allocation7], %s915
        // Predicated region
        $region155: #{tpu_custom_call.1} parent=145 // pred_check
          %p917 = pneg %p153
        $region156: #{tpu_custom_call.1} parent=145 // pred_check_branch
          %919 = sbr.rel (%p917) target = $region158
        $region157: #{tpu_custom_call.1} parent=145 // pred_region
          _
        $region158: #{tpu_custom_call.1} parent=145 // pred_fallthru
          _
        %s920 = sand.u32 %s54, 1
        %s921 = scalar_lea.sflag [#allocation6], %s920
        %s922 = sand.u32 %s166, 1
        %s923 = smul.addr %s922, 8
        %s924 = scalar_lea.vmem [#allocation8], %s923
        // Predicated region
        $region159: #{tpu_custom_call.1} parent=145 // pred_check
          %p925 = pneg %p179
        $region160: #{tpu_custom_call.1} parent=145 // pred_check_branch
          %927 = sbr.rel (%p925) target = $region162
        $region161: #{tpu_custom_call.1} parent=145 // pred_region
          %928 = dma.done %s921, 128
        $region162: #{tpu_custom_call.1} parent=145 // pred_fallthru
          _
        // Predicated region
        $region163: #{tpu_custom_call.1} parent=145 // pred_check
          %p929 = pneg %p200
        $region164: #{tpu_custom_call.1} parent=145 // pred_check_branch
          %931 = sbr.rel (%p929) target = $region166
        $region165: #{tpu_custom_call.1} parent=145 // pred_region
          %932 = dma.done [#allocation10], 16
        $region166: #{tpu_custom_call.1} parent=145 // pred_fallthru
          _
        // Predicated region
        $region167: #{tpu_custom_call.1} parent=145 // pred_check
          %p933 = pneg %p221
        $region168: #{tpu_custom_call.1} parent=145 // pred_check_branch
          %935 = sbr.rel (%p933) target = $region170
        $region169: #{tpu_custom_call.1} parent=145 // pred_region
          %936 = dma.done [#allocation10], 16
        $region170: #{tpu_custom_call.1} parent=145 // pred_fallthru
          _
        // Predicated region
        $region171: #{tpu_custom_call.1} parent=145 // pred_check
          %p937 = pneg %p242
        $region172: #{tpu_custom_call.1} parent=145 // pred_check_branch
          %939 = sbr.rel (%p937) target = $region174
        $region173: #{tpu_custom_call.1} parent=145 // pred_region
          %940 = dma.done [#allocation13], 256
        $region174: #{tpu_custom_call.1} parent=145 // pred_fallthru
          _
        // Predicated region
        $region175: #{tpu_custom_call.1} parent=145 // pred_check
          %p941 = pneg %p263
        $region176: #{tpu_custom_call.1} parent=145 // pred_check_branch
          %943 = sbr.rel (%p941) target = $region178
        $region177: #{tpu_custom_call.1} parent=145 // pred_region
          %944 = dma.done [#allocation13], 256
        $region178: #{tpu_custom_call.1} parent=145 // pred_fallthru
          _
        // Predicated region
        $region179: #{tpu_custom_call.1} parent=145 // pred_check
          %p945 = pneg %p305
        $region180: #{tpu_custom_call.1} parent=145 // pred_check_branch
          %947 = sbr.rel (%p945) target = $region182
        $region181: #{tpu_custom_call.1} parent=145 // pred_region
          %948 = dma.done [#allocation16], 256
        $region182: #{tpu_custom_call.1} parent=145 // pred_fallthru
          _
        // Predicated region
        $region183: #{tpu_custom_call.1} parent=145 // pred_check
          %p949 = pneg %p326
        $region184: #{tpu_custom_call.1} parent=145 // pred_check_branch
          %951 = sbr.rel (%p949) target = $region186
        $region185: #{tpu_custom_call.1} parent=145 // pred_region
          %952 = dma.done [#allocation16], 16
        $region186: #{tpu_custom_call.1} parent=145 // pred_fallthru
          _
        // Predicated region
        $region187: #{tpu_custom_call.1} parent=145 // pred_check
          %p953 = pneg %p347
        $region188: #{tpu_custom_call.1} parent=145 // pred_check_branch
          %955 = sbr.rel (%p953) target = $region190
        $region189: #{tpu_custom_call.1} parent=145 // pred_region
          %956 = dma.done [#allocation19], 16
        $region190: #{tpu_custom_call.1} parent=145 // pred_fallthru
          _
        // Predicated region
        $region191: #{tpu_custom_call.1} parent=145 // pred_check
          %p957 = pneg %p389
        $region192: #{tpu_custom_call.1} parent=145 // pred_check_branch
          %959 = sbr.rel (%p957) target = $region194
        $region193: #{tpu_custom_call.1} parent=145 // pred_region
          %960 = dma.done [#allocation19], 256
        $region194: #{tpu_custom_call.1} parent=145 // pred_fallthru
          _
        // Predicated region
        $region195: #{tpu_custom_call.1} parent=145 // pred_check
          %p961 = pneg %p410
        $region196: #{tpu_custom_call.1} parent=145 // pred_check_branch
          %963 = sbr.rel (%p961) target = $region198
        $region197: #{tpu_custom_call.1} parent=145 // pred_region
          %964 = dma.done [#allocation22], 256
        $region198: #{tpu_custom_call.1} parent=145 // pred_fallthru
          _
        // Predicated region
        $region199: #{tpu_custom_call.1} parent=145 // pred_check
          %p965 = pneg %p431
        $region200: #{tpu_custom_call.1} parent=145 // pred_check_branch
          %967 = sbr.rel (%p965) target = $region202
        $region201: #{tpu_custom_call.1} parent=145 // pred_region
          %968 = dma.done [#allocation22], 256
        $region202: #{tpu_custom_call.1} parent=145 // pred_fallthru
          _
        // Predicated region
        $region203: #{tpu_custom_call.1} parent=145 // pred_check
          %p969 = pneg %p452
        $region204: #{tpu_custom_call.1} parent=145 // pred_check_branch
          %971 = sbr.rel (%p969) target = $region206
        $region205: #{tpu_custom_call.1} parent=145 // pred_region
          %972 = dma.done [#allocation25], 16
        $region206: #{tpu_custom_call.1} parent=145 // pred_fallthru
          _
        %p973 = scmp.lt.s32.totalorder %s54, 1
        %s974 = scalar_select %p973, %s54, 1
        %s975 = smul.addr %s974, 8
        %s976 = scalar_lea.vmem %s0, %s975
        %p977 = pneg %p75
        %p978 = pneg %p72
        %s979 = sand.u32 %s88, 1
        %s980 = scalar_lea.sflag [#allocation3], %s979
        %s981 = sand.u32 %s88, 1
        %s982 = smul.addr %s981, 8
        %s983 = scalar_lea.vmem [#allocation2], %s982
        %p984 = pneg %p101
        %p985 = pneg %p98
        %s986 = sand.u32 %s54, 1
        %s987 = scalar_lea.sflag [#allocation6], %s986
        %s988 = sand.u32 %s114, 1
        %s989 = smul.addr %s988, 8
        %s990 = scalar_lea.vmem [#allocation5], %s989
        %p991 = pneg %p127
        %p992 = pneg %p124
        %s993 = sand.u32 %s140, 1
        %s994 = sand.u32 %s140, 1
        %s995 = smul.addr %s994, 16
        %s996 = scalar_lea.vmem [#allocation7], %s995
        %p997 = pneg %p153
        %p998 = pneg %p150
        %s999 = sand.u32 %s54, 1
        %s1000 = scalar_lea.sflag [#allocation6], %s999
        %s1001 = sand.u32 %s166, 1
        %s1002 = smul.addr %s1001, 8
        %s1003 = scalar_lea.vmem [#allocation8], %s1002
        %p1004 = pneg %p179
        %p1005 = pneg %p176
        %p1006 = pneg %p200
        %p1007 = pneg %p197
        %p1008 = pneg %p221
        %p1009 = pneg %p218
        %p1010 = pneg %p242
        %p1011 = pneg %p239
        %p1012 = pneg %p263
        %p1013 = pneg %p260
        %p1014 = pneg %p284
        %p1015 = pneg %p281
        %p1016 = pneg %p305
        %p1017 = pneg %p302
        %p1018 = pneg %p326
        %p1019 = pneg %p323
        %p1020 = pneg %p347
        %p1021 = pneg %p344
        %p1022 = pneg %p368
        %p1023 = pneg %p365
        %p1024 = pneg %p389
        %p1025 = pneg %p386
        %p1026 = pneg %p410
        %p1027 = pneg %p407
        %p1028 = pneg %p431
        %p1029 = pneg %p428
        %p1030 = pneg %p452
        %p1031 = pneg %p449
        %p1032 = pneg %p473
        %p1033 = pneg %p470
        %p1034 = pneg %p494
        %p1035 = pneg %p491
        %p1036 = pneg %p515
        %p1037 = pneg %p512
        %p1038 = pneg %p536
        %p1039 = pneg %p533
        %p1040 = pneg %p557
        %p1041 = pneg %p554
        %p1042 = pneg %p583
        %p1043 = pneg %p580
        %s1044 = sand.u32 %s570, 1
        %s1045 = scalar_lea.sflag [#allocation4], %s1044
        %s1046 = sand.u32 %s570, 1
        %s1047 = smul.addr %s1046, 8
        %s1048 = scalar_lea.vmem [#allocation26], %s1047
        %p1049 = pneg %p609
        %p1050 = pneg %p606
        %s1051 = sand.u32 %s596, 1
        %s1052 = scalar_lea.sflag [#allocation28], %s1051
        %s1053 = sand.u32 %s596, 1
        %s1054 = smul.addr %s1053, 8
        %s1055 = scalar_lea.vmem [#allocation27], %s1054
        %p1056 = scmp.lt.s32.totalorder %s54, 1
        %s1057 = scalar_select %p1056, %s54, 1
        %s1058 = smul.addr %s1057, 8
        %s1059 = scalar_lea.vmem %s0, %s1058
        %v1061 = vld [vmem:[%s1059] sm:$0xff]
        %v1062 = vld [vmem:[#allocation9] sm:$0x1]
        %v1063 = vld [vmem:[#allocation11] sm:$0x1]
        %vm1064 = vcmask 261120
        %v1065 = vsel %vm1064, %v1061, 0.0
        %1066 = vadd.xlane.f32.xlu0 %v1065
        %v1067 = vpop.xlane.xlu0 %1066
        %v1068 = vrcp.pop 32.0
        %v1069 = vmul.f32 %v1067, %v1068
        %v1070 = vsub.f32 %v1061, %v1069
        %v1071 = vmul.f32 %v1070, %v1070
        %v1072 = vsel %vm1064, %v1071, 0.0
        %1073 = vadd.xlane.f32.xlu0 %v1072
        %v1074 = vpop.xlane.xlu0 %1073
        %v1075 = vmul.f32 %v1074, %v1068
        %v1076 = vadd.f32 %v1075, 1e-05
        %v1077 = vrsqrt.pop %v1076
        %v1078 = vmul.f32 %v1070, %v1077
        %v1080 = vlaneseq
        %v1081 = vshrl.u32 %v1080, 7
        %v1082 = vsub.s32 0, %v1081
        %v1083 = vrot.slane %v1062, %v1082
        %v1085 = vmul.f32 %v1078, %v1083
        %v1087 = vlaneseq
        %v1088 = vshrl.u32 %v1087, 7
        %v1089 = vsub.s32 0, %v1088
        %v1090 = vrot.slane %v1063, %v1089
        %v1092 = vadd.f32 %v1085, %v1090
        %1093 = vst.msk [vmem:[%s1055] sm:$0xff] %vm1064, %v1092
        %v1094 = vld [vmem:[%s899] sm:$0xff]
        %v1095 = vld [vmem:[%s908] sm:$0xff]
        %vm1096 = vcmp.gt.f32.partialorder %v1095, 0.0
        %v1097 = vsel %vm1096, -1e+30, 0.0
        %1099 = vrot.lane.b32.xlu0 %v1097, 8
        %v1100 = vpop.permute.xlu0 %1099
        %vm1102 = vcmask 64512
        %v1103 = vsel %vm1102, %v1097, %v1100
        %v1104 = vld [vmem:[#allocation12] sm:$0xf]
        %v1105 = vld [vmem:[#allocation12 + $0x4] sm:$0xf]
        %v1106 = vld [vmem:[#allocation12 + $0x8] sm:$0xf]
        %v1107 = vld [vmem:[#allocation12 + $0xc] sm:$0xf]
        %v1108 = vld [vmem:[#allocation14] sm:$0xf]
        %v1109 = vld [vmem:[#allocation14 + $0x4] sm:$0xf]
        %v1110 = vld [vmem:[#allocation14 + $0x8] sm:$0xf]
        %v1111 = vld [vmem:[#allocation14 + $0xc] sm:$0xf]
        %v1112 = vld [vmem:[%s9] sm:$0xf]
        %v1113 = vld [vmem:[%s9 + $0x4] sm:$0xf]
        %v1114 = vld [vmem:[%s9 + $0x8] sm:$0xf]
        %v1115 = vld [vmem:[%s9 + $0xc] sm:$0xf]
        %v1116 = vpack.c.bf16 %v1092, %v1092
        %v1117 = vpack.c.bf16 %v1092, %v1094
        %v1122 = vunpack.c.l.b16 %v1104
        %v1123 = vunpack.c.l.b16 %v1105
        %v1124 = vunpack.c.l.b16 %v1106
        %v1125 = vunpack.c.l.b16 %v1107
        %v1126 = vpack.c.b16 %v1123, %v1122
        %v1127 = vpack.c.b16 %v1125, %v1124
        %v1131 = vsel %vm1064, %v1116, 0
        %1133 = vmatprep.subr.bf16.mxu0 0
        %1134 = vmatpush1.bf16.msra.mxu0 %v1126
        %1135 = vmatprep.subr.bf16.mxu0 0
        %1136 = vmatpush1.bf16.msra.mxu0 %v1127
        %1137 = vmatprep.subr.bf16.mxu0 0
        %1138 = vmatpush1.bf16.msra.mxu0 0
        %1139 = vmatprep.subr.bf16.mxu0 0
        %1140 = vmatpush1.bf16.msra.mxu0 0
        %1141 = vmatprep.subr.bf16.mxu0 0
        %1142 = vmatpush1.bf16.msra.mxu0 0
        %1143 = vmatprep.subr.bf16.mxu0 0
        %1144 = vmatpush1.bf16.msra.mxu0 0
        %1145 = vmatprep.subr.bf16.mxu0 0
        %1146 = vmatpush1.bf16.msra.mxu0 0
        %1147 = vmatprep.subr.bf16.mxu0 0
        %1148 = vmatpush1.bf16.msra.mxu0 0
        %1149 = vmatprep.subr.bf16.mxu0 0
        %1150 = vmatpush1.bf16.msra.mxu0 0
        %1151 = vmatprep.subr.bf16.mxu0 0
        %1152 = vmatpush1.bf16.msra.mxu0 0
        %1153 = vmatprep.subr.bf16.mxu0 0
        %1154 = vmatpush1.bf16.msra.mxu0 0
        %1155 = vmatprep.subr.bf16.mxu0 0
        %1156 = vmatpush1.bf16.msra.mxu0 0
        %1157 = vmatprep.subr.bf16.mxu0 0
        %1158 = vmatpush1.bf16.msra.mxu0 0
        %1159 = vmatprep.subr.bf16.mxu0 0
        %1160 = vmatpush1.bf16.msra.mxu0 0
        %1161 = vmatprep.subr.bf16.mxu0 0
        %1162 = vmatpush1.bf16.msra.mxu0 0
        %1163 = vmatprep.subr.bf16.mxu0 0
        %1164 = vmatpush1.bf16.msra.mxu0 0
        %1165 = vmatprep.mubr.bf16.mxu0 0
        %1166 = vmatmul.mubr.bf16.gmra.mrb[0].mxu0 %v1131
        %v1167 = vpop.f32.mrb[0].mxu0
        %v1168 = vadd.f32 0.0, %v1167
        %v1169 = vpop.f32.mrb[0].mxu0
        %v1170 = vpop.f32.mrb[0].mxu0
        %v1171 = vpop.f32.mrb[0].mxu0
        %1172 = vdwg.mxu0
        %v1177 = vunpack.c.l.b16 %v1108
        %v1178 = vunpack.c.l.b16 %v1109
        %v1179 = vunpack.c.l.b16 %v1110
        %v1180 = vunpack.c.l.b16 %v1111
        %v1181 = vpack.c.b16 %v1178, %v1177
        %v1182 = vpack.c.b16 %v1180, %v1179
        %v1186 = vsel %vm1064, %v1117, 0
        %1188 = vmatprep.subr.bf16.mxu0 0
        %1189 = vmatpush1.bf16.msra.mxu0 %v1181
        %1190 = vmatprep.subr.bf16.mxu0 0
        %1191 = vmatpush1.bf16.msra.mxu0 %v1182
        %1192 = vmatprep.subr.bf16.mxu0 0
        %1193 = vmatpush1.bf16.msra.mxu0 0
        %1194 = vmatprep.subr.bf16.mxu0 0
        %1195 = vmatpush1.bf16.msra.mxu0 0
        %1196 = vmatprep.subr.bf16.mxu0 0
        %1197 = vmatpush1.bf16.msra.mxu0 0
        %1198 = vmatprep.subr.bf16.mxu0 0
        %1199 = vmatpush1.bf16.msra.mxu0 0
        %1200 = vmatprep.subr.bf16.mxu0 0
        %1201 = vmatpush1.bf16.msra.mxu0 0
        %1202 = vmatprep.subr.bf16.mxu0 0
        %1203 = vmatpush1.bf16.msra.mxu0 0
        %1204 = vmatprep.subr.bf16.mxu0 0
        %1205 = vmatpush1.bf16.msra.mxu0 0
        %1206 = vmatprep.subr.bf16.mxu0 0
        %1207 = vmatpush1.bf16.msra.mxu0 0
        %1208 = vmatprep.subr.bf16.mxu0 0
        %1209 = vmatpush1.bf16.msra.mxu0 0
        %1210 = vmatprep.subr.bf16.mxu0 0
        %1211 = vmatpush1.bf16.msra.mxu0 0
        %1212 = vmatprep.subr.bf16.mxu0 0
        %1213 = vmatpush1.bf16.msra.mxu0 0
        %1214 = vmatprep.subr.bf16.mxu0 0
        %1215 = vmatpush1.bf16.msra.mxu0 0
        %1216 = vmatprep.subr.bf16.mxu0 0
        %1217 = vmatpush1.bf16.msra.mxu0 0
        %1218 = vmatprep.subr.bf16.mxu0 0
        %1219 = vmatpush1.bf16.msra.mxu0 0
        %1220 = vmatprep.mubr.bf16.mxu0 0
        %1221 = vmatmul.mubr.bf16.gmra.mrb[0].mxu0 %v1186
        %v1222 = vpop.f32.mrb[0].mxu0
        %v1223 = vadd.f32 0.0, %v1222
        %v1224 = vpop.f32.mrb[0].mxu0
        %v1225 = vpop.f32.mrb[0].mxu0
        %v1226 = vadd.f32 0.0, %v1225
        %v1227 = vpop.f32.mrb[0].mxu0
        %1228 = vdwg.mxu0
        %v1233 = vunpack.c.l.b16 %v1112
        %v1234 = vunpack.c.l.b16 %v1113
        %v1235 = vunpack.c.l.b16 %v1114
        %v1236 = vunpack.c.l.b16 %v1115
        %v1237 = vpack.c.b16 %v1234, %v1233
        %v1238 = vpack.c.b16 %v1236, %v1235
        %1241 = vmatprep.subr.bf16.mxu0 0
        %1242 = vmatpush1.bf16.msra.mxu0 %v1237
        %1243 = vmatprep.subr.bf16.mxu0 0
        %1244 = vmatpush1.bf16.msra.mxu0 %v1238
        %1245 = vmatprep.subr.bf16.mxu0 0
        %1246 = vmatpush1.bf16.msra.mxu0 0
        %1247 = vmatprep.subr.bf16.mxu0 0
        %1248 = vmatpush1.bf16.msra.mxu0 0
        %1249 = vmatprep.subr.bf16.mxu0 0
        %1250 = vmatpush1.bf16.msra.mxu0 0
        %1251 = vmatprep.subr.bf16.mxu0 0
        %1252 = vmatpush1.bf16.msra.mxu0 0
        %1253 = vmatprep.subr.bf16.mxu0 0
        %1254 = vmatpush1.bf16.msra.mxu0 0
        %1255 = vmatprep.subr.bf16.mxu0 0
        %1256 = vmatpush1.bf16.msra.mxu0 0
        %1257 = vmatprep.subr.bf16.mxu0 0
        %1258 = vmatpush1.bf16.msra.mxu0 0
        %1259 = vmatprep.subr.bf16.mxu0 0
        %1260 = vmatpush1.bf16.msra.mxu0 0
        %1261 = vmatprep.subr.bf16.mxu0 0
        %1262 = vmatpush1.bf16.msra.mxu0 0
        %1263 = vmatprep.subr.bf16.mxu0 0
        %1264 = vmatpush1.bf16.msra.mxu0 0
        %1265 = vmatprep.subr.bf16.mxu0 0
        %1266 = vmatpush1.bf16.msra.mxu0 0
        %1267 = vmatprep.subr.bf16.mxu0 0
        %1268 = vmatpush1.bf16.msra.mxu0 0
        %1269 = vmatprep.subr.bf16.mxu0 0
        %1270 = vmatpush1.bf16.msra.mxu0 0
        %1271 = vmatprep.subr.bf16.mxu0 0
        %1272 = vmatpush1.bf16.msra.mxu0 0
        %1273 = vmatprep.mubr.bf16.mxu0 0
        %1274 = vmatmul.mubr.bf16.gmra.mrb[0].mxu0 %v1186
        %v1275 = vpop.f32.mrb[0].mxu0
        %v1276 = vadd.f32 0.0, %v1275
        %v1277 = vpop.f32.mrb[0].mxu0
        %v1278 = vpop.f32.mrb[0].mxu0
        %v1279 = vadd.f32 0.0, %v1278
        %v1280 = vpop.f32.mrb[0].mxu0
        %1281 = vdwg.mxu0
        %v1282 = vpack.c.bf16 %v1168, %v1168
        %v1283 = vpack.c.bf16 %v1226, %v1223
        %v1284 = vpack.c.bf16 %v1279, %v1276
        %v1286 = vsel %vm1102, %v1282, 0
        %v1289 = vsel %vm1102, %v1283, 0
        %1291 = vmatprep.subr.bf16.mxu0 0
        %1292 = vmatpush1.bf16.xpose.msra.mxu0 %v1289
        %1293 = vmatprep.subr.bf16.mxu0 0
        %1294 = vmatpush1.bf16.xpose.msra.mxu0 0
        %1295 = vmatprep.subr.bf16.mxu0 0
        %1296 = vmatpush1.bf16.xpose.msra.mxu0 0
        %1297 = vmatprep.subr.bf16.mxu0 0
        %1298 = vmatpush1.bf16.xpose.msra.mxu0 0
        %1299 = vmatprep.subr.bf16.mxu0 0
        %1300 = vmatpush1.bf16.xpose.msra.mxu0 0
        %1301 = vmatprep.subr.bf16.mxu0 0
        %1302 = vmatpush1.bf16.xpose.msra.mxu0 0
        %1303 = vmatprep.subr.bf16.mxu0 0
        %1304 = vmatpush1.bf16.xpose.msra.mxu0 0
        %1305 = vmatprep.subr.bf16.mxu0 0
        %1306 = vmatpush1.bf16.xpose.msra.mxu0 0
        %1307 = vmatprep.subr.bf16.mxu0 0
        %1308 = vmatpush1.bf16.xpose.msra.mxu0 0
        %1309 = vmatprep.subr.bf16.mxu0 0
        %1310 = vmatpush1.bf16.xpose.msra.mxu0 0
        %1311 = vmatprep.subr.bf16.mxu0 0
        %1312 = vmatpush1.bf16.xpose.msra.mxu0 0
        %1313 = vmatprep.subr.bf16.mxu0 0
        %1314 = vmatpush1.bf16.xpose.msra.mxu0 0
        %1315 = vmatprep.subr.bf16.mxu0 0
        %1316 = vmatpush1.bf16.xpose.msra.mxu0 0
        %1317 = vmatprep.subr.bf16.mxu0 0
        %1318 = vmatpush1.bf16.xpose.msra.mxu0 0
        %1319 = vmatprep.subr.bf16.mxu0 0
        %1320 = vmatpush1.bf16.xpose.msra.mxu0 0
        %1321 = vmatprep.subr.bf16.mxu0 0
        %1322 = vmatpush1.bf16.xpose.msra.mxu0 0
        %1323 = vmatprep.mubr.bf16.mxu0 0
        %1324 = vmatmul.mubr.bf16.gmra.mrb[0].mxu0 %v1286
        %v1325 = vpop.f32.mrb[0].mxu0
        %v1326 = vadd.f32 0.0, %v1325
        %v1327 = vpop.f32.mrb[0].mxu0
        %v1328 = vpop.f32.mrb[0].mxu0
        %v1329 = vpop.f32.mrb[0].mxu0
        %1330 = vdwg.mxu0
        %v1331 = vmul.f32 %v1326, 0.35355338
        %v1332 = vadd.f32 %v1331, %v1103
        %vm1333 = vcmask 130048
        %v1334 = vsel %vm1333, %v1332, -inf
        %1335 = vmax.xlane.f32.xlu0 %v1334
        %v1336 = vpop.xlane.xlu0 %1335
        %v1337 = vsub.f32 %v1332, %v1336
        %v1338 = vmul.f32 %v1337, 1.442695
        %v1339 = vpow.pop %v1338
        %v1340 = vsel %vm1333, %v1339, 0.0
        %1341 = vadd.xlane.f32.xlu0 %v1340
        %v1342 = vpop.xlane.xlu0 %1341
        %v1343 = vrcp.pop %v1342
        %v1344 = vmul.f32 %v1339, %v1343
        %v1345 = vpack.c.bf16 %v1344, %v1344
        %v1347 = vsel %vm1333, %v1345, 0
        %1349 = vmatprep.subr.bf16.mxu0 0
        %1350 = vmatpush1.bf16.msra.mxu0 %v1284
        %1351 = vmatprep.subr.bf16.mxu0 0
        %1352 = vmatpush1.bf16.msra.mxu0 0
        %1353 = vmatprep.subr.bf16.mxu0 0
        %1354 = vmatpush1.bf16.msra.mxu0 0
        %1355 = vmatprep.subr.bf16.mxu0 0
        %1356 = vmatpush1.bf16.msra.mxu0 0
        %1357 = vmatprep.subr.bf16.mxu0 0
        %1358 = vmatpush1.bf16.msra.mxu0 0
        %1359 = vmatprep.subr.bf16.mxu0 0
        %1360 = vmatpush1.bf16.msra.mxu0 0
        %1361 = vmatprep.subr.bf16.mxu0 0
        %1362 = vmatpush1.bf16.msra.mxu0 0
        %1363 = vmatprep.subr.bf16.mxu0 0
        %1364 = vmatpush1.bf16.msra.mxu0 0
        %1365 = vmatprep.subr.bf16.mxu0 0
        %1366 = vmatpush1.bf16.msra.mxu0 0
        %1367 = vmatprep.subr.bf16.mxu0 0
        %1368 = vmatpush1.bf16.msra.mxu0 0
        %1369 = vmatprep.subr.bf16.mxu0 0
        %1370 = vmatpush1.bf16.msra.mxu0 0
        %1371 = vmatprep.subr.bf16.mxu0 0
        %1372 = vmatpush1.bf16.msra.mxu0 0
        %1373 = vmatprep.subr.bf16.mxu0 0
        %1374 = vmatpush1.bf16.msra.mxu0 0
        %1375 = vmatprep.subr.bf16.mxu0 0
        %1376 = vmatpush1.bf16.msra.mxu0 0
        %1377 = vmatprep.subr.bf16.mxu0 0
        %1378 = vmatpush1.bf16.msra.mxu0 0
        %1379 = vmatprep.subr.bf16.mxu0 0
        %1380 = vmatpush1.bf16.msra.mxu0 0
        %1381 = vmatprep.mubr.bf16.mxu0 0
        %1382 = vmatmul.mubr.bf16.gmra.mrb[0].mxu0 %v1347
        %v1383 = vpop.f32.mrb[0].mxu0
        %v1384 = vadd.f32 0.0, %v1383
        %v1385 = vpop.f32.mrb[0].mxu0
        %v1386 = vpop.f32.mrb[0].mxu0
        %v1387 = vpop.f32.mrb[0].mxu0
        %1388 = vdwg.mxu0
        %v1389 = vpack.c.bf16 %v1384, %v1384
        %v1390 = vld [vmem:[#allocation15] sm:$0xf]
        %1392 = vrot.lane.b32.xlu0 %v1282, 120
        %v1393 = vpop.permute.xlu0 %1392
        %1395 = vrot.lane.b32.xlu0 %v1283, 120
        %v1396 = vpop.permute.xlu0 %1395
        %v1398 = vsel %vm1102, %v1393, 0
        %v1401 = vsel %vm1102, %v1396, 0
        %1403 = vmatprep.subr.bf16.mxu0 0
        %1404 = vmatpush1.bf16.xpose.msra.mxu0 %v1401
        %1405 = vmatprep.subr.bf16.mxu0 0
        %1406 = vmatpush1.bf16.xpose.msra.mxu0 0
        %1407 = vmatprep.subr.bf16.mxu0 0
        %1408 = vmatpush1.bf16.xpose.msra.mxu0 0
        %1409 = vmatprep.subr.bf16.mxu0 0
        %1410 = vmatpush1.bf16.xpose.msra.mxu0 0
        %1411 = vmatprep.subr.bf16.mxu0 0
        %1412 = vmatpush1.bf16.xpose.msra.mxu0 0
        %1413 = vmatprep.subr.bf16.mxu0 0
        %1414 = vmatpush1.bf16.xpose.msra.mxu0 0
        %1415 = vmatprep.subr.bf16.mxu0 0
        %1416 = vmatpush1.bf16.xpose.msra.mxu0 0
        %1417 = vmatprep.subr.bf16.mxu0 0
        %1418 = vmatpush1.bf16.xpose.msra.mxu0 0
        %1419 = vmatprep.subr.bf16.mxu0 0
        %1420 = vmatpush1.bf16.xpose.msra.mxu0 0
        %1421 = vmatprep.subr.bf16.mxu0 0
        %1422 = vmatpush1.bf16.xpose.msra.mxu0 0
        %1423 = vmatprep.subr.bf16.mxu0 0
        %1424 = vmatpush1.bf16.xpose.msra.mxu0 0
        %1425 = vmatprep.subr.bf16.mxu0 0
        %1426 = vmatpush1.bf16.xpose.msra.mxu0 0
        %1427 = vmatprep.subr.bf16.mxu0 0
        %1428 = vmatpush1.bf16.xpose.msra.mxu0 0
        %1429 = vmatprep.subr.bf16.mxu0 0
        %1430 = vmatpush1.bf16.xpose.msra.mxu0 0
        %1431 = vmatprep.subr.bf16.mxu0 0
        %1432 = vmatpush1.bf16.xpose.msra.mxu0 0
        %1433 = vmatprep.subr.bf16.mxu0 0
        %1434 = vmatpush1.bf16.xpose.msra.mxu0 0
        %1435 = vmatprep.mubr.bf16.mxu0 0
        %1436 = vmatmul.mubr.bf16.gmra.mrb[0].mxu0 %v1398
        %v1437 = vpop.f32.mrb[0].mxu0
        %v1438 = vadd.f32 0.0, %v1437
        %v1439 = vpop.f32.mrb[0].mxu0
        %v1440 = vpop.f32.mrb[0].mxu0
        %v1441 = vpop.f32.mrb[0].mxu0
        %1442 = vdwg.mxu0
        %v1443 = vmul.f32 %v1438, 0.35355338
        %v1444 = vadd.f32 %v1443, %v1103
        %v1445 = vsel %vm1333, %v1444, -inf
        %1446 = vmax.xlane.f32.xlu0 %v1445
        %v1447 = vpop.xlane.xlu0 %1446
        %v1448 = vsub.f32 %v1444, %v1447
        %v1449 = vmul.f32 %v1448, 1.442695
        %v1450 = vpow.pop %v1449
        %v1451 = vsel %vm1333, %v1450, 0.0
        %1452 = vadd.xlane.f32.xlu0 %v1451
        %v1453 = vpop.xlane.xlu0 %1452
        %v1454 = vrcp.pop %v1453
        %v1455 = vmul.f32 %v1450, %v1454
        %v1456 = vpack.c.bf16 %v1455, %v1455
        %1458 = vrot.lane.b32.xlu0 %v1284, 120
        %v1459 = vpop.permute.xlu0 %1458
        %v1462 = vsel %vm1333, %v1456, 0
        %1464 = vmatprep.subr.bf16.mxu0 0
        %1465 = vmatpush1.bf16.msra.mxu0 %v1459
        %1466 = vmatprep.subr.bf16.mxu0 0
        %1467 = vmatpush1.bf16.msra.mxu0 0
        %1468 = vmatprep.subr.bf16.mxu0 0
        %1469 = vmatpush1.bf16.msra.mxu0 0
        %1470 = vmatprep.subr.bf16.mxu0 0
        %1471 = vmatpush1.bf16.msra.mxu0 0
        %1472 = vmatprep.subr.bf16.mxu0 0
        %1473 = vmatpush1.bf16.msra.mxu0 0
        %1474 = vmatprep.subr.bf16.mxu0 0
        %1475 = vmatpush1.bf16.msra.mxu0 0
        %1476 = vmatprep.subr.bf16.mxu0 0
        %1477 = vmatpush1.bf16.msra.mxu0 0
        %1478 = vmatprep.subr.bf16.mxu0 0
        %1479 = vmatpush1.bf16.msra.mxu0 0
        %1480 = vmatprep.subr.bf16.mxu0 0
        %1481 = vmatpush1.bf16.msra.mxu0 0
        %1482 = vmatprep.subr.bf16.mxu0 0
        %1483 = vmatpush1.bf16.msra.mxu0 0
        %1484 = vmatprep.subr.bf16.mxu0 0
        %1485 = vmatpush1.bf16.msra.mxu0 0
        %1486 = vmatprep.subr.bf16.mxu0 0
        %1487 = vmatpush1.bf16.msra.mxu0 0
        %1488 = vmatprep.subr.bf16.mxu0 0
        %1489 = vmatpush1.bf16.msra.mxu0 0
        %1490 = vmatprep.subr.bf16.mxu0 0
        %1491 = vmatpush1.bf16.msra.mxu0 0
        %1492 = vmatprep.subr.bf16.mxu0 0
        %1493 = vmatpush1.bf16.msra.mxu0 0
        %1494 = vmatprep.subr.bf16.mxu0 0
        %1495 = vmatpush1.bf16.msra.mxu0 0
        %1496 = vmatprep.mubr.bf16.mxu0 0
        %1497 = vmatmul.mubr.bf16.gmra.mrb[0].mxu0 %v1462
        %v1498 = vpop.f32.mrb[0].mxu0
        %v1499 = vadd.f32 0.0, %v1498
        %v1500 = vpop.f32.mrb[0].mxu0
        %v1501 = vpop.f32.mrb[0].mxu0
        %v1502 = vpop.f32.mrb[0].mxu0
        %1503 = vdwg.mxu0
        %v1504 = vpack.c.bf16 %v1499, %v1499
        %s1505 = scalar_lea.vmem [#allocation15], 4
        %v1506 = vld [vmem:[%s1505] sm:$0xf]
        %v1508 = vsel %vm1102, %v1504, 0
        %vm1510 = vcmask 1043456
        %v1512 = vsel %vm1510, %v1506, 0
        %1514 = vmatprep.subr.bf16.mxu0 0
        %1515 = vmatpush1.bf16.msra.mxu0 %v1512
        %1516 = vmatprep.subr.bf16.mxu0 0
        %1517 = vmatpush1.bf16.msra.mxu0 0
        %1518 = vmatprep.subr.bf16.mxu0 0
        %1519 = vmatpush1.bf16.msra.mxu0 0
        %1520 = vmatprep.subr.bf16.mxu0 0
        %1521 = vmatpush1.bf16.msra.mxu0 0
        %1522 = vmatprep.subr.bf16.mxu0 0
        %1523 = vmatpush1.bf16.msra.mxu0 0
        %1524 = vmatprep.subr.bf16.mxu0 0
        %1525 = vmatpush1.bf16.msra.mxu0 0
        %1526 = vmatprep.subr.bf16.mxu0 0
        %1527 = vmatpush1.bf16.msra.mxu0 0
        %1528 = vmatprep.subr.bf16.mxu0 0
        %1529 = vmatpush1.bf16.msra.mxu0 0
        %1530 = vmatprep.subr.bf16.mxu0 0
        %1531 = vmatpush1.bf16.msra.mxu0 0
        %1532 = vmatprep.subr.bf16.mxu0 0
        %1533 = vmatpush1.bf16.msra.mxu0 0
        %1534 = vmatprep.subr.bf16.mxu0 0
        %1535 = vmatpush1.bf16.msra.mxu0 0
        %1536 = vmatprep.subr.bf16.mxu0 0
        %1537 = vmatpush1.bf16.msra.mxu0 0
        %1538 = vmatprep.subr.bf16.mxu0 0
        %1539 = vmatpush1.bf16.msra.mxu0 0
        %1540 = vmatprep.subr.bf16.mxu0 0
        %1541 = vmatpush1.bf16.msra.mxu0 0
        %1542 = vmatprep.subr.bf16.mxu0 0
        %1543 = vmatpush1.bf16.msra.mxu0 0
        %1544 = vmatprep.subr.bf16.mxu0 0
        %1545 = vmatpush1.bf16.msra.mxu0 0
        %1546 = vmatprep.mubr.bf16.mxu0 0
        %1547 = vmatmul.mubr.bf16.gmra.mrb[0].mxu0 %v1508
        %v1548 = vpop.f32.mrb[0].mxu0
        %v1549 = vadd.f32 0.0, %v1548
        %v1550 = vpop.f32.mrb[0].mxu0
        %v1551 = vpop.f32.mrb[0].mxu0
        %v1552 = vpop.f32.mrb[0].mxu0
        %1553 = vdwg.mxu0
        %v1555 = vsel %vm1102, %v1389, 0
        %v1558 = vsel %vm1510, %v1390, 0
        %1560 = vmatprep.subr.bf16.mxu0 0
        %1561 = vmatpush1.bf16.msra.mxu0 %v1558
        %1562 = vmatprep.subr.bf16.mxu0 0
        %1563 = vmatpush1.bf16.msra.mxu0 0
        %1564 = vmatprep.subr.bf16.mxu0 0
        %1565 = vmatpush1.bf16.msra.mxu0 0
        %1566 = vmatprep.subr.bf16.mxu0 0
        %1567 = vmatpush1.bf16.msra.mxu0 0
        %1568 = vmatprep.subr.bf16.mxu0 0
        %1569 = vmatpush1.bf16.msra.mxu0 0
        %1570 = vmatprep.subr.bf16.mxu0 0
        %1571 = vmatpush1.bf16.msra.mxu0 0
        %1572 = vmatprep.subr.bf16.mxu0 0
        %1573 = vmatpush1.bf16.msra.mxu0 0
        %1574 = vmatprep.subr.bf16.mxu0 0
        %1575 = vmatpush1.bf16.msra.mxu0 0
        %1576 = vmatprep.subr.bf16.mxu0 0
        %1577 = vmatpush1.bf16.msra.mxu0 0
        %1578 = vmatprep.subr.bf16.mxu0 0
        %1579 = vmatpush1.bf16.msra.mxu0 0
        %1580 = vmatprep.subr.bf16.mxu0 0
        %1581 = vmatpush1.bf16.msra.mxu0 0
        %1582 = vmatprep.subr.bf16.mxu0 0
        %1583 = vmatpush1.bf16.msra.mxu0 0
        %1584 = vmatprep.subr.bf16.mxu0 0
        %1585 = vmatpush1.bf16.msra.mxu0 0
        %1586 = vmatprep.subr.bf16.mxu0 0
        %1587 = vmatpush1.bf16.msra.mxu0 0
        %1588 = vmatprep.subr.bf16.mxu0 0
        %1589 = vmatpush1.bf16.msra.mxu0 0
        %1590 = vmatprep.subr.bf16.mxu0 0
        %1591 = vmatpush1.bf16.msra.mxu0 0
        %1592 = vmatprep.mubr.bf16.mxu0 0
        %1593 = vmatmul.mubr.bf16.gmra.mrb[0].mxu0 %v1555
        %v1594 = vpop.f32.mrb[0].mxu0
        %v1595 = vadd.f32 %v1549, %v1594
        %v1596 = vpop.f32.mrb[0].mxu0
        %v1597 = vpop.f32.mrb[0].mxu0
        %v1598 = vpop.f32.mrb[0].mxu0
        %1599 = vdwg.mxu0
        %1600 = vrot.lane.b32.xlu0 %v1282, 112
        %v1601 = vpop.permute.xlu0 %1600
        %1602 = vrot.lane.b32.xlu0 %v1283, 112
        %v1603 = vpop.permute.xlu0 %1602
        %v1605 = vsel %vm1102, %v1601, 0
        %v1608 = vsel %vm1102, %v1603, 0
        %1610 = vmatprep.subr.bf16.mxu0 0
        %1611 = vmatpush1.bf16.xpose.msra.mxu0 %v1608
        %1612 = vmatprep.subr.bf16.mxu0 0
        %1613 = vmatpush1.bf16.xpose.msra.mxu0 0
        %1614 = vmatprep.subr.bf16.mxu0 0
        %1615 = vmatpush1.bf16.xpose.msra.mxu0 0
        %1616 = vmatprep.subr.bf16.mxu0 0
        %1617 = vmatpush1.bf16.xpose.msra.mxu0 0
        %1618 = vmatprep.subr.bf16.mxu0 0
        %1619 = vmatpush1.bf16.xpose.msra.mxu0 0
        %1620 = vmatprep.subr.bf16.mxu0 0
        %1621 = vmatpush1.bf16.xpose.msra.mxu0 0
        %1622 = vmatprep.subr.bf16.mxu0 0
        %1623 = vmatpush1.bf16.xpose.msra.mxu0 0
        %1624 = vmatprep.subr.bf16.mxu0 0
        %1625 = vmatpush1.bf16.xpose.msra.mxu0 0
        %1626 = vmatprep.subr.bf16.mxu0 0
        %1627 = vmatpush1.bf16.xpose.msra.mxu0 0
        %1628 = vmatprep.subr.bf16.mxu0 0
        %1629 = vmatpush1.bf16.xpose.msra.mxu0 0
        %1630 = vmatprep.subr.bf16.mxu0 0
        %1631 = vmatpush1.bf16.xpose.msra.mxu0 0
        %1632 = vmatprep.subr.bf16.mxu0 0
        %1633 = vmatpush1.bf16.xpose.msra.mxu0 0
        %1634 = vmatprep.subr.bf16.mxu0 0
        %1635 = vmatpush1.bf16.xpose.msra.mxu0 0
        %1636 = vmatprep.subr.bf16.mxu0 0
        %1637 = vmatpush1.bf16.xpose.msra.mxu0 0
        %1638 = vmatprep.subr.bf16.mxu0 0
        %1639 = vmatpush1.bf16.xpose.msra.mxu0 0
        %1640 = vmatprep.subr.bf16.mxu0 0
        %1641 = vmatpush1.bf16.xpose.msra.mxu0 0
        %1642 = vmatprep.mubr.bf16.mxu0 0
        %1643 = vmatmul.mubr.bf16.gmra.mrb[0].mxu0 %v1605
        %v1644 = vpop.f32.mrb[0].mxu0
        %v1645 = vadd.f32 0.0, %v1644
        %v1646 = vpop.f32.mrb[0].mxu0
        %v1647 = vpop.f32.mrb[0].mxu0
        %v1648 = vpop.f32.mrb[0].mxu0
        %1649 = vdwg.mxu0
        %v1650 = vmul.f32 %v1645, 0.35355338
        %v1651 = vadd.f32 %v1650, %v1103
        %v1652 = vsel %vm1333, %v1651, -inf
        %1653 = vmax.xlane.f32.xlu0 %v1652
        %v1654 = vpop.xlane.xlu0 %1653
        %v1655 = vsub.f32 %v1651, %v1654
        %v1656 = vmul.f32 %v1655, 1.442695
        %v1657 = vpow.pop %v1656
        %v1658 = vsel %vm1333, %v1657, 0.0
        %1659 = vadd.xlane.f32.xlu0 %v1658
        %v1660 = vpop.xlane.xlu0 %1659
        %v1661 = vrcp.pop %v1660
        %v1662 = vmul.f32 %v1657, %v1661
        %v1663 = vpack.c.bf16 %v1662, %v1662
        %1664 = vrot.lane.b32.xlu0 %v1284, 112
        %v1665 = vpop.permute.xlu0 %1664
        %v1668 = vsel %vm1333, %v1663, 0
        %1670 = vmatprep.subr.bf16.mxu0 0
        %1671 = vmatpush1.bf16.msra.mxu0 %v1665
        %1672 = vmatprep.subr.bf16.mxu0 0
        %1673 = vmatpush1.bf16.msra.mxu0 0
        %1674 = vmatprep.subr.bf16.mxu0 0
        %1675 = vmatpush1.bf16.msra.mxu0 0
        %1676 = vmatprep.subr.bf16.mxu0 0
        %1677 = vmatpush1.bf16.msra.mxu0 0
        %1678 = vmatprep.subr.bf16.mxu0 0
        %1679 = vmatpush1.bf16.msra.mxu0 0
        %1680 = vmatprep.subr.bf16.mxu0 0
        %1681 = vmatpush1.bf16.msra.mxu0 0
        %1682 = vmatprep.subr.bf16.mxu0 0
        %1683 = vmatpush1.bf16.msra.mxu0 0
        %1684 = vmatprep.subr.bf16.mxu0 0
        %1685 = vmatpush1.bf16.msra.mxu0 0
        %1686 = vmatprep.subr.bf16.mxu0 0
        %1687 = vmatpush1.bf16.msra.mxu0 0
        %1688 = vmatprep.subr.bf16.mxu0 0
        %1689 = vmatpush1.bf16.msra.mxu0 0
        %1690 = vmatprep.subr.bf16.mxu0 0
        %1691 = vmatpush1.bf16.msra.mxu0 0
        %1692 = vmatprep.subr.bf16.mxu0 0
        %1693 = vmatpush1.bf16.msra.mxu0 0
        %1694 = vmatprep.subr.bf16.mxu0 0
        %1695 = vmatpush1.bf16.msra.mxu0 0
        %1696 = vmatprep.subr.bf16.mxu0 0
        %1697 = vmatpush1.bf16.msra.mxu0 0
        %1698 = vmatprep.subr.bf16.mxu0 0
        %1699 = vmatpush1.bf16.msra.mxu0 0
        %1700 = vmatprep.subr.bf16.mxu0 0
        %1701 = vmatpush1.bf16.msra.mxu0 0
        %1702 = vmatprep.mubr.bf16.mxu0 0
        %1703 = vmatmul.mubr.bf16.gmra.mrb[0].mxu0 %v1668
        %v1704 = vpop.f32.mrb[0].mxu0
        %v1705 = vadd.f32 0.0, %v1704
        %v1706 = vpop.f32.mrb[0].mxu0
        %v1707 = vpop.f32.mrb[0].mxu0
        %v1708 = vpop.f32.mrb[0].mxu0
        %1709 = vdwg.mxu0
        %v1710 = vpack.c.bf16 %v1705, %v1705
        %s1711 = scalar_lea.vmem [#allocation15], 8
        %v1712 = vld [vmem:[%s1711] sm:$0xf]
        %v1714 = vsel %vm1102, %v1710, 0
        %v1717 = vsel %vm1510, %v1712, 0
        %1719 = vmatprep.subr.bf16.mxu0 0
        %1720 = vmatpush1.bf16.msra.mxu0 %v1717
        %1721 = vmatprep.subr.bf16.mxu0 0
        %1722 = vmatpush1.bf16.msra.mxu0 0
        %1723 = vmatprep.subr.bf16.mxu0 0
        %1724 = vmatpush1.bf16.msra.mxu0 0
        %1725 = vmatprep.subr.bf16.mxu0 0
        %1726 = vmatpush1.bf16.msra.mxu0 0
        %1727 = vmatprep.subr.bf16.mxu0 0
        %1728 = vmatpush1.bf16.msra.mxu0 0
        %1729 = vmatprep.subr.bf16.mxu0 0
        %1730 = vmatpush1.bf16.msra.mxu0 0
        %1731 = vmatprep.subr.bf16.mxu0 0
        %1732 = vmatpush1.bf16.msra.mxu0 0
        %1733 = vmatprep.subr.bf16.mxu0 0
        %1734 = vmatpush1.bf16.msra.mxu0 0
        %1735 = vmatprep.subr.bf16.mxu0 0
        %1736 = vmatpush1.bf16.msra.mxu0 0
        %1737 = vmatprep.subr.bf16.mxu0 0
        %1738 = vmatpush1.bf16.msra.mxu0 0
        %1739 = vmatprep.subr.bf16.mxu0 0
        %1740 = vmatpush1.bf16.msra.mxu0 0
        %1741 = vmatprep.subr.bf16.mxu0 0
        %1742 = vmatpush1.bf16.msra.mxu0 0
        %1743 = vmatprep.subr.bf16.mxu0 0
        %1744 = vmatpush1.bf16.msra.mxu0 0
        %1745 = vmatprep.subr.bf16.mxu0 0
        %1746 = vmatpush1.bf16.msra.mxu0 0
        %1747 = vmatprep.subr.bf16.mxu0 0
        %1748 = vmatpush1.bf16.msra.mxu0 0
        %1749 = vmatprep.subr.bf16.mxu0 0
        %1750 = vmatpush1.bf16.msra.mxu0 0
        %1751 = vmatprep.mubr.bf16.mxu0 0
        %1752 = vmatmul.mubr.bf16.gmra.mrb[0].mxu0 %v1714
        %v1753 = vpop.f32.mrb[0].mxu0
        %v1754 = vadd.f32 0.0, %v1753
        %v1755 = vpop.f32.mrb[0].mxu0
        %v1756 = vpop.f32.mrb[0].mxu0
        %v1757 = vpop.f32.mrb[0].mxu0
        %1758 = vdwg.mxu0
        %v1759 = vadd.f32 %v1595, %v1754
        %1760 = vrot.lane.b32.xlu0 %v1282, 104
        %v1761 = vpop.permute.xlu0 %1760
        %1762 = vrot.lane.b32.xlu0 %v1283, 104
        %v1763 = vpop.permute.xlu0 %1762
        %v1765 = vsel %vm1102, %v1761, 0
        %v1768 = vsel %vm1102, %v1763, 0
        %1770 = vmatprep.subr.bf16.mxu0 0
        %1771 = vmatpush1.bf16.xpose.msra.mxu0 %v1768
        %1772 = vmatprep.subr.bf16.mxu0 0
        %1773 = vmatpush1.bf16.xpose.msra.mxu0 0
        %1774 = vmatprep.subr.bf16.mxu0 0
        %1775 = vmatpush1.bf16.xpose.msra.mxu0 0
        %1776 = vmatprep.subr.bf16.mxu0 0
        %1777 = vmatpush1.bf16.xpose.msra.mxu0 0
        %1778 = vmatprep.subr.bf16.mxu0 0
        %1779 = vmatpush1.bf16.xpose.msra.mxu0 0
        %1780 = vmatprep.subr.bf16.mxu0 0
        %1781 = vmatpush1.bf16.xpose.msra.mxu0 0
        %1782 = vmatprep.subr.bf16.mxu0 0
        %1783 = vmatpush1.bf16.xpose.msra.mxu0 0
        %1784 = vmatprep.subr.bf16.mxu0 0
        %1785 = vmatpush1.bf16.xpose.msra.mxu0 0
        %1786 = vmatprep.subr.bf16.mxu0 0
        %1787 = vmatpush1.bf16.xpose.msra.mxu0 0
        %1788 = vmatprep.subr.bf16.mxu0 0
        %1789 = vmatpush1.bf16.xpose.msra.mxu0 0
        %1790 = vmatprep.subr.bf16.mxu0 0
        %1791 = vmatpush1.bf16.xpose.msra.mxu0 0
        %1792 = vmatprep.subr.bf16.mxu0 0
        %1793 = vmatpush1.bf16.xpose.msra.mxu0 0
        %1794 = vmatprep.subr.bf16.mxu0 0
        %1795 = vmatpush1.bf16.xpose.msra.mxu0 0
        %1796 = vmatprep.subr.bf16.mxu0 0
        %1797 = vmatpush1.bf16.xpose.msra.mxu0 0
        %1798 = vmatprep.subr.bf16.mxu0 0
        %1799 = vmatpush1.bf16.xpose.msra.mxu0 0
        %1800 = vmatprep.subr.bf16.mxu0 0
        %1801 = vmatpush1.bf16.xpose.msra.mxu0 0
        %1802 = vmatprep.mubr.bf16.mxu0 0
        %1803 = vmatmul.mubr.bf16.gmra.mrb[0].mxu0 %v1765
        %v1804 = vpop.f32.mrb[0].mxu0
        %v1805 = vadd.f32 0.0, %v1804
        %v1806 = vpop.f32.mrb[0].mxu0
        %v1807 = vpop.f32.mrb[0].mxu0
        %v1808 = vpop.f32.mrb[0].mxu0
        %1809 = vdwg.mxu0
        %v1810 = vmul.f32 %v1805, 0.35355338
        %v1811 = vadd.f32 %v1810, %v1103
        %v1812 = vsel %vm1333, %v1811, -inf
        %1813 = vmax.xlane.f32.xlu0 %v1812
        %v1814 = vpop.xlane.xlu0 %1813
        %v1815 = vsub.f32 %v1811, %v1814
        %v1816 = vmul.f32 %v1815, 1.442695
        %v1817 = vpow.pop %v1816
        %v1818 = vsel %vm1333, %v1817, 0.0
        %1819 = vadd.xlane.f32.xlu0 %v1818
        %v1820 = vpop.xlane.xlu0 %1819
        %v1821 = vrcp.pop %v1820
        %v1822 = vmul.f32 %v1817, %v1821
        %v1823 = vpack.c.bf16 %v1822, %v1822
        %1824 = vrot.lane.b32.xlu0 %v1284, 104
        %v1825 = vpop.permute.xlu0 %1824
        %v1828 = vsel %vm1333, %v1823, 0
        %1830 = vmatprep.subr.bf16.mxu0 0
        %1831 = vmatpush1.bf16.msra.mxu0 %v1825
        %1832 = vmatprep.subr.bf16.mxu0 0
        %1833 = vmatpush1.bf16.msra.mxu0 0
        %1834 = vmatprep.subr.bf16.mxu0 0
        %1835 = vmatpush1.bf16.msra.mxu0 0
        %1836 = vmatprep.subr.bf16.mxu0 0
        %1837 = vmatpush1.bf16.msra.mxu0 0
        %1838 = vmatprep.subr.bf16.mxu0 0
        %1839 = vmatpush1.bf16.msra.mxu0 0
        %1840 = vmatprep.subr.bf16.mxu0 0
        %1841 = vmatpush1.bf16.msra.mxu0 0
        %1842 = vmatprep.subr.bf16.mxu0 0
        %1843 = vmatpush1.bf16.msra.mxu0 0
        %1844 = vmatprep.subr.bf16.mxu0 0
        %1845 = vmatpush1.bf16.msra.mxu0 0
        %1846 = vmatprep.subr.bf16.mxu0 0
        %1847 = vmatpush1.bf16.msra.mxu0 0
        %1848 = vmatprep.subr.bf16.mxu0 0
        %1849 = vmatpush1.bf16.msra.mxu0 0
        %1850 = vmatprep.subr.bf16.mxu0 0
        %1851 = vmatpush1.bf16.msra.mxu0 0
        %1852 = vmatprep.subr.bf16.mxu0 0
        %1853 = vmatpush1.bf16.msra.mxu0 0
        %1854 = vmatprep.subr.bf16.mxu0 0
        %1855 = vmatpush1.bf16.msra.mxu0 0
        %1856 = vmatprep.subr.bf16.mxu0 0
        %1857 = vmatpush1.bf16.msra.mxu0 0
        %1858 = vmatprep.subr.bf16.mxu0 0
        %1859 = vmatpush1.bf16.msra.mxu0 0
        %1860 = vmatprep.subr.bf16.mxu0 0
        %1861 = vmatpush1.bf16.msra.mxu0 0
        %1862 = vmatprep.mubr.bf16.mxu0 0
        %1863 = vmatmul.mubr.bf16.gmra.mrb[0].mxu0 %v1828
        %v1864 = vpop.f32.mrb[0].mxu0
        %v1865 = vadd.f32 0.0, %v1864
        %v1866 = vpop.f32.mrb[0].mxu0
        %v1867 = vpop.f32.mrb[0].mxu0
        %v1868 = vpop.f32.mrb[0].mxu0
        %1869 = vdwg.mxu0
        %v1870 = vpack.c.bf16 %v1865, %v1865
        %s1871 = scalar_lea.vmem [#allocation15], 12
        %v1872 = vld [vmem:[%s1871] sm:$0xf]
        %v1874 = vsel %vm1102, %v1870, 0
        %v1877 = vsel %vm1510, %v1872, 0
        %1879 = vmatprep.subr.bf16.mxu0 0
        %1880 = vmatpush1.bf16.msra.mxu0 %v1877
        %1881 = vmatprep.subr.bf16.mxu0 0
        %1882 = vmatpush1.bf16.msra.mxu0 0
        %1883 = vmatprep.subr.bf16.mxu0 0
        %1884 = vmatpush1.bf16.msra.mxu0 0
        %1885 = vmatprep.subr.bf16.mxu0 0
        %1886 = vmatpush1.bf16.msra.mxu0 0
        %1887 = vmatprep.subr.bf16.mxu0 0
        %1888 = vmatpush1.bf16.msra.mxu0 0
        %1889 = vmatprep.subr.bf16.mxu0 0
        %1890 = vmatpush1.bf16.msra.mxu0 0
        %1891 = vmatprep.subr.bf16.mxu0 0
        %1892 = vmatpush1.bf16.msra.mxu0 0
        %1893 = vmatprep.subr.bf16.mxu0 0
        %1894 = vmatpush1.bf16.msra.mxu0 0
        %1895 = vmatprep.subr.bf16.mxu0 0
        %1896 = vmatpush1.bf16.msra.mxu0 0
        %1897 = vmatprep.subr.bf16.mxu0 0
        %1898 = vmatpush1.bf16.msra.mxu0 0
        %1899 = vmatprep.subr.bf16.mxu0 0
        %1900 = vmatpush1.bf16.msra.mxu0 0
        %1901 = vmatprep.subr.bf16.mxu0 0
        %1902 = vmatpush1.bf16.msra.mxu0 0
        %1903 = vmatprep.subr.bf16.mxu0 0
        %1904 = vmatpush1.bf16.msra.mxu0 0
        %1905 = vmatprep.subr.bf16.mxu0 0
        %1906 = vmatpush1.bf16.msra.mxu0 0
        %1907 = vmatprep.subr.bf16.mxu0 0
        %1908 = vmatpush1.bf16.msra.mxu0 0
        %1909 = vmatprep.subr.bf16.mxu0 0
        %1910 = vmatpush1.bf16.msra.mxu0 0
        %1911 = vmatprep.mubr.bf16.mxu0 0
        %1912 = vmatmul.mubr.bf16.gmra.mrb[0].mxu0 %v1874
        %v1913 = vpop.f32.mrb[0].mxu0
        %v1914 = vadd.f32 0.0, %v1913
        %v1915 = vpop.f32.mrb[0].mxu0
        %v1916 = vpop.f32.mrb[0].mxu0
        %v1917 = vpop.f32.mrb[0].mxu0
        %1918 = vdwg.mxu0
        %v1919 = vadd.f32 %v1759, %v1914
        %v1920 = vadd.f32 %v1061, %v1919
        %v1921 = vld [vmem:[#allocation17] sm:$0x1]
        %v1922 = vld [vmem:[#allocation18] sm:$0x1]
        %v1923 = vsel %vm1064, %v1920, 0.0
        %1924 = vadd.xlane.f32.xlu0 %v1923
        %v1925 = vpop.xlane.xlu0 %1924
        %v1926 = vmul.f32 %v1925, %v1068
        %v1927 = vsub.f32 %v1920, %v1926
        %v1928 = vmul.f32 %v1927, %v1927
        %v1929 = vsel %vm1064, %v1928, 0.0
        %1930 = vadd.xlane.f32.xlu0 %v1929
        %v1931 = vpop.xlane.xlu0 %1930
        %v1932 = vmul.f32 %v1931, %v1068
        %v1933 = vadd.f32 %v1932, 1e-05
        %v1934 = vrsqrt.pop %v1933
        %v1935 = vmul.f32 %v1927, %v1934
        %v1937 = vlaneseq
        %v1938 = vshrl.u32 %v1937, 7
        %v1939 = vsub.s32 0, %v1938
        %v1940 = vrot.slane %v1921, %v1939
        %v1942 = vmul.f32 %v1935, %v1940
        %v1944 = vlaneseq
        %v1945 = vshrl.u32 %v1944, 7
        %v1946 = vsub.s32 0, %v1945
        %v1947 = vrot.slane %v1922, %v1946
        %v1949 = vadd.f32 %v1942, %v1947
        %v1950 = vld [vmem:[%s916] sm:$0xff]
        %s1951 = scalar_lea.vmem %s916, 8 [#allocation7]
        %v1952 = vld [vmem:[%s1951] sm:$0xff]
        %v1953 = vld [vmem:[%s924] sm:$0xff]
        %vm1954 = vcmp.gt.f32.partialorder %v1953, 0.0
        %v1955 = vsel %vm1954, -1e+30, 0.0
        %1957 = vrot.lane.b32.xlu0 %v1955, 8
        %v1958 = vpop.permute.xlu0 %1957
        %v1960 = vsel %vm1102, %v1955, %v1958
        %v1961 = vld [vmem:[%s13] sm:$0xf]
        %v1962 = vld [vmem:[%s13 + $0x4] sm:$0xf]
        %v1963 = vld [vmem:[%s13 + $0x8] sm:$0xf]
        %v1964 = vld [vmem:[%s13 + $0xc] sm:$0xf]
        %v1965 = vld [vmem:[#allocation20] sm:$0xf]
        %v1966 = vld [vmem:[#allocation20 + $0x4] sm:$0xf]
        %v1967 = vld [vmem:[#allocation20 + $0x8] sm:$0xf]
        %v1968 = vld [vmem:[#allocation20 + $0xc] sm:$0xf]
        %v1969 = vld [vmem:[#allocation21] sm:$0xf]
        %v1970 = vld [vmem:[#allocation21 + $0x4] sm:$0xf]
        %v1971 = vld [vmem:[#allocation21 + $0x8] sm:$0xf]
        %v1972 = vld [vmem:[#allocation21 + $0xc] sm:$0xf]
        %v1973 = vpack.c.bf16 %v1949, %v1949
        %v1974 = vpack.c.bf16 %v1952, %v1950
        %v1979 = vunpack.c.l.b16 %v1961
        %v1980 = vunpack.c.l.b16 %v1962
        %v1981 = vunpack.c.l.b16 %v1963
        %v1982 = vunpack.c.l.b16 %v1964
        %v1983 = vpack.c.b16 %v1980, %v1979
        %v1984 = vpack.c.b16 %v1982, %v1981
        %v1988 = vsel %vm1064, %v1973, 0
        %1990 = vmatprep.subr.bf16.mxu0 0
        %1991 = vmatpush1.bf16.msra.mxu0 %v1983
        %1992 = vmatprep.subr.bf16.mxu0 0
        %1993 = vmatpush1.bf16.msra.mxu0 %v1984
        %1994 = vmatprep.subr.bf16.mxu0 0
        %1995 = vmatpush1.bf16.msra.mxu0 0
        %1996 = vmatprep.subr.bf16.mxu0 0
        %1997 = vmatpush1.bf16.msra.mxu0 0
        %1998 = vmatprep.subr.bf16.mxu0 0
        %1999 = vmatpush1.bf16.msra.mxu0 0
        %2000 = vmatprep.subr.bf16.mxu0 0
        %2001 = vmatpush1.bf16.msra.mxu0 0
        %2002 = vmatprep.subr.bf16.mxu0 0
        %2003 = vmatpush1.bf16.msra.mxu0 0
        %2004 = vmatprep.subr.bf16.mxu0 0
        %2005 = vmatpush1.bf16.msra.mxu0 0
        %2006 = vmatprep.subr.bf16.mxu0 0
        %2007 = vmatpush1.bf16.msra.mxu0 0
        %2008 = vmatprep.subr.bf16.mxu0 0
        %2009 = vmatpush1.bf16.msra.mxu0 0
        %2010 = vmatprep.subr.bf16.mxu0 0
        %2011 = vmatpush1.bf16.msra.mxu0 0
        %2012 = vmatprep.subr.bf16.mxu0 0
        %2013 = vmatpush1.bf16.msra.mxu0 0
        %2014 = vmatprep.subr.bf16.mxu0 0
        %2015 = vmatpush1.bf16.msra.mxu0 0
        %2016 = vmatprep.subr.bf16.mxu0 0
        %2017 = vmatpush1.bf16.msra.mxu0 0
        %2018 = vmatprep.subr.bf16.mxu0 0
        %2019 = vmatpush1.bf16.msra.mxu0 0
        %2020 = vmatprep.subr.bf16.mxu0 0
        %2021 = vmatpush1.bf16.msra.mxu0 0
        %2022 = vmatprep.mubr.bf16.mxu0 0
        %2023 = vmatmul.mubr.bf16.gmra.mrb[0].mxu0 %v1988
        %v2024 = vpop.f32.mrb[0].mxu0
        %v2025 = vadd.f32 0.0, %v2024
        %v2026 = vpop.f32.mrb[0].mxu0
        %v2027 = vpop.f32.mrb[0].mxu0
        %v2028 = vpop.f32.mrb[0].mxu0
        %2029 = vdwg.mxu0
        %v2034 = vunpack.c.l.b16 %v1965
        %v2035 = vunpack.c.l.b16 %v1966
        %v2036 = vunpack.c.l.b16 %v1967
        %v2037 = vunpack.c.l.b16 %v1968
        %v2038 = vpack.c.b16 %v2035, %v2034
        %v2039 = vpack.c.b16 %v2037, %v2036
        %v2043 = vsel %vm1064, %v1974, 0
        %2045 = vmatprep.subr.bf16.mxu0 0
        %2046 = vmatpush1.bf16.msra.mxu0 %v2038
        %2047 = vmatprep.subr.bf16.mxu0 0
        %2048 = vmatpush1.bf16.msra.mxu0 %v2039
        %2049 = vmatprep.subr.bf16.mxu0 0
        %2050 = vmatpush1.bf16.msra.mxu0 0
        %2051 = vmatprep.subr.bf16.mxu0 0
        %2052 = vmatpush1.bf16.msra.mxu0 0
        %2053 = vmatprep.subr.bf16.mxu0 0
        %2054 = vmatpush1.bf16.msra.mxu0 0
        %2055 = vmatprep.subr.bf16.mxu0 0
        %2056 = vmatpush1.bf16.msra.mxu0 0
        %2057 = vmatprep.subr.bf16.mxu0 0
        %2058 = vmatpush1.bf16.msra.mxu0 0
        %2059 = vmatprep.subr.bf16.mxu0 0
        %2060 = vmatpush1.bf16.msra.mxu0 0
        %2061 = vmatprep.subr.bf16.mxu0 0
        %2062 = vmatpush1.bf16.msra.mxu0 0
        %2063 = vmatprep.subr.bf16.mxu0 0
        %2064 = vmatpush1.bf16.msra.mxu0 0
        %2065 = vmatprep.subr.bf16.mxu0 0
        %2066 = vmatpush1.bf16.msra.mxu0 0
        %2067 = vmatprep.subr.bf16.mxu0 0
        %2068 = vmatpush1.bf16.msra.mxu0 0
        %2069 = vmatprep.subr.bf16.mxu0 0
        %2070 = vmatpush1.bf16.msra.mxu0 0
        %2071 = vmatprep.subr.bf16.mxu0 0
        %2072 = vmatpush1.bf16.msra.mxu0 0
        %2073 = vmatprep.subr.bf16.mxu0 0
        %2074 = vmatpush1.bf16.msra.mxu0 0
        %2075 = vmatprep.subr.bf16.mxu0 0
        %2076 = vmatpush1.bf16.msra.mxu0 0
        %2077 = vmatprep.mubr.bf16.mxu0 0
        %2078 = vmatmul.mubr.bf16.gmra.mrb[0].mxu0 %v2043
        %v2079 = vpop.f32.mrb[0].mxu0
        %v2080 = vadd.f32 0.0, %v2079
        %v2081 = vpop.f32.mrb[0].mxu0
        %v2082 = vpop.f32.mrb[0].mxu0
        %v2083 = vadd.f32 0.0, %v2082
        %v2084 = vpop.f32.mrb[0].mxu0
        %2085 = vdwg.mxu0
        %v2090 = vunpack.c.l.b16 %v1969
        %v2091 = vunpack.c.l.b16 %v1970
        %v2092 = vunpack.c.l.b16 %v1971
        %v2093 = vunpack.c.l.b16 %v1972
        %v2094 = vpack.c.b16 %v2091, %v2090
        %v2095 = vpack.c.b16 %v2093, %v2092
        %2098 = vmatprep.subr.bf16.mxu0 0
        %2099 = vmatpush1.bf16.msra.mxu0 %v2094
        %2100 = vmatprep.subr.bf16.mxu0 0
        %2101 = vmatpush1.bf16.msra.mxu0 %v2095
        %2102 = vmatprep.subr.bf16.mxu0 0
        %2103 = vmatpush1.bf16.msra.mxu0 0
        %2104 = vmatprep.subr.bf16.mxu0 0
        %2105 = vmatpush1.bf16.msra.mxu0 0
        %2106 = vmatprep.subr.bf16.mxu0 0
        %2107 = vmatpush1.bf16.msra.mxu0 0
        %2108 = vmatprep.subr.bf16.mxu0 0
        %2109 = vmatpush1.bf16.msra.mxu0 0
        %2110 = vmatprep.subr.bf16.mxu0 0
        %2111 = vmatpush1.bf16.msra.mxu0 0
        %2112 = vmatprep.subr.bf16.mxu0 0
        %2113 = vmatpush1.bf16.msra.mxu0 0
        %2114 = vmatprep.subr.bf16.mxu0 0
        %2115 = vmatpush1.bf16.msra.mxu0 0
        %2116 = vmatprep.subr.bf16.mxu0 0
        %2117 = vmatpush1.bf16.msra.mxu0 0
        %2118 = vmatprep.subr.bf16.mxu0 0
        %2119 = vmatpush1.bf16.msra.mxu0 0
        %2120 = vmatprep.subr.bf16.mxu0 0
        %2121 = vmatpush1.bf16.msra.mxu0 0
        %2122 = vmatprep.subr.bf16.mxu0 0
        %2123 = vmatpush1.bf16.msra.mxu0 0
        %2124 = vmatprep.subr.bf16.mxu0 0
        %2125 = vmatpush1.bf16.msra.mxu0 0
        %2126 = vmatprep.subr.bf16.mxu0 0
        %2127 = vmatpush1.bf16.msra.mxu0 0
        %2128 = vmatprep.subr.bf16.mxu0 0
        %2129 = vmatpush1.bf16.msra.mxu0 0
        %2130 = vmatprep.mubr.bf16.mxu0 0
        %2131 = vmatmul.mubr.bf16.gmra.mrb[0].mxu0 %v2043
        %v2132 = vpop.f32.mrb[0].mxu0
        %v2133 = vadd.f32 0.0, %v2132
        %v2134 = vpop.f32.mrb[0].mxu0
        %v2135 = vpop.f32.mrb[0].mxu0
        %v2136 = vadd.f32 0.0, %v2135
        %v2137 = vpop.f32.mrb[0].mxu0
        %2138 = vdwg.mxu0
        %v2139 = vpack.c.bf16 %v2025, %v2025
        %v2140 = vpack.c.bf16 %v2083, %v2080
        %v2141 = vpack.c.bf16 %v2136, %v2133
        %v2143 = vsel %vm1102, %v2139, 0
        %v2146 = vsel %vm1102, %v2140, 0
        %2148 = vmatprep.subr.bf16.mxu0 0
        %2149 = vmatpush1.bf16.xpose.msra.mxu0 %v2146
        %2150 = vmatprep.subr.bf16.mxu0 0
        %2151 = vmatpush1.bf16.xpose.msra.mxu0 0
        %2152 = vmatprep.subr.bf16.mxu0 0
        %2153 = vmatpush1.bf16.xpose.msra.mxu0 0
        %2154 = vmatprep.subr.bf16.mxu0 0
        %2155 = vmatpush1.bf16.xpose.msra.mxu0 0
        %2156 = vmatprep.subr.bf16.mxu0 0
        %2157 = vmatpush1.bf16.xpose.msra.mxu0 0
        %2158 = vmatprep.subr.bf16.mxu0 0
        %2159 = vmatpush1.bf16.xpose.msra.mxu0 0
        %2160 = vmatprep.subr.bf16.mxu0 0
        %2161 = vmatpush1.bf16.xpose.msra.mxu0 0
        %2162 = vmatprep.subr.bf16.mxu0 0
        %2163 = vmatpush1.bf16.xpose.msra.mxu0 0
        %2164 = vmatprep.subr.bf16.mxu0 0
        %2165 = vmatpush1.bf16.xpose.msra.mxu0 0
        %2166 = vmatprep.subr.bf16.mxu0 0
        %2167 = vmatpush1.bf16.xpose.msra.mxu0 0
        %2168 = vmatprep.subr.bf16.mxu0 0
        %2169 = vmatpush1.bf16.xpose.msra.mxu0 0
        %2170 = vmatprep.subr.bf16.mxu0 0
        %2171 = vmatpush1.bf16.xpose.msra.mxu0 0
        %2172 = vmatprep.subr.bf16.mxu0 0
        %2173 = vmatpush1.bf16.xpose.msra.mxu0 0
        %2174 = vmatprep.subr.bf16.mxu0 0
        %2175 = vmatpush1.bf16.xpose.msra.mxu0 0
        %2176 = vmatprep.subr.bf16.mxu0 0
        %2177 = vmatpush1.bf16.xpose.msra.mxu0 0
        %2178 = vmatprep.subr.bf16.mxu0 0
        %2179 = vmatpush1.bf16.xpose.msra.mxu0 0
        %2180 = vmatprep.mubr.bf16.mxu0 0
        %2181 = vmatmul.mubr.bf16.gmra.mrb[0].mxu0 %v2143
        %v2182 = vpop.f32.mrb[0].mxu0
        %v2183 = vadd.f32 0.0, %v2182
        %v2184 = vpop.f32.mrb[0].mxu0
        %v2185 = vpop.f32.mrb[0].mxu0
        %v2186 = vpop.f32.mrb[0].mxu0
        %2187 = vdwg.mxu0
        %v2188 = vmul.f32 %v2183, 0.35355338
        %v2189 = vadd.f32 %v2188, %v1960
        %v2190 = vsel %vm1333, %v2189, -inf
        %2191 = vmax.xlane.f32.xlu0 %v2190
        %v2192 = vpop.xlane.xlu0 %2191
        %v2193 = vsub.f32 %v2189, %v2192
        %v2194 = vmul.f32 %v2193, 1.442695
        %v2195 = vpow.pop %v2194
        %v2196 = vsel %vm1333, %v2195, 0.0
        %2197 = vadd.xlane.f32.xlu0 %v2196
        %v2198 = vpop.xlane.xlu0 %2197
        %v2199 = vrcp.pop %v2198
        %v2200 = vmul.f32 %v2195, %v2199
        %v2201 = vpack.c.bf16 %v2200, %v2200
        %v2203 = vsel %vm1333, %v2201, 0
        %2205 = vmatprep.subr.bf16.mxu0 0
        %2206 = vmatpush1.bf16.msra.mxu0 %v2141
        %2207 = vmatprep.subr.bf16.mxu0 0
        %2208 = vmatpush1.bf16.msra.mxu0 0
        %2209 = vmatprep.subr.bf16.mxu0 0
        %2210 = vmatpush1.bf16.msra.mxu0 0
        %2211 = vmatprep.subr.bf16.mxu0 0
        %2212 = vmatpush1.bf16.msra.mxu0 0
        %2213 = vmatprep.subr.bf16.mxu0 0
        %2214 = vmatpush1.bf16.msra.mxu0 0
        %2215 = vmatprep.subr.bf16.mxu0 0
        %2216 = vmatpush1.bf16.msra.mxu0 0
        %2217 = vmatprep.subr.bf16.mxu0 0
        %2218 = vmatpush1.bf16.msra.mxu0 0
        %2219 = vmatprep.subr.bf16.mxu0 0
        %2220 = vmatpush1.bf16.msra.mxu0 0
        %2221 = vmatprep.subr.bf16.mxu0 0
        %2222 = vmatpush1.bf16.msra.mxu0 0
        %2223 = vmatprep.subr.bf16.mxu0 0
        %2224 = vmatpush1.bf16.msra.mxu0 0
        %2225 = vmatprep.subr.bf16.mxu0 0
        %2226 = vmatpush1.bf16.msra.mxu0 0
        %2227 = vmatprep.subr.bf16.mxu0 0
        %2228 = vmatpush1.bf16.msra.mxu0 0
        %2229 = vmatprep.subr.bf16.mxu0 0
        %2230 = vmatpush1.bf16.msra.mxu0 0
        %2231 = vmatprep.subr.bf16.mxu0 0
        %2232 = vmatpush1.bf16.msra.mxu0 0
        %2233 = vmatprep.subr.bf16.mxu0 0
        %2234 = vmatpush1.bf16.msra.mxu0 0
        %2235 = vmatprep.subr.bf16.mxu0 0
        %2236 = vmatpush1.bf16.msra.mxu0 0
        %2237 = vmatprep.mubr.bf16.mxu0 0
        %2238 = vmatmul.mubr.bf16.gmra.mrb[0].mxu0 %v2203
        %v2239 = vpop.f32.mrb[0].mxu0
        %v2240 = vadd.f32 0.0, %v2239
        %v2241 = vpop.f32.mrb[0].mxu0
        %v2242 = vpop.f32.mrb[0].mxu0
        %v2243 = vpop.f32.mrb[0].mxu0
        %2244 = vdwg.mxu0
        %v2245 = vpack.c.bf16 %v2240, %v2240
        %v2246 = vld [vmem:[#allocation23] sm:$0xf]
        %2248 = vrot.lane.b32.xlu0 %v2139, 120
        %v2249 = vpop.permute.xlu0 %2248
        %2251 = vrot.lane.b32.xlu0 %v2140, 120
        %v2252 = vpop.permute.xlu0 %2251
        %v2254 = vsel %vm1102, %v2249, 0
        %v2257 = vsel %vm1102, %v2252, 0
        %2259 = vmatprep.subr.bf16.mxu0 0
        %2260 = vmatpush1.bf16.xpose.msra.mxu0 %v2257
        %2261 = vmatprep.subr.bf16.mxu0 0
        %2262 = vmatpush1.bf16.xpose.msra.mxu0 0
        %2263 = vmatprep.subr.bf16.mxu0 0
        %2264 = vmatpush1.bf16.xpose.msra.mxu0 0
        %2265 = vmatprep.subr.bf16.mxu0 0
        %2266 = vmatpush1.bf16.xpose.msra.mxu0 0
        %2267 = vmatprep.subr.bf16.mxu0 0
        %2268 = vmatpush1.bf16.xpose.msra.mxu0 0
        %2269 = vmatprep.subr.bf16.mxu0 0
        %2270 = vmatpush1.bf16.xpose.msra.mxu0 0
        %2271 = vmatprep.subr.bf16.mxu0 0
        %2272 = vmatpush1.bf16.xpose.msra.mxu0 0
        %2273 = vmatprep.subr.bf16.mxu0 0
        %2274 = vmatpush1.bf16.xpose.msra.mxu0 0
        %2275 = vmatprep.subr.bf16.mxu0 0
        %2276 = vmatpush1.bf16.xpose.msra.mxu0 0
        %2277 = vmatprep.subr.bf16.mxu0 0
        %2278 = vmatpush1.bf16.xpose.msra.mxu0 0
        %2279 = vmatprep.subr.bf16.mxu0 0
        %2280 = vmatpush1.bf16.xpose.msra.mxu0 0
        %2281 = vmatprep.subr.bf16.mxu0 0
        %2282 = vmatpush1.bf16.xpose.msra.mxu0 0
        %2283 = vmatprep.subr.bf16.mxu0 0
        %2284 = vmatpush1.bf16.xpose.msra.mxu0 0
        %2285 = vmatprep.subr.bf16.mxu0 0
        %2286 = vmatpush1.bf16.xpose.msra.mxu0 0
        %2287 = vmatprep.subr.bf16.mxu0 0
        %2288 = vmatpush1.bf16.xpose.msra.mxu0 0
        %2289 = vmatprep.subr.bf16.mxu0 0
        %2290 = vmatpush1.bf16.xpose.msra.mxu0 0
        %2291 = vmatprep.mubr.bf16.mxu0 0
        %2292 = vmatmul.mubr.bf16.gmra.mrb[0].mxu0 %v2254
        %v2293 = vpop.f32.mrb[0].mxu0
        %v2294 = vadd.f32 0.0, %v2293
        %v2295 = vpop.f32.mrb[0].mxu0
        %v2296 = vpop.f32.mrb[0].mxu0
        %v2297 = vpop.f32.mrb[0].mxu0
        %2298 = vdwg.mxu0
        %v2299 = vmul.f32 %v2294, 0.35355338
        %v2300 = vadd.f32 %v2299, %v1960
        %v2301 = vsel %vm1333, %v2300, -inf
        %2302 = vmax.xlane.f32.xlu0 %v2301
        %v2303 = vpop.xlane.xlu0 %2302
        %v2304 = vsub.f32 %v2300, %v2303
        %v2305 = vmul.f32 %v2304, 1.442695
        %v2306 = vpow.pop %v2305
        %v2307 = vsel %vm1333, %v2306, 0.0
        %2308 = vadd.xlane.f32.xlu0 %v2307
        %v2309 = vpop.xlane.xlu0 %2308
        %v2310 = vrcp.pop %v2309
        %v2311 = vmul.f32 %v2306, %v2310
        %v2312 = vpack.c.bf16 %v2311, %v2311
        %2314 = vrot.lane.b32.xlu0 %v2141, 120
        %v2315 = vpop.permute.xlu0 %2314
        %v2318 = vsel %vm1333, %v2312, 0
        %2320 = vmatprep.subr.bf16.mxu0 0
        %2321 = vmatpush1.bf16.msra.mxu0 %v2315
        %2322 = vmatprep.subr.bf16.mxu0 0
        %2323 = vmatpush1.bf16.msra.mxu0 0
        %2324 = vmatprep.subr.bf16.mxu0 0
        %2325 = vmatpush1.bf16.msra.mxu0 0
        %2326 = vmatprep.subr.bf16.mxu0 0
        %2327 = vmatpush1.bf16.msra.mxu0 0
        %2328 = vmatprep.subr.bf16.mxu0 0
        %2329 = vmatpush1.bf16.msra.mxu0 0
        %2330 = vmatprep.subr.bf16.mxu0 0
        %2331 = vmatpush1.bf16.msra.mxu0 0
        %2332 = vmatprep.subr.bf16.mxu0 0
        %2333 = vmatpush1.bf16.msra.mxu0 0
        %2334 = vmatprep.subr.bf16.mxu0 0
        %2335 = vmatpush1.bf16.msra.mxu0 0
        %2336 = vmatprep.subr.bf16.mxu0 0
        %2337 = vmatpush1.bf16.msra.mxu0 0
        %2338 = vmatprep.subr.bf16.mxu0 0
        %2339 = vmatpush1.bf16.msra.mxu0 0
        %2340 = vmatprep.subr.bf16.mxu0 0
        %2341 = vmatpush1.bf16.msra.mxu0 0
        %2342 = vmatprep.subr.bf16.mxu0 0
        %2343 = vmatpush1.bf16.msra.mxu0 0
        %2344 = vmatprep.subr.bf16.mxu0 0
        %2345 = vmatpush1.bf16.msra.mxu0 0
        %2346 = vmatprep.subr.bf16.mxu0 0
        %2347 = vmatpush1.bf16.msra.mxu0 0
        %2348 = vmatprep.subr.bf16.mxu0 0
        %2349 = vmatpush1.bf16.msra.mxu0 0
        %2350 = vmatprep.subr.bf16.mxu0 0
        %2351 = vmatpush1.bf16.msra.mxu0 0
        %2352 = vmatprep.mubr.bf16.mxu0 0
        %2353 = vmatmul.mubr.bf16.gmra.mrb[0].mxu0 %v2318
        %v2354 = vpop.f32.mrb[0].mxu0
        %v2355 = vadd.f32 0.0, %v2354
        %v2356 = vpop.f32.mrb[0].mxu0
        %v2357 = vpop.f32.mrb[0].mxu0
        %v2358 = vpop.f32.mrb[0].mxu0
        %2359 = vdwg.mxu0
        %v2360 = vpack.c.bf16 %v2355, %v2355
        %s2361 = scalar_lea.vmem [#allocation23], 4
        %v2362 = vld [vmem:[%s2361] sm:$0xf]
        %v2364 = vsel %vm1102, %v2360, 0
        %v2367 = vsel %vm1510, %v2362, 0
        %2369 = vmatprep.subr.bf16.mxu0 0
        %2370 = vmatpush1.bf16.msra.mxu0 %v2367
        %2371 = vmatprep.subr.bf16.mxu0 0
        %2372 = vmatpush1.bf16.msra.mxu0 0
        %2373 = vmatprep.subr.bf16.mxu0 0
        %2374 = vmatpush1.bf16.msra.mxu0 0
        %2375 = vmatprep.subr.bf16.mxu0 0
        %2376 = vmatpush1.bf16.msra.mxu0 0
        %2377 = vmatprep.subr.bf16.mxu0 0
        %2378 = vmatpush1.bf16.msra.mxu0 0
        %2379 = vmatprep.subr.bf16.mxu0 0
        %2380 = vmatpush1.bf16.msra.mxu0 0
        %2381 = vmatprep.subr.bf16.mxu0 0
        %2382 = vmatpush1.bf16.msra.mxu0 0
        %2383 = vmatprep.subr.bf16.mxu0 0
        %2384 = vmatpush1.bf16.msra.mxu0 0
        %2385 = vmatprep.subr.bf16.mxu0 0
        %2386 = vmatpush1.bf16.msra.mxu0 0
        %2387 = vmatprep.subr.bf16.mxu0 0
        %2388 = vmatpush1.bf16.msra.mxu0 0
        %2389 = vmatprep.subr.bf16.mxu0 0
        %2390 = vmatpush1.bf16.msra.mxu0 0
        %2391 = vmatprep.subr.bf16.mxu0 0
        %2392 = vmatpush1.bf16.msra.mxu0 0
        %2393 = vmatprep.subr.bf16.mxu0 0
        %2394 = vmatpush1.bf16.msra.mxu0 0
        %2395 = vmatprep.subr.bf16.mxu0 0
        %2396 = vmatpush1.bf16.msra.mxu0 0
        %2397 = vmatprep.subr.bf16.mxu0 0
        %2398 = vmatpush1.bf16.msra.mxu0 0
        %2399 = vmatprep.subr.bf16.mxu0 0
        %2400 = vmatpush1.bf16.msra.mxu0 0
        %2401 = vmatprep.mubr.bf16.mxu0 0
        %2402 = vmatmul.mubr.bf16.gmra.mrb[0].mxu0 %v2364
        %v2403 = vpop.f32.mrb[0].mxu0
        %v2404 = vadd.f32 0.0, %v2403
        %v2405 = vpop.f32.mrb[0].mxu0
        %v2406 = vpop.f32.mrb[0].mxu0
        %v2407 = vpop.f32.mrb[0].mxu0
        %2408 = vdwg.mxu0
        %v2410 = vsel %vm1102, %v2245, 0
        %v2413 = vsel %vm1510, %v2246, 0
        %2415 = vmatprep.subr.bf16.mxu0 0
        %2416 = vmatpush1.bf16.msra.mxu0 %v2413
        %2417 = vmatprep.subr.bf16.mxu0 0
        %2418 = vmatpush1.bf16.msra.mxu0 0
        %2419 = vmatprep.subr.bf16.mxu0 0
        %2420 = vmatpush1.bf16.msra.mxu0 0
        %2421 = vmatprep.subr.bf16.mxu0 0
        %2422 = vmatpush1.bf16.msra.mxu0 0
        %2423 = vmatprep.subr.bf16.mxu0 0
        %2424 = vmatpush1.bf16.msra.mxu0 0
        %2425 = vmatprep.subr.bf16.mxu0 0
        %2426 = vmatpush1.bf16.msra.mxu0 0
        %2427 = vmatprep.subr.bf16.mxu0 0
        %2428 = vmatpush1.bf16.msra.mxu0 0
        %2429 = vmatprep.subr.bf16.mxu0 0
        %2430 = vmatpush1.bf16.msra.mxu0 0
        %2431 = vmatprep.subr.bf16.mxu0 0
        %2432 = vmatpush1.bf16.msra.mxu0 0
        %2433 = vmatprep.subr.bf16.mxu0 0
        %2434 = vmatpush1.bf16.msra.mxu0 0
        %2435 = vmatprep.subr.bf16.mxu0 0
        %2436 = vmatpush1.bf16.msra.mxu0 0
        %2437 = vmatprep.subr.bf16.mxu0 0
        %2438 = vmatpush1.bf16.msra.mxu0 0
        %2439 = vmatprep.subr.bf16.mxu0 0
        %2440 = vmatpush1.bf16.msra.mxu0 0
        %2441 = vmatprep.subr.bf16.mxu0 0
        %2442 = vmatpush1.bf16.msra.mxu0 0
        %2443 = vmatprep.subr.bf16.mxu0 0
        %2444 = vmatpush1.bf16.msra.mxu0 0
        %2445 = vmatprep.subr.bf16.mxu0 0
        %2446 = vmatpush1.bf16.msra.mxu0 0
        %2447 = vmatprep.mubr.bf16.mxu0 0
        %2448 = vmatmul.mubr.bf16.gmra.mrb[0].mxu0 %v2410
        %v2449 = vpop.f32.mrb[0].mxu0
        %v2450 = vadd.f32 %v2404, %v2449
        %v2451 = vpop.f32.mrb[0].mxu0
        %v2452 = vpop.f32.mrb[0].mxu0
        %v2453 = vpop.f32.mrb[0].mxu0
        %2454 = vdwg.mxu0
        %2455 = vrot.lane.b32.xlu0 %v2139, 112
        %v2456 = vpop.permute.xlu0 %2455
        %2457 = vrot.lane.b32.xlu0 %v2140, 112
        %v2458 = vpop.permute.xlu0 %2457
        %v2460 = vsel %vm1102, %v2456, 0
        %v2463 = vsel %vm1102, %v2458, 0
        %2465 = vmatprep.subr.bf16.mxu0 0
        %2466 = vmatpush1.bf16.xpose.msra.mxu0 %v2463
        %2467 = vmatprep.subr.bf16.mxu0 0
        %2468 = vmatpush1.bf16.xpose.msra.mxu0 0
        %2469 = vmatprep.subr.bf16.mxu0 0
        %2470 = vmatpush1.bf16.xpose.msra.mxu0 0
        %2471 = vmatprep.subr.bf16.mxu0 0
        %2472 = vmatpush1.bf16.xpose.msra.mxu0 0
        %2473 = vmatprep.subr.bf16.mxu0 0
        %2474 = vmatpush1.bf16.xpose.msra.mxu0 0
        %2475 = vmatprep.subr.bf16.mxu0 0
        %2476 = vmatpush1.bf16.xpose.msra.mxu0 0
        %2477 = vmatprep.subr.bf16.mxu0 0
        %2478 = vmatpush1.bf16.xpose.msra.mxu0 0
        %2479 = vmatprep.subr.bf16.mxu0 0
        %2480 = vmatpush1.bf16.xpose.msra.mxu0 0
        %2481 = vmatprep.subr.bf16.mxu0 0
        %2482 = vmatpush1.bf16.xpose.msra.mxu0 0
        %2483 = vmatprep.subr.bf16.mxu0 0
        %2484 = vmatpush1.bf16.xpose.msra.mxu0 0
        %2485 = vmatprep.subr.bf16.mxu0 0
        %2486 = vmatpush1.bf16.xpose.msra.mxu0 0
        %2487 = vmatprep.subr.bf16.mxu0 0
        %2488 = vmatpush1.bf16.xpose.msra.mxu0 0
        %2489 = vmatprep.subr.bf16.mxu0 0
        %2490 = vmatpush1.bf16.xpose.msra.mxu0 0
        %2491 = vmatprep.subr.bf16.mxu0 0
        %2492 = vmatpush1.bf16.xpose.msra.mxu0 0
        %2493 = vmatprep.subr.bf16.mxu0 0
        %2494 = vmatpush1.bf16.xpose.msra.mxu0 0
        %2495 = vmatprep.subr.bf16.mxu0 0
        %2496 = vmatpush1.bf16.xpose.msra.mxu0 0
        %2497 = vmatprep.mubr.bf16.mxu0 0
        %2498 = vmatmul.mubr.bf16.gmra.mrb[0].mxu0 %v2460
        %v2499 = vpop.f32.mrb[0].mxu0
        %v2500 = vadd.f32 0.0, %v2499
        %v2501 = vpop.f32.mrb[0].mxu0
        %v2502 = vpop.f32.mrb[0].mxu0
        %v2503 = vpop.f32.mrb[0].mxu0
        %2504 = vdwg.mxu0
        %v2505 = vmul.f32 %v2500, 0.35355338
        %v2506 = vadd.f32 %v2505, %v1960
        %v2507 = vsel %vm1333, %v2506, -inf
        %2508 = vmax.xlane.f32.xlu0 %v2507
        %v2509 = vpop.xlane.xlu0 %2508
        %v2510 = vsub.f32 %v2506, %v2509
        %v2511 = vmul.f32 %v2510, 1.442695
        %v2512 = vpow.pop %v2511
        %v2513 = vsel %vm1333, %v2512, 0.0
        %2514 = vadd.xlane.f32.xlu0 %v2513
        %v2515 = vpop.xlane.xlu0 %2514
        %v2516 = vrcp.pop %v2515
        %v2517 = vmul.f32 %v2512, %v2516
        %v2518 = vpack.c.bf16 %v2517, %v2517
        %2519 = vrot.lane.b32.xlu0 %v2141, 112
        %v2520 = vpop.permute.xlu0 %2519
        %v2523 = vsel %vm1333, %v2518, 0
        %2525 = vmatprep.subr.bf16.mxu0 0
        %2526 = vmatpush1.bf16.msra.mxu0 %v2520
        %2527 = vmatprep.subr.bf16.mxu0 0
        %2528 = vmatpush1.bf16.msra.mxu0 0
        %2529 = vmatprep.subr.bf16.mxu0 0
        %2530 = vmatpush1.bf16.msra.mxu0 0
        %2531 = vmatprep.subr.bf16.mxu0 0
        %2532 = vmatpush1.bf16.msra.mxu0 0
        %2533 = vmatprep.subr.bf16.mxu0 0
        %2534 = vmatpush1.bf16.msra.mxu0 0
        %2535 = vmatprep.subr.bf16.mxu0 0
        %2536 = vmatpush1.bf16.msra.mxu0 0
        %2537 = vmatprep.subr.bf16.mxu0 0
        %2538 = vmatpush1.bf16.msra.mxu0 0
        %2539 = vmatprep.subr.bf16.mxu0 0
        %2540 = vmatpush1.bf16.msra.mxu0 0
        %2541 = vmatprep.subr.bf16.mxu0 0
        %2542 = vmatpush1.bf16.msra.mxu0 0
        %2543 = vmatprep.subr.bf16.mxu0 0
        %2544 = vmatpush1.bf16.msra.mxu0 0
        %2545 = vmatprep.subr.bf16.mxu0 0
        %2546 = vmatpush1.bf16.msra.mxu0 0
        %2547 = vmatprep.subr.bf16.mxu0 0
        %2548 = vmatpush1.bf16.msra.mxu0 0
        %2549 = vmatprep.subr.bf16.mxu0 0
        %2550 = vmatpush1.bf16.msra.mxu0 0
        %2551 = vmatprep.subr.bf16.mxu0 0
        %2552 = vmatpush1.bf16.msra.mxu0 0
        %2553 = vmatprep.subr.bf16.mxu0 0
        %2554 = vmatpush1.bf16.msra.mxu0 0
        %2555 = vmatprep.subr.bf16.mxu0 0
        %2556 = vmatpush1.bf16.msra.mxu0 0
        %2557 = vmatprep.mubr.bf16.mxu0 0
        %2558 = vmatmul.mubr.bf16.gmra.mrb[0].mxu0 %v2523
        %v2559 = vpop.f32.mrb[0].mxu0
        %v2560 = vadd.f32 0.0, %v2559
        %v2561 = vpop.f32.mrb[0].mxu0
        %v2562 = vpop.f32.mrb[0].mxu0
        %v2563 = vpop.f32.mrb[0].mxu0
        %2564 = vdwg.mxu0
        %v2565 = vpack.c.bf16 %v2560, %v2560
        %s2566 = scalar_lea.vmem [#allocation23], 8
        %v2567 = vld [vmem:[%s2566] sm:$0xf]
        %v2569 = vsel %vm1102, %v2565, 0
        %v2572 = vsel %vm1510, %v2567, 0
        %2574 = vmatprep.subr.bf16.mxu0 0
        %2575 = vmatpush1.bf16.msra.mxu0 %v2572
        %2576 = vmatprep.subr.bf16.mxu0 0
        %2577 = vmatpush1.bf16.msra.mxu0 0
        %2578 = vmatprep.subr.bf16.mxu0 0
        %2579 = vmatpush1.bf16.msra.mxu0 0
        %2580 = vmatprep.subr.bf16.mxu0 0
        %2581 = vmatpush1.bf16.msra.mxu0 0
        %2582 = vmatprep.subr.bf16.mxu0 0
        %2583 = vmatpush1.bf16.msra.mxu0 0
        %2584 = vmatprep.subr.bf16.mxu0 0
        %2585 = vmatpush1.bf16.msra.mxu0 0
        %2586 = vmatprep.subr.bf16.mxu0 0
        %2587 = vmatpush1.bf16.msra.mxu0 0
        %2588 = vmatprep.subr.bf16.mxu0 0
        %2589 = vmatpush1.bf16.msra.mxu0 0
        %2590 = vmatprep.subr.bf16.mxu0 0
        %2591 = vmatpush1.bf16.msra.mxu0 0
        %2592 = vmatprep.subr.bf16.mxu0 0
        %2593 = vmatpush1.bf16.msra.mxu0 0
        %2594 = vmatprep.subr.bf16.mxu0 0
        %2595 = vmatpush1.bf16.msra.mxu0 0
        %2596 = vmatprep.subr.bf16.mxu0 0
        %2597 = vmatpush1.bf16.msra.mxu0 0
        %2598 = vmatprep.subr.bf16.mxu0 0
        %2599 = vmatpush1.bf16.msra.mxu0 0
        %2600 = vmatprep.subr.bf16.mxu0 0
        %2601 = vmatpush1.bf16.msra.mxu0 0
        %2602 = vmatprep.subr.bf16.mxu0 0
        %2603 = vmatpush1.bf16.msra.mxu0 0
        %2604 = vmatprep.subr.bf16.mxu0 0
        %2605 = vmatpush1.bf16.msra.mxu0 0
        %2606 = vmatprep.mubr.bf16.mxu0 0
        %2607 = vmatmul.mubr.bf16.gmra.mrb[0].mxu0 %v2569
        %v2608 = vpop.f32.mrb[0].mxu0
        %v2609 = vadd.f32 0.0, %v2608
        %v2610 = vpop.f32.mrb[0].mxu0
        %v2611 = vpop.f32.mrb[0].mxu0
        %v2612 = vpop.f32.mrb[0].mxu0
        %2613 = vdwg.mxu0
        %v2614 = vadd.f32 %v2450, %v2609
        %2615 = vrot.lane.b32.xlu0 %v2139, 104
        %v2616 = vpop.permute.xlu0 %2615
        %2617 = vrot.lane.b32.xlu0 %v2140, 104
        %v2618 = vpop.permute.xlu0 %2617
        %v2620 = vsel %vm1102, %v2616, 0
        %v2623 = vsel %vm1102, %v2618, 0
        %2625 = vmatprep.subr.bf16.mxu0 0
        %2626 = vmatpush1.bf16.xpose.msra.mxu0 %v2623
        %2627 = vmatprep.subr.bf16.mxu0 0
        %2628 = vmatpush1.bf16.xpose.msra.mxu0 0
        %2629 = vmatprep.subr.bf16.mxu0 0
        %2630 = vmatpush1.bf16.xpose.msra.mxu0 0
        %2631 = vmatprep.subr.bf16.mxu0 0
        %2632 = vmatpush1.bf16.xpose.msra.mxu0 0
        %2633 = vmatprep.subr.bf16.mxu0 0
        %2634 = vmatpush1.bf16.xpose.msra.mxu0 0
        %2635 = vmatprep.subr.bf16.mxu0 0
        %2636 = vmatpush1.bf16.xpose.msra.mxu0 0
        %2637 = vmatprep.subr.bf16.mxu0 0
        %2638 = vmatpush1.bf16.xpose.msra.mxu0 0
        %2639 = vmatprep.subr.bf16.mxu0 0
        %2640 = vmatpush1.bf16.xpose.msra.mxu0 0
        %2641 = vmatprep.subr.bf16.mxu0 0
        %2642 = vmatpush1.bf16.xpose.msra.mxu0 0
        %2643 = vmatprep.subr.bf16.mxu0 0
        %2644 = vmatpush1.bf16.xpose.msra.mxu0 0
        %2645 = vmatprep.subr.bf16.mxu0 0
        %2646 = vmatpush1.bf16.xpose.msra.mxu0 0
        %2647 = vmatprep.subr.bf16.mxu0 0
        %2648 = vmatpush1.bf16.xpose.msra.mxu0 0
        %2649 = vmatprep.subr.bf16.mxu0 0
        %2650 = vmatpush1.bf16.xpose.msra.mxu0 0
        %2651 = vmatprep.subr.bf16.mxu0 0
        %2652 = vmatpush1.bf16.xpose.msra.mxu0 0
        %2653 = vmatprep.subr.bf16.mxu0 0
        %2654 = vmatpush1.bf16.xpose.msra.mxu0 0
        %2655 = vmatprep.subr.bf16.mxu0 0
        %2656 = vmatpush1.bf16.xpose.msra.mxu0 0
        %2657 = vmatprep.mubr.bf16.mxu0 0
        %2658 = vmatmul.mubr.bf16.gmra.mrb[0].mxu0 %v2620
        %v2659 = vpop.f32.mrb[0].mxu0
        %v2660 = vadd.f32 0.0, %v2659
        %v2661 = vpop.f32.mrb[0].mxu0
        %v2662 = vpop.f32.mrb[0].mxu0
        %v2663 = vpop.f32.mrb[0].mxu0
        %2664 = vdwg.mxu0
        %v2665 = vmul.f32 %v2660, 0.35355338
        %v2666 = vadd.f32 %v2665, %v1960
        %v2667 = vsel %vm1333, %v2666, -inf
        %2668 = vmax.xlane.f32.xlu0 %v2667
        %v2669 = vpop.xlane.xlu0 %2668
        %v2670 = vsub.f32 %v2666, %v2669
        %v2671 = vmul.f32 %v2670, 1.442695
        %v2672 = vpow.pop %v2671
        %v2673 = vsel %vm1333, %v2672, 0.0
        %2674 = vadd.xlane.f32.xlu0 %v2673
        %v2675 = vpop.xlane.xlu0 %2674
        %v2676 = vrcp.pop %v2675
        %v2677 = vmul.f32 %v2672, %v2676
        %v2678 = vpack.c.bf16 %v2677, %v2677
        %2679 = vrot.lane.b32.xlu0 %v2141, 104
        %v2680 = vpop.permute.xlu0 %2679
        %v2683 = vsel %vm1333, %v2678, 0
        %2685 = vmatprep.subr.bf16.mxu0 0
        %2686 = vmatpush1.bf16.msra.mxu0 %v2680
        %2687 = vmatprep.subr.bf16.mxu0 0
        %2688 = vmatpush1.bf16.msra.mxu0 0
        %2689 = vmatprep.subr.bf16.mxu0 0
        %2690 = vmatpush1.bf16.msra.mxu0 0
        %2691 = vmatprep.subr.bf16.mxu0 0
        %2692 = vmatpush1.bf16.msra.mxu0 0
        %2693 = vmatprep.subr.bf16.mxu0 0
        %2694 = vmatpush1.bf16.msra.mxu0 0
        %2695 = vmatprep.subr.bf16.mxu0 0
        %2696 = vmatpush1.bf16.msra.mxu0 0
        %2697 = vmatprep.subr.bf16.mxu0 0
        %2698 = vmatpush1.bf16.msra.mxu0 0
        %2699 = vmatprep.subr.bf16.mxu0 0
        %2700 = vmatpush1.bf16.msra.mxu0 0
        %2701 = vmatprep.subr.bf16.mxu0 0
        %2702 = vmatpush1.bf16.msra.mxu0 0
        %2703 = vmatprep.subr.bf16.mxu0 0
        %2704 = vmatpush1.bf16.msra.mxu0 0
        %2705 = vmatprep.subr.bf16.mxu0 0
        %2706 = vmatpush1.bf16.msra.mxu0 0
        %2707 = vmatprep.subr.bf16.mxu0 0
        %2708 = vmatpush1.bf16.msra.mxu0 0
        %2709 = vmatprep.subr.bf16.mxu0 0
        %2710 = vmatpush1.bf16.msra.mxu0 0
        %2711 = vmatprep.subr.bf16.mxu0 0
        %2712 = vmatpush1.bf16.msra.mxu0 0
        %2713 = vmatprep.subr.bf16.mxu0 0
        %2714 = vmatpush1.bf16.msra.mxu0 0
        %2715 = vmatprep.subr.bf16.mxu0 0
        %2716 = vmatpush1.bf16.msra.mxu0 0
        %2717 = vmatprep.mubr.bf16.mxu0 0
        %2718 = vmatmul.mubr.bf16.gmra.mrb[0].mxu0 %v2683
        %v2719 = vpop.f32.mrb[0].mxu0
        %v2720 = vadd.f32 0.0, %v2719
        %v2721 = vpop.f32.mrb[0].mxu0
        %v2722 = vpop.f32.mrb[0].mxu0
        %v2723 = vpop.f32.mrb[0].mxu0
        %2724 = vdwg.mxu0
        %v2725 = vpack.c.bf16 %v2720, %v2720
        %s2726 = scalar_lea.vmem [#allocation23], 12
        %v2727 = vld [vmem:[%s2726] sm:$0xf]
        %v2729 = vsel %vm1102, %v2725, 0
        %v2732 = vsel %vm1510, %v2727, 0
        %2734 = vmatprep.subr.bf16.mxu0 0
        %2735 = vmatpush1.bf16.msra.mxu0 %v2732
        %2736 = vmatprep.subr.bf16.mxu0 0
        %2737 = vmatpush1.bf16.msra.mxu0 0
        %2738 = vmatprep.subr.bf16.mxu0 0
        %2739 = vmatpush1.bf16.msra.mxu0 0
        %2740 = vmatprep.subr.bf16.mxu0 0
        %2741 = vmatpush1.bf16.msra.mxu0 0
        %2742 = vmatprep.subr.bf16.mxu0 0
        %2743 = vmatpush1.bf16.msra.mxu0 0
        %2744 = vmatprep.subr.bf16.mxu0 0
        %2745 = vmatpush1.bf16.msra.mxu0 0
        %2746 = vmatprep.subr.bf16.mxu0 0
        %2747 = vmatpush1.bf16.msra.mxu0 0
        %2748 = vmatprep.subr.bf16.mxu0 0
        %2749 = vmatpush1.bf16.msra.mxu0 0
        %2750 = vmatprep.subr.bf16.mxu0 0
        %2751 = vmatpush1.bf16.msra.mxu0 0
        %2752 = vmatprep.subr.bf16.mxu0 0
        %2753 = vmatpush1.bf16.msra.mxu0 0
        %2754 = vmatprep.subr.bf16.mxu0 0
        %2755 = vmatpush1.bf16.msra.mxu0 0
        %2756 = vmatprep.subr.bf16.mxu0 0
        %2757 = vmatpush1.bf16.msra.mxu0 0
        %2758 = vmatprep.subr.bf16.mxu0 0
        %2759 = vmatpush1.bf16.msra.mxu0 0
        %2760 = vmatprep.subr.bf16.mxu0 0
        %2761 = vmatpush1.bf16.msra.mxu0 0
        %2762 = vmatprep.subr.bf16.mxu0 0
        %2763 = vmatpush1.bf16.msra.mxu0 0
        %2764 = vmatprep.subr.bf16.mxu0 0
        %2765 = vmatpush1.bf16.msra.mxu0 0
        %2766 = vmatprep.mubr.bf16.mxu0 0
        %2767 = vmatmul.mubr.bf16.gmra.mrb[0].mxu0 %v2729
        %v2768 = vpop.f32.mrb[0].mxu0
        %v2769 = vadd.f32 0.0, %v2768
        %v2770 = vpop.f32.mrb[0].mxu0
        %v2771 = vpop.f32.mrb[0].mxu0
        %v2772 = vpop.f32.mrb[0].mxu0
        %2773 = vdwg.mxu0
        %v2774 = vadd.f32 %v2614, %v2769
        %v2775 = vadd.f32 %v1920, %v2774
        %v2776 = vld [vmem:[#allocation24] sm:$0x1]
        %v2777 = vld [vmem:[%s18] sm:$0x1]
        %v2778 = vsel %vm1064, %v2775, 0.0
        %2779 = vadd.xlane.f32.xlu0 %v2778
        %v2780 = vpop.xlane.xlu0 %2779
        %v2781 = vmul.f32 %v2780, %v1068
        %v2782 = vsub.f32 %v2775, %v2781
        %v2783 = vmul.f32 %v2782, %v2782
        %v2784 = vsel %vm1064, %v2783, 0.0
        %2785 = vadd.xlane.f32.xlu0 %v2784
        %v2786 = vpop.xlane.xlu0 %2785
        %v2787 = vmul.f32 %v2786, %v1068
        %v2788 = vadd.f32 %v2787, 1e-05
        %v2789 = vrsqrt.pop %v2788
        %v2790 = vmul.f32 %v2782, %v2789
        %v2792 = vlaneseq
        %v2793 = vshrl.u32 %v2792, 7
        %v2794 = vsub.s32 0, %v2793
        %v2795 = vrot.slane %v2776, %v2794
        %v2797 = vmul.f32 %v2790, %v2795
        %v2799 = vlaneseq
        %v2800 = vshrl.u32 %v2799, 7
        %v2801 = vsub.s32 0, %v2800
        %v2802 = vrot.slane %v2777, %v2801
        %v2804 = vadd.f32 %v2797, %v2802
        %v2805 = vpack.c.bf16 %v2804, %v2804
        %v2806 = vld [vmem:[%s19] sm:$0xf]
        %v2807 = vld [vmem:[%s19 + $0x4] sm:$0xf]
        %v2808 = vld [vmem:[%s19 + $0x8] sm:$0xf]
        %v2809 = vld [vmem:[%s19 + $0xc] sm:$0xf]
        %v2810 = vld [vmem:[%s20] sm:$0x1]
        %v2812 = vlaneseq
        %v2813 = vshrl.u32 %v2812, 7
        %v2814 = vsub.s32 0, %v2813
        %v2815 = vrot.slane %v2810, %v2814
        %v2821 = vunpack.c.l.b16 %v2806
        %v2822 = vunpack.c.l.b16 %v2807
        %v2823 = vunpack.c.l.b16 %v2808
        %v2824 = vunpack.c.l.b16 %v2809
        %v2825 = vpack.c.b16 %v2822, %v2821
        %v2826 = vpack.c.b16 %v2824, %v2823
        %v2830 = vsel %vm1064, %v2805, 0
        %2832 = vmatprep.subr.bf16.mxu0 0
        %2833 = vmatpush1.bf16.msra.mxu0 %v2825
        %2834 = vmatprep.subr.bf16.mxu0 0
        %2835 = vmatpush1.bf16.msra.mxu0 %v2826
        %2836 = vmatprep.subr.bf16.mxu0 0
        %2837 = vmatpush1.bf16.msra.mxu0 0
        %2838 = vmatprep.subr.bf16.mxu0 0
        %2839 = vmatpush1.bf16.msra.mxu0 0
        %2840 = vmatprep.subr.bf16.mxu0 0
        %2841 = vmatpush1.bf16.msra.mxu0 0
        %2842 = vmatprep.subr.bf16.mxu0 0
        %2843 = vmatpush1.bf16.msra.mxu0 0
        %2844 = vmatprep.subr.bf16.mxu0 0
        %2845 = vmatpush1.bf16.msra.mxu0 0
        %2846 = vmatprep.subr.bf16.mxu0 0
        %2847 = vmatpush1.bf16.msra.mxu0 0
        %2848 = vmatprep.subr.bf16.mxu0 0
        %2849 = vmatpush1.bf16.msra.mxu0 0
        %2850 = vmatprep.subr.bf16.mxu0 0
        %2851 = vmatpush1.bf16.msra.mxu0 0
        %2852 = vmatprep.subr.bf16.mxu0 0
        %2853 = vmatpush1.bf16.msra.mxu0 0
        %2854 = vmatprep.subr.bf16.mxu0 0
        %2855 = vmatpush1.bf16.msra.mxu0 0
        %2856 = vmatprep.subr.bf16.mxu0 0
        %2857 = vmatpush1.bf16.msra.mxu0 0
        %2858 = vmatprep.subr.bf16.mxu0 0
        %2859 = vmatpush1.bf16.msra.mxu0 0
        %2860 = vmatprep.subr.bf16.mxu0 0
        %2861 = vmatpush1.bf16.msra.mxu0 0
        %2862 = vmatprep.subr.bf16.mxu0 0
        %2863 = vmatpush1.bf16.msra.mxu0 0
        %2864 = vmatprep.mubr.bf16.mxu0 0
        %2865 = vmatmul.mubr.bf16.gmra.mrb[0].mxu0 %v2830
        %v2866 = vpop.f32.mrb[0].mxu0
        %v2867 = vadd.f32 %v2815, %v2866
        %v2868 = vpop.f32.mrb[0].mxu0
        %v2869 = vpop.f32.mrb[0].mxu0
        %v2870 = vpop.f32.mrb[0].mxu0
        %2871 = vdwg.mxu0
        %v2872 = vmax.f32 %v2867, 0.0
        %v2873 = vpack.c.bf16 %v2872, %v2872
        %v2874 = vld [vmem:[%s21] sm:$0xf]
        %v2875 = vld [vmem:[%s21 + $0x4] sm:$0xf]
        %v2876 = vld [vmem:[%s21 + $0x8] sm:$0xf]
        %v2877 = vld [vmem:[%s21 + $0xc] sm:$0xf]
        %v2878 = vld [vmem:[%s21 + $0x10] sm:$0xf]
        %v2879 = vld [vmem:[%s21 + $0x14] sm:$0xf]
        %v2880 = vld [vmem:[%s21 + $0x18] sm:$0xf]
        %v2881 = vld [vmem:[%s21 + $0x1c] sm:$0xf]
        %v2882 = vld [vmem:[%s22] sm:$0x1]
        %v2884 = vlaneseq
        %v2885 = vshrl.u32 %v2884, 7
        %v2886 = vsub.s32 0, %v2885
        %v2887 = vrot.slane %v2882, %v2886
        %v2897 = vunpack.c.l.b16 %v2874
        %v2898 = vunpack.c.l.b16 %v2875
        %v2899 = vunpack.c.l.b16 %v2876
        %v2900 = vunpack.c.l.b16 %v2877
        %v2901 = vunpack.c.l.b16 %v2878
        %v2902 = vunpack.c.l.b16 %v2879
        %v2903 = vunpack.c.l.b16 %v2880
        %v2904 = vunpack.c.l.b16 %v2881
        %v2905 = vpack.c.b16 %v2898, %v2897
        %v2906 = vpack.c.b16 %v2900, %v2899
        %v2907 = vpack.c.b16 %v2902, %v2901
        %v2908 = vpack.c.b16 %v2904, %v2903
        %vm2913 = vcmask 523264
        %v2915 = vsel %vm2913, %v2873, 0
        %2917 = vmatprep.subr.bf16.mxu0 0
        %2918 = vmatpush1.bf16.msra.mxu0 %v2905
        %2919 = vmatprep.subr.bf16.mxu0 0
        %2920 = vmatpush1.bf16.msra.mxu0 %v2906
        %2921 = vmatprep.subr.bf16.mxu0 0
        %2922 = vmatpush1.bf16.msra.mxu0 %v2907
        %2923 = vmatprep.subr.bf16.mxu0 0
        %2924 = vmatpush1.bf16.msra.mxu0 %v2908
        %2925 = vmatprep.subr.bf16.mxu0 0
        %2926 = vmatpush1.bf16.msra.mxu0 0
        %2927 = vmatprep.subr.bf16.mxu0 0
        %2928 = vmatpush1.bf16.msra.mxu0 0
        %2929 = vmatprep.subr.bf16.mxu0 0
        %2930 = vmatpush1.bf16.msra.mxu0 0
        %2931 = vmatprep.subr.bf16.mxu0 0
        %2932 = vmatpush1.bf16.msra.mxu0 0
        %2933 = vmatprep.subr.bf16.mxu0 0
        %2934 = vmatpush1.bf16.msra.mxu0 0
        %2935 = vmatprep.subr.bf16.mxu0 0
        %2936 = vmatpush1.bf16.msra.mxu0 0
        %2937 = vmatprep.subr.bf16.mxu0 0
        %2938 = vmatpush1.bf16.msra.mxu0 0
        %2939 = vmatprep.subr.bf16.mxu0 0
        %2940 = vmatpush1.bf16.msra.mxu0 0
        %2941 = vmatprep.subr.bf16.mxu0 0
        %2942 = vmatpush1.bf16.msra.mxu0 0
        %2943 = vmatprep.subr.bf16.mxu0 0
        %2944 = vmatpush1.bf16.msra.mxu0 0
        %2945 = vmatprep.subr.bf16.mxu0 0
        %2946 = vmatpush1.bf16.msra.mxu0 0
        %2947 = vmatprep.subr.bf16.mxu0 0
        %2948 = vmatpush1.bf16.msra.mxu0 0
        %2949 = vmatprep.mubr.bf16.mxu0 0
        %2950 = vmatmul.mubr.bf16.gmra.mrb[0].mxu0 %v2915
        %v2951 = vpop.f32.mrb[0].mxu0
        %v2952 = vadd.f32 %v2887, %v2951
        %v2953 = vpop.f32.mrb[0].mxu0
        %v2954 = vpop.f32.mrb[0].mxu0
        %v2955 = vpop.f32.mrb[0].mxu0
        %2956 = vdwg.mxu0
        %v2957 = vadd.f32 %v2775, %v2952
        %2958 = vst.msk [vmem:[%s1048] sm:$0xff] %vm1064, %v2957
        %s2959 = sand.u32 %s570, 1
        %s2960 = scalar_lea.sflag [#allocation4], %s2959
        %s2961 = sand.u32 %s570, 1
        %s2962 = smul.addr %s2961, 8
        %s2963 = scalar_lea.vmem [#allocation26], %s2962
        %s2964 = sand.u32 %s596, 1
        %s2965 = scalar_lea.sflag [#allocation28], %s2964
        %s2966 = sand.u32 %s596, 1
        %s2967 = smul.addr %s2966, 8
        %s2968 = scalar_lea.vmem [#allocation27], %s2967
        // Predicated region
        $region207: #{tpu_custom_call.1} parent=145 // pred_check
          %p2969 = pneg %p580
        $region208: #{tpu_custom_call.1} parent=145 // pred_check_branch
          %2971 = sbr.rel (%p2969) target = $region210
        $region209: #{tpu_custom_call.1} parent=145 // pred_region
          %s2973 = ssub.s32 128, 128
          %2974 = vsyncadd %s2960, %s2973
          %s2975 = smul.addr %s54, 128
          %s2976 = scalar_lea.hbm %s23, %s2975
          %s2978 = sshll.u32 %s2963, 4
          %s2979 = int_to_ptr.vmem [resolvable:$true] %s2978
          %2981 = dma.vmem_to_hbm [thread:$0]  %s2979, 128, %s2976, %s2960
        $region210: #{tpu_custom_call.1} parent=145 // pred_fallthru
          _
        // Predicated region
        $region211: #{tpu_custom_call.1} parent=145 // pred_check
          %p2982 = pneg %p606
        $region212: #{tpu_custom_call.1} parent=145 // pred_check_branch
          %2984 = sbr.rel (%p2982) target = $region214
        $region213: #{tpu_custom_call.1} parent=145 // pred_region
          %s2986 = ssub.s32 128, 128
          %2987 = vsyncadd %s2965, %s2986
          %s2988 = smul.addr %s54, 128
          %s2989 = scalar_lea.hbm %s24, %s2988
          %s2991 = sshll.u32 %s2968, 4
          %s2992 = int_to_ptr.vmem [resolvable:$true] %s2991
          %2994 = dma.vmem_to_hbm [thread:$0]  %s2992, 128, %s2989, %s2965
        $region214: #{tpu_custom_call.1} parent=145 // pred_fallthru
          _
      $region146: #{tpu_custom_call.1} parent=5 // pred_fallthru
        _
      %p2995 = scmp.le.s32.totalorder 2, %s49
      // Predicated region
      $region215: #{tpu_custom_call.1} parent=5 // pred_check
        %p2996 = pneg %p2995
      $region216: #{tpu_custom_call.1} parent=5 // pred_check_branch
        %2998 = sbr.rel (%p2996) target = $region218
      $region217: #{tpu_custom_call.1} parent=5 // pred_region
        %s2999 = ssub.s32 %s49, 2
        // Predicated region
        $region219: #{tpu_custom_call.1} parent=217 // pred_check
          %p3000 = pneg %p586
        $region220: #{tpu_custom_call.1} parent=217 // pred_check_branch
          %3002 = sbr.rel (%p3000) target = $region222
        $region221: #{tpu_custom_call.1} parent=217 // pred_region
          %s3003 = sand.u32 %s571, 1
          %s3004 = scalar_lea.sflag [#allocation4], %s3003
          %s3005 = sand.u32 %s571, 1
          %s3006 = smul.addr %s3005, 8
          %s3007 = scalar_lea.vmem [#allocation26], %s3006
          %3008 = dma.done %s3004, 128
        $region222: #{tpu_custom_call.1} parent=217 // pred_fallthru
          _
        // Predicated region
        $region223: #{tpu_custom_call.1} parent=217 // pred_check
          %p3009 = pneg %p612
        $region224: #{tpu_custom_call.1} parent=217 // pred_check_branch
          %3011 = sbr.rel (%p3009) target = $region226
        $region225: #{tpu_custom_call.1} parent=217 // pred_region
          %s3012 = sand.u32 %s597, 1
          %s3013 = scalar_lea.sflag [#allocation28], %s3012
          %s3014 = sand.u32 %s597, 1
          %s3015 = smul.addr %s3014, 8
          %s3016 = scalar_lea.vmem [#allocation27], %s3015
          %3017 = dma.done %s3013, 128
        $region226: #{tpu_custom_call.1} parent=217 // pred_fallthru
          _
      $region218: #{tpu_custom_call.1} parent=5 // pred_fallthru
        _
    $region6: #{tpu_custom_call.1} parent=1 // loop_footer
      %s53 = sadd.s32 1, %s49
    $region7: #{tpu_custom_call.1} parent=1 // loop_footer_branch
      %48 = sbr.rel target = $region3
    $region8: #{tpu_custom_call.1} parent=1 // loop_exit
      _
    %3018 = vsyncpa [#allocation3], 1
    %s3019 = scalar_lea.sflag [#allocation3], 1
    %3020 = vsyncpa %s3019, 1
    %3021 = vsyncpa [#allocation6], 1
    %s3022 = scalar_lea.sflag [#allocation6], 1
    %3023 = vsyncpa %s3022, 1
    %3024 = vsyncpa [#allocation10], 1
    %3025 = vsyncpa [#allocation13], 1
    %3026 = vsyncpa [#allocation16], 1
    %3027 = vsyncpa [#allocation19], 1
    %3028 = vsyncpa [#allocation22], 1
    %3029 = vsyncpa [#allocation25], 1
    %3030 = vsyncpa [#allocation4], 1
    %s3031 = scalar_lea.sflag [#allocation4], 1
    %3032 = vsyncpa %s3031, 1
    %3033 = vsyncpa [#allocation28], 1
    %s3034 = scalar_lea.sflag [#allocation28], 1
    %3035 = vsyncpa %s3034, 1

</llo_original>
